<compile_context>
chip_gen: v5e
topology: v5e:2x2
jax: 0.10.0
libtpu: 0.0.40
codegen_flags: <defaults>
</compile_context>

<pallas_src>
import functools

import numpy as np
import jax
import jax.numpy as jnp
from jax.experimental import pallas as pl
from jax.experimental.pallas import tpu as pltpu


def _round_up(n, m=128):
    return ((n + m - 1) // m) * m


# ------------------------------------------------------------------ in-kernel primitives
def _layer_norm(v, g, b, *, C, eps):
    """LayerNorm over the C real features.  Padded lanes of v are exactly 0 by
    construction, so unmasked sums over Cp equal sums over C; g/b padded lanes are 0 so
    output padded lanes stay 0."""
    inv_c = 1.0 / C
    mu = jnp.sum(v, axis=-1, keepdims=True) * inv_c
    var = jnp.sum(v * v, axis=-1, keepdims=True) * inv_c - mu * mu
    return (v - mu) * jax.lax.rsqrt(var + eps) * g + b


def _gelu_tanh(x):
    # TODO(synk): torch nn.GELU default is the exact erf form; tanh approximation kept
    # for Mosaic-safe lowering.
    return 0.5 * x * (1.0 + jnp.tanh(0.7978845608028654 * (x + 0.044715 * x * x * x)))


def _block_body(x, ln1g, ln1b, qkvw, projw, projb, ln2g, ln2b,
                fc1w, fc1b, fc2w, fc2b, *, C, H, eps):
    """One pre-LN ViT block (MHA + MLP, residuals) on a [T, Cp] activation."""
    Cp = x.shape[-1]
    D = C // H
    scale = float(D) ** -0.5

    # ---- multi-head self-attention --------------------------------------------------
    h1 = _layer_norm(x, ln1g, ln1b, C=C, eps=eps)
    qkv = jnp.dot(h1, qkvw, preferred_element_type=jnp.float32)          # [T, 3*Cp]
    attn = None
    for hh in range(H):
        q = qkv[:, hh * D:(hh + 1) * D]
        k = qkv[:, Cp + hh * D:Cp + (hh + 1) * D]
        v = qkv[:, 2 * Cp + hh * D:2 * Cp + (hh + 1) * D]
        s = jax.lax.dot_general(q, k, (((1,), (1,)), ((), ())),
                                preferred_element_type=jnp.float32) * scale
        s = s - jnp.max(s, axis=-1, keepdims=True)
        p = jnp.exp(s)
        p = p * pl.reciprocal(jnp.sum(p, axis=-1, keepdims=True), approx=True)
        av = jnp.dot(p, v, preferred_element_type=jnp.float32)           # [T, D]
        # Accumulate straight into the output projection (no sub-vreg head concat).
        contrib = jnp.dot(av, projw[hh * D:(hh + 1) * D, :],
                          preferred_element_type=jnp.float32)            # [T, Cp]
        attn = contrib if attn is None else attn + contrib
    x = x + attn + projb

    # ---- MLP ------------------------------------------------------------------------
    h2 = _layer_norm(x, ln2g, ln2b, C=C, eps=eps)
    hmid = _gelu_tanh(jnp.dot(h2, fc1w, preferred_element_type=jnp.float32) + fc1b)
    return x + jnp.dot(hmid, fc2w, preferred_element_type=jnp.float32) + fc2b


# ------------------------------------------------------------ fused transformer-stack kernels
def _stack_ln_kernel(x_ref, ln1g, ln1b, qkvw, projw, projb, ln2g, ln2b,
                     fc1w, fc1b, fc2w, fc2b, flng, flnb, o_ref, act_ref, *, C, H, eps):
    """grid=(B, L): all encoder blocks + final LayerNorm, activation resident in VMEM."""
    l = pl.program_id(1)

    @pl.when(l == 0)
    def _():
        act_ref[...] = x_ref[0]

    act_ref[...] = _block_body(act_ref[...], ln1g[0], ln1b[0], qkvw[0], projw[0], projb[0],
                               ln2g[0], ln2b[0], fc1w[0], fc1b[0], fc2w[0], fc2b[0],
                               C=C, H=H, eps=eps)

    @pl.when(l == pl.num_programs(1) - 1)
    def _():
        o_ref[0] = _layer_norm(act_ref[...], flng[...], flnb[...], C=C, eps=eps)


def _stack_head_kernel(x_ref, ln1g, ln1b, qkvw, projw, projb, ln2g, ln2b,
                       fc1w, fc1b, fc2w, fc2b, headw, headb, o_ref, act_ref, *, C, H, eps):
    """grid=(B, L): all decoder blocks + prediction head, activation resident in VMEM."""
    l = pl.program_id(1)

    @pl.when(l == 0)
    def _():
        act_ref[...] = x_ref[0]

    act_ref[...] = _block_body(act_ref[...], ln1g[0], ln1b[0], qkvw[0], projw[0], projb[0],
                               ln2g[0], ln2b[0], fc1w[0], fc1b[0], fc2w[0], fc2b[0],
                               C=C, H=H, eps=eps)

    @pl.when(l == pl.num_programs(1) - 1)
    def _():
        o_ref[0] = (jnp.dot(act_ref[...], headw[...], preferred_element_type=jnp.float32)
                    + headb[...])


def transformer_stack(x, stack, *, num_heads, C, final_ln=None, head=None, eps=1e-5):
    """x: [B, T, Cp] lane-padded.  Runs the whole (stacked) block list in one pallas_call."""
    B, T, Cp = x.shape
    L = stack["qkv_w"].shape[0]
    Hp = stack["fc1_w"].shape[2]
    Cr = stack["proj_w"].shape[1]          # real feature count C

    def wspec(shape):                       # per-layer stacked weight
        return pl.BlockSpec(shape, lambda b, l: (l, 0, 0))

    def kspec(shape):                       # constant (trailing LN / head) weight
        return pl.BlockSpec(shape, lambda b, l: (0, 0))

    in_specs = [
        pl.BlockSpec((1, T, Cp), lambda b, l: (b, 0, 0)),
        wspec((1, 1, Cp)), wspec((1, 1, Cp)),          # ln1 gamma / beta
        wspec((1, Cp, 3 * Cp)),                        # qkv weight (bias-free, timm default)
        wspec((1, Cr, Cp)), wspec((1, 1, Cp)),         # attn proj weight / bias
        wspec((1, 1, Cp)), wspec((1, 1, Cp)),          # ln2 gamma / beta
        wspec((1, Cp, Hp)), wspec((1, 1, Hp)),         # fc1 weight / bias
        wspec((1, Hp, Cp)), wspec((1, 1, Cp)),         # fc2 weight / bias
    ]
    args = [x, stack["ln1_g"], stack["ln1_b"], stack["qkv_w"], stack["proj_w"],
            stack["proj_b"], stack["ln2_g"], stack["ln2_b"],
            stack["fc1_w"], stack["fc1_b"], stack["fc2_w"], stack["fc2_b"]]

    if head is not None:
        head_w, head_b = head
        Np = head_w.shape[1]
        in_specs += [kspec((Cp, Np)), kspec((1, Np))]
        args += [head_w, head_b]
        kernel = functools.partial(_stack_head_kernel, C=C, H=num_heads, eps=eps)
        out_shape = jax.ShapeDtypeStruct((B, T, Np), jnp.float32)
        out_spec = pl.BlockSpec((1, T, Np), lambda b, l: (b, 0, 0))
    else:
        g, beta = final_ln
        in_specs += [kspec((1, Cp)), kspec((1, Cp))]
        args += [g, beta]
        kernel = functools.partial(_stack_ln_kernel, C=C, H=num_heads, eps=eps)
        out_shape = jax.ShapeDtypeStruct((B, T, Cp), jnp.float32)
        out_spec = pl.BlockSpec((1, T, Cp), lambda b, l: (b, 0, 0))

    return pl.pallas_call(
        kernel,
        grid=(B, L),
        in_specs=in_specs,
        out_specs=out_spec,
        out_shape=out_shape,
        scratch_shapes=[pltpu.VMEM((T, Cp), jnp.float32)],
        compiler_params=pltpu.CompilerParams(
            dimension_semantics=("parallel", "arbitrary")),
    )(*args)


# --------------------------------------------------------------------- small 2-D matmuls
def _matmul_kernel(x_ref, w_ref, o_ref):
    o_ref[...] = jnp.dot(x_ref[...], w_ref[...], preferred_element_type=jnp.float32)


def _matmul_bias_kernel(x_ref, w_ref, b_ref, o_ref):
    o_ref[...] = (jnp.dot(x_ref[...], w_ref[...], preferred_element_type=jnp.float32)
                  + b_ref[...])


def matmul2d(x, w, b=None):
    """x:[M,K] @ w:[K,N] (+b) -> [M,N]; batch already folded into M, single VMEM block."""
    M, K = x.shape
    N = w.shape[1]
    out_shape = jax.ShapeDtypeStruct((M, N), jnp.float32)
    if b is None:
        return pl.pallas_call(_matmul_kernel, out_shape=out_shape)(x, w)
    return pl.pallas_call(_matmul_bias_kernel, out_shape=out_shape)(x, w, b.reshape(1, N))


# ------------------------------------------------------------------------- model pieces
def take_indexes(seq, idx):
    """seq:[T,B,C], idx:[T',B] -> out[t,b,:] = seq[idx[t,b], b, :] (torch.gather dim=0)."""
    idx3 = jnp.broadcast_to(idx[:, :, None], (idx.shape[0], idx.shape[1], seq.shape[2]))
    return jnp.take_along_axis(seq, idx3, axis=0)


def patch2img(patches, p, image_size):
    """Rearrange('(h w) b (c p1 p2) -> b c (h p1) (w p2)')."""
    hh = image_size // p
    T, B, _ = patches.shape
    x = patches.reshape(hh, hh, B, 3, p, p)          # (h, w, b, c, p1, p2)
    x = x.transpose(2, 3, 0, 4, 1, 5)                # (b, c, h, p1, w, p2)
    return x.reshape(B, 3, hh * p, hh * p)


def encoder_forward(params, img, forward_indexes, cfg):
    C = cfg["emb_dim"]
    psz = cfg["patch_size"]
    H = cfg["num_heads"]
    B, Cin, Him, Wim = img.shape
    h, w = Him // psz, Wim // psz
    T = h * w
    # Conv2d(3, C, p, p) == patch extraction (XLA layout glue) + one Pallas matmul with
    # batch folded into M and K zero-padded to 128 lanes.
    patches = (img.reshape(B, Cin, h, psz, w, psz)
               .transpose(0, 2, 4, 1, 3, 5)
               .reshape(B, T, Cin * psz * psz))
    Kp = params["patchify_w"].shape[0]
    patches = jnp.pad(patches, ((0, 0), (0, 0), (0, Kp - patches.shape[-1])))
    x = matmul2d(patches.reshape(B * T, Kp), params["patchify_w"], params["patchify_b"])
    Cp = x.shape[-1]
    x = x.reshape(B, T, Cp).transpose(1, 0, 2) + params["enc_pos"]       # [T, B, Cp]
    # TODO(synk): PatchShuffle gather / cls concat kept as XLA glue (could be folded into
    # the fused stack kernel via PrefetchScalarGridSpec row gathers).
    x = take_indexes(x, forward_indexes)
    remain_T = int(T * (1 - cfg["mask_ratio"]))
    x = x[:remain_T]
    cls = jnp.broadcast_to(params["enc_cls"], (1, B, Cp))
    x = jnp.concatenate([cls, x], axis=0).transpose(1, 0, 2)             # [B, T'+1, Cp]
    x = transformer_stack(x, params["enc_stack"], num_heads=H, C=C,
                          final_ln=(params["enc_ln_g"], params["enc_ln_b"]))
    return x.transpose(1, 0, 2)                                          # [T'+1, B, Cp]


def decoder_forward(params, features, backward_indexes, cfg):
    C = cfg["emb_dim"]
    psz = cfg["patch_size"]
    H = cfg["num_heads"]
    T = features.shape[0]
    B = backward_indexes.shape[1]
    Cp = features.shape[2]
    backward_indexes = jnp.concatenate(
        [jnp.zeros((1, B), backward_indexes.dtype), backward_indexes + 1], axis=0)
    mask_tokens = jnp.broadcast_to(params["dec_mask"],
                                   (backward_indexes.shape[0] - T, B, Cp))
    features = jnp.concatenate([features, mask_tokens], axis=0)
    features = take_indexes(features, backward_indexes)
    features = features + params["dec_pos"]
    x = features.transpose(1, 0, 2)                                      # [B, Tfull+1, Cp]

    # All decoder blocks + head in one fused kernel; cls + padded lanes dropped after.
    patches_p = transformer_stack(x, params["dec_stack"], num_heads=H, C=C,
                                  head=(params["head_w"], params["head_b"]))
    out_p = 3 * psz * psz
    patches = patches_p[:, 1:, :out_p].transpose(1, 0, 2)                # [Tfull, B, 3*p*p]

    mask = jnp.zeros_like(patches)
    mask = mask.at[T - 1:].set(1.0)
    mask = take_indexes(mask, backward_indexes[1:] - 1)

    img = patch2img(patches, psz, cfg["image_size"])
    mask_img = patch2img(mask, psz, cfg["image_size"])
    return img, mask_img


def decoder_model_forward(params, img, embedding, forward_indexes, backward_indexes, cfg):
    features = encoder_forward(params, img, forward_indexes, cfg)
    # mlp(embedding): one [B,512]x[512,Cp] Pallas matmul (batch folded into M).
    proj = matmul2d(embedding, params["mlp_w"])
    # TODO(synk): features[0] overwrite / decoder token reassembly stay as XLA glue.
    features = features.at[0].set(proj)
    return decoder_forward(params, features, backward_indexes, cfg)


# -------------------------------------------------------------------------------- init
def _xavier(key, shape):
    a = float(np.sqrt(6.0 / (shape[0] + shape[1])))
    return jax.random.uniform(key, shape, jnp.float32, -a, a)


def init_block(key, C):
    ks = jax.random.split(key, 4)
    return dict(
        ln1_g=jnp.ones((C,), jnp.float32), ln1_b=jnp.zeros((C,), jnp.float32),
        qkv_w=_xavier(ks[0], (C, 3 * C)),                     # qkv_bias=False (timm default)
        proj_w=_xavier(ks[1], (C, C)), proj_b=jnp.zeros((C,), jnp.float32),
        ln2_g=jnp.ones((C,), jnp.float32), ln2_b=jnp.zeros((C,), jnp.float32),
        fc1_w=_xavier(ks[2], (C, 4 * C)), fc1_b=jnp.zeros((4 * C,), jnp.float32),
        fc2_w=_xavier(ks[3], (4 * C, C)), fc2_b=jnp.zeros((C,), jnp.float32),
    )


def init_params(key, image_size, patch_size, emb_dim, enc_layers, dec_layers, embed_in):
    T = (image_size // patch_size) ** 2
    keys = jax.random.split(key, 8 + enc_layers + dec_layers)
    return dict(
        patchify_w=_xavier(keys[0], (3 * patch_size * patch_size, emb_dim)),
        patchify_b=jnp.zeros((emb_dim,), jnp.float32),
        enc_cls=0.02 * jax.random.normal(keys[1], (1, 1, emb_dim), jnp.float32),
        enc_pos=0.02 * jax.random.normal(keys[2], (T, 1, emb_dim), jnp.float32),
        enc_ln_g=jnp.ones((emb_dim,), jnp.float32),
        enc_ln_b=jnp.zeros((emb_dim,), jnp.float32),
        enc_blocks=[init_block(k, emb_dim) for k in keys[3:3 + enc_layers]],
        dec_mask=0.02 * jax.random.normal(keys[3 + enc_layers], (1, 1, emb_dim), jnp.float32),
        dec_pos=0.02 * jax.random.normal(keys[4 + enc_layers], (T + 1, 1, emb_dim), jnp.float32),
        dec_blocks=[init_block(k, emb_dim)
                    for k in keys[5 + enc_layers:5 + enc_layers + dec_layers]],
        head_w=_xavier(keys[5 + enc_layers + dec_layers], (emb_dim, 3 * patch_size ** 2)),
        head_b=jnp.zeros((3 * patch_size ** 2,), jnp.float32),
        mlp_w=_xavier(keys[6 + enc_layers + dec_layers], (embed_in, emb_dim)),
    )


# -------------------------------------------------- zero-padding to 128 lanes + L-stacking
def _pad_last(a, n):
    pad = [(0, 0)] * (a.ndim - 1) + [(0, n - a.shape[-1])]
    return jnp.pad(a, pad)


def _pad2d(w, rows, cols):
    return jnp.pad(w, ((0, rows - w.shape[0]), (0, cols - w.shape[1])))


def _pad_row(v, n):
    return jnp.pad(v, (0, n - v.shape[0])).reshape(1, n)


def _pad_qkv(w, C, Cp):
    out = jnp.zeros((Cp, 3 * Cp), jnp.float32)
    out = out.at[:C, 0:C].set(w[:, 0:C])
    out = out.at[:C, Cp:Cp + C].set(w[:, C:2 * C])
    out = out.at[:C, 2 * Cp:2 * Cp + C].set(w[:, 2 * C:3 * C])
    return out


def _stack_and_pad_blocks(blocks, C, Cp, Hp):
    def stk(fn):
        return jnp.stack([fn(b) for b in blocks], axis=0)
    return dict(
        ln1_g=stk(lambda b: _pad_row(b["ln1_g"], Cp)),      # [L, 1, Cp]
        ln1_b=stk(lambda b: _pad_row(b["ln1_b"], Cp)),
        qkv_w=stk(lambda b: _pad_qkv(b["qkv_w"], C, Cp)),   # [L, Cp, 3*Cp]
        proj_w=stk(lambda b: _pad2d(b["proj_w"], C, Cp)),   # [L, C, Cp]
        proj_b=stk(lambda b: _pad_row(b["proj_b"], Cp)),
        ln2_g=stk(lambda b: _pad_row(b["ln2_g"], Cp)),
        ln2_b=stk(lambda b: _pad_row(b["ln2_b"], Cp)),
        fc1_w=stk(lambda b: _pad2d(b["fc1_w"], Cp, Hp)),    # [L, Cp, Hp]
        fc1_b=stk(lambda b: _pad_row(b["fc1_b"], Hp)),
        fc2_w=stk(lambda b: _pad2d(b["fc2_w"], Hp, Cp)),    # [L, Hp, Cp]
        fc2_b=stk(lambda b: _pad_row(b["fc2_b"], Cp)),
    )


def pad_params(params, cfg):
    C = cfg["emb_dim"]
    psz = cfg["patch_size"]
    Cp = _round_up(C)
    Hp = _round_up(4 * C)
    Np = _round_up(3 * psz * psz)
    Kp = _round_up(3 * psz * psz)
    return dict(
        patchify_w=_pad2d(params["patchify_w"], Kp, Cp),
        patchify_b=_pad_row(params["patchify_b"], Cp),
        enc_cls=_pad_last(params["enc_cls"], Cp),
        enc_pos=_pad_last(params["enc_pos"], Cp),
        enc_ln_g=_pad_row(params["enc_ln_g"], Cp),
        enc_ln_b=_pad_row(params["enc_ln_b"], Cp),
        enc_stack=_stack_and_pad_blocks(params["enc_blocks"], C, Cp, Hp),
        dec_mask=_pad_last(params["dec_mask"], Cp),
        dec_pos=_pad_last(params["dec_pos"], Cp),
        dec_stack=_stack_and_pad_blocks(params["dec_blocks"], C, Cp, Hp),
        head_w=_pad2d(params["head_w"], Cp, Np),
        head_b=_pad_row(params["head_b"], Np),
        mlp_w=_pad_last(params["mlp_w"], Cp),
    )


# ----------------------------------------------------- pure-JAX reference (sanity check)
def _ref_layer_norm(x, g, b, eps=1e-5):
    mu = jnp.mean(x, axis=-1, keepdims=True)
    var = jnp.mean((x - mu) ** 2, axis=-1, keepdims=True)
    return (x - mu) * jax.lax.rsqrt(var + eps) * g + b


def _ref_block(x, blk, H):
    B, T, C = x.shape
    D = C // H
    h1 = _ref_layer_norm(x, blk["ln1_g"], blk["ln1_b"])
    qkv = jnp.einsum("btc,cd->btd", h1, blk["qkv_w"], precision="highest")
    q, k, v = qkv[..., :C], qkv[..., C:2 * C], qkv[..., 2 * C:]
    q = q.reshape(B, T, H, D).transpose(0, 2, 1, 3)
    k = k.reshape(B, T, H, D).transpose(0, 2, 1, 3)
    v = v.reshape(B, T, H, D).transpose(0, 2, 1, 3)
    s = jnp.einsum("bhqd,bhkd->bhqk", q, k, precision="highest") * (float(D) ** -0.5)
    p = jax.nn.softmax(s, axis=-1)
    av = jnp.einsum("bhqk,bhkd->bhqd", p, v, precision="highest")
    av = av.transpose(0, 2, 1, 3).reshape(B, T, C)
    x = x + jnp.einsum("btc,cd->btd", av, blk["proj_w"], precision="highest") + blk["proj_b"]
    h2 = _ref_layer_norm(x, blk["ln2_g"], blk["ln2_b"])
    hmid = _gelu_tanh(jnp.einsum("btc,ch->bth", h2, blk["fc1_w"], precision="highest")
                      + blk["fc1_b"])
    return x + jnp.einsum("bth,hc->btc", hmid, blk["fc2_w"], precision="highest") + blk["fc2_b"]


def reference_forward(params, img, embedding, forward_indexes, backward_indexes, cfg):
    C = cfg["emb_dim"]
    psz = cfg["patch_size"]
    H = cfg["num_heads"]
    B, Cin, Him, Wim = img.shape
    h, w = Him // psz, Wim // psz
    T = h * w
    patches = (img.reshape(B, Cin, h, psz, w, psz)
               .transpose(0, 2, 4, 1, 3, 5).reshape(B, T, Cin * psz * psz))
    x = (jnp.einsum("btk,kc->btc", patches, params["patchify_w"], precision="highest")
         + params["patchify_b"])
    x = x.transpose(1, 0, 2) + params["enc_pos"]
    x = take_indexes(x, forward_indexes)
    remain_T = int(T * (1 - cfg["mask_ratio"]))
    x = x[:remain_T]
    cls = jnp.broadcast_to(params["enc_cls"], (1, B, C))
    x = jnp.concatenate([cls, x], axis=0).transpose(1, 0, 2)
    for blk in params["enc_blocks"]:
        x = _ref_block(x, blk, H)
    x = _ref_layer_norm(x, params["enc_ln_g"], params["enc_ln_b"])
    features = x.transpose(1, 0, 2)                                       # [T'+1, B, C]

    proj = jnp.einsum("bk,kc->bc", embedding, params["mlp_w"], precision="highest")
    features = features.at[0].set(proj)

    Tf = features.shape[0]
    bwd = jnp.concatenate([jnp.zeros((1, B), backward_indexes.dtype),
                           backward_indexes + 1], axis=0)
    mask_tokens = jnp.broadcast_to(params["dec_mask"], (bwd.shape[0] - Tf, B, C))
    features = jnp.concatenate([features, mask_tokens], axis=0)
    features = take_indexes(features, bwd)
    features = features + params["dec_pos"]
    x = features.transpose(1, 0, 2)
    for blk in params["dec_blocks"]:
        x = _ref_block(x, blk, H)
    x = x.transpose(1, 0, 2)[1:]                                          # [Tfull, B, C]
    patches_out = (jnp.einsum("tbc,cn->tbn", x, params["head_w"], precision="highest")
                   + params["head_b"])
    mask = jnp.zeros_like(patches_out)
    mask = mask.at[Tf - 1:].set(1.0)
    mask = take_indexes(mask, bwd[1:] - 1)
    return patch2img(patches_out, psz, cfg["image_size"]), patch2img(mask, psz, cfg["image_size"])


# -------------------------------------------------------------------------------- main
if __name__ == "__main__":
    cfg = dict(image_size=16, patch_size=4, emb_dim=48,
               enc_layers=2, dec_layers=2, num_heads=3,
               mask_ratio=0.75, embed_in=512)   # arch='resnet18' -> 512-d embedding
    B = 2
    T = (cfg["image_size"] // cfg["patch_size"]) ** 2

    key = jax.random.PRNGKey(0)
    k_img, k_emb, k_par = jax.random.split(key, 3)
    img = jax.random.normal(k_img, (B, 3, cfg["image_size"], cfg["image_size"]), jnp.float32)
    embedding = jax.random.normal(k_emb, (B, cfg["embed_in"]), jnp.float32)
    params = init_params(k_par, cfg["image_size"], cfg["patch_size"], cfg["emb_dim"],
                         cfg["enc_layers"], cfg["dec_layers"], cfg["embed_in"])
    params_padded = pad_params(params, cfg)

    # PatchShuffle's per-batch random permutations (host-side numpy like the reference),
    # made deterministic with a fixed seed.
    rng = np.random.RandomState(0)
    fwd = np.stack([rng.permutation(T) for _ in range(B)], axis=-1)       # [T, B]
    bwd = np.argsort(fwd, axis=0)                                         # [T, B]
    forward_indexes = jnp.asarray(fwd, jnp.int32)
    backward_indexes = jnp.asarray(bwd, jnp.int32)

    forward_fn = jax.jit(
        lambda pr, im, em, fi, bi: decoder_model_forward(pr, im, em, fi, bi, cfg))
    pred_img, mask = forward_fn(params_padded, img, embedding,
                                forward_indexes, backward_indexes)
    pred_img, mask = jax.block_until_ready((pred_img, mask))

    assert pred_img.shape == (B, 3, cfg["image_size"], cfg["image_size"])
    assert mask.shape == (B, 3, cfg["image_size"], cfg["image_size"])
    assert bool(jnp.all(jnp.isfinite(pred_img))) and bool(jnp.all(jnp.isfinite(mask)))

    # Numerical sanity check vs. a pure-JAX reference (same tanh-GELU; exact softmax --
    # difference bounded by the approx reciprocal in the kernel softmax).
    ref_img, ref_mask = reference_forward(params, img, embedding,
                                          forward_indexes, backward_indexes, cfg)
    np.testing.assert_allclose(np.asarray(pred_img), np.asarray(ref_img),
                               rtol=2e-2, atol=2e-2)
    np.testing.assert_allclose(np.asarray(mask), np.asarray(ref_mask), atol=1e-6)

    print("KERNEL_OK")
</pallas_src>

<mosaic_0001>
module attributes {stable_mosaic.version = 11 : i64} {
  func.func @_matmul_bias_kernel(%arg0: memref<32x128xf32, #tpu.memory_space<vmem>>, %arg1: memref<128x128xf32, #tpu.memory_space<vmem>>, %arg2: memref<1x128xf32, #tpu.memory_space<vmem>>, %arg3: memref<32x128xf32, #tpu.memory_space<vmem>>) attributes {dimension_semantics = [], scalar_prefetch = 0 : i64, scratch_operands = 0 : i64, tpu.core_type = #tpu.core_type<tc>} {
    %c0 = arith.constant 0 : index
    %c0_0 = arith.constant 0 : index
    %0 = vector.load %arg0[%c0, %c0_0] : memref<32x128xf32, #tpu.memory_space<vmem>>, vector<32x128xf32>
    %c0_1 = arith.constant 0 : index
    %c0_2 = arith.constant 0 : index
    %1 = vector.load %arg1[%c0_1, %c0_2] : memref<128x128xf32, #tpu.memory_space<vmem>>, vector<128x128xf32>
    %cst = arith.constant dense<0.000000e+00> : vector<32x128xf32>
    %2 = tpu.matmul %0, %1, %cst {dimension_numbers = #tpu.dot_dimension_numbers<[1], [0], [0], [1], [0, 0, 1, 1], [], []>} : vector<32x128xf32>, vector<128x128xf32>, vector<32x128xf32> -> vector<32x128xf32>
    %c0_3 = arith.constant 0 : index
    %c0_4 = arith.constant 0 : index
    %3 = vector.load %arg2[%c0_3, %c0_4] : memref<1x128xf32, #tpu.memory_space<vmem>>, vector<1x128xf32>
    %4 = vector.broadcast %3 : vector<1x128xf32> to vector<32x128xf32>
    %5 = arith.addf %2, %4 : vector<32x128xf32>
    %c0_5 = arith.constant 0 : index
    %c0_6 = arith.constant 0 : index
    %6 = vector.load %arg3[%c0_5, %c0_6] : memref<32x128xf32, #tpu.memory_space<vmem>>, vector<32x128xf32>
    tpu.vector_store %arg3[%c0_5, %c0_6], %5 {strides = array<i32>} : memref<32x128xf32, #tpu.memory_space<vmem>>, vector<32x128xf32>,
    return
  }
}

module attributes {stable_mosaic.version = 11 : i64} {
  func.func @_matmul_kernel(%arg0: memref<2x512xf32, #tpu.memory_space<vmem>>, %arg1: memref<512x128xf32, #tpu.memory_space<vmem>>, %arg2: memref<2x128xf32, #tpu.memory_space<vmem>>) attributes {dimension_semantics = [], scalar_prefetch = 0 : i64, scratch_operands = 0 : i64, tpu.core_type = #tpu.core_type<tc>} {
    %c0 = arith.constant 0 : index
    %c0_0 = arith.constant 0 : index
    %0 = vector.load %arg0[%c0, %c0_0] : memref<2x512xf32, #tpu.memory_space<vmem>>, vector<2x512xf32>
    %c0_1 = arith.constant 0 : index
    %c0_2 = arith.constant 0 : index
    %1 = vector.load %arg1[%c0_1, %c0_2] : memref<512x128xf32, #tpu.memory_space<vmem>>, vector<512x128xf32>
    %cst = arith.constant dense<0.000000e+00> : vector<2x128xf32>
    %2 = tpu.matmul %0, %1, %cst {dimension_numbers = #tpu.dot_dimension_numbers<[1], [0], [0], [1], [0, 0, 1, 1], [], []>} : vector<2x512xf32>, vector<512x128xf32>, vector<2x128xf32> -> vector<2x128xf32>
    %c0_3 = arith.constant 0 : index
    %c0_4 = arith.constant 0 : index
    %3 = vector.load %arg2[%c0_3, %c0_4] : memref<2x128xf32, #tpu.memory_space<vmem>>, vector<2x128xf32>
    tpu.vector_store %arg2[%c0_3, %c0_4], %2 {strides = array<i32>} : memref<2x128xf32, #tpu.memory_space<vmem>>, vector<2x128xf32>,
    return
  }
}

module attributes {stable_mosaic.version = 11 : i64} {
  func.func @_stack_ln_kernel(%arg0: i32, %arg1: i32, %arg2: memref<1x5x128xf32, #tpu.memory_space<vmem>>, %arg3: memref<1x1x128xf32, #tpu.memory_space<vmem>>, %arg4: memref<1x1x128xf32, #tpu.memory_space<vmem>>, %arg5: memref<1x128x384xf32, #tpu.memory_space<vmem>>, %arg6: memref<1x48x128xf32, #tpu.memory_space<vmem>>, %arg7: memref<1x1x128xf32, #tpu.memory_space<vmem>>, %arg8: memref<1x1x128xf32, #tpu.memory_space<vmem>>, %arg9: memref<1x1x128xf32, #tpu.memory_space<vmem>>, %arg10: memref<1x128x256xf32, #tpu.memory_space<vmem>>, %arg11: memref<1x1x256xf32, #tpu.memory_space<vmem>>, %arg12: memref<1x256x128xf32, #tpu.memory_space<vmem>>, %arg13: memref<1x1x128xf32, #tpu.memory_space<vmem>>, %arg14: memref<1x128xf32, #tpu.memory_space<vmem>>, %arg15: memref<1x128xf32, #tpu.memory_space<vmem>>, %arg16: memref<1x5x128xf32, #tpu.memory_space<vmem>>, %arg17: memref<5x128xf32, #tpu.memory_space<vmem>>) attributes {dimension_semantics = [#tpu.dimension_semantics<parallel>, #tpu.dimension_semantics<arbitrary>], iteration_bounds = array<i64: 2, 2>, scalar_prefetch = 0 : i64, scratch_operands = 1 : i64, tpu.core_type = #tpu.core_type<tc>, window_params = [{transform_indices = @transform_0, window_bounds = array<i64: 1, 5, 128>}, {transform_indices = @transform_1, window_bounds = array<i64: 1, 1, 128>}, {transform_indices = @transform_2, window_bounds = array<i64: 1, 1, 128>}, {transform_indices = @transform_3, window_bounds = array<i64: 1, 128, 384>}, {transform_indices = @transform_4, window_bounds = array<i64: 1, 48, 128>}, {transform_indices = @transform_5, window_bounds = array<i64: 1, 1, 128>}, {transform_indices = @transform_6, window_bounds = array<i64: 1, 1, 128>}, {transform_indices = @transform_7, window_bounds = array<i64: 1, 1, 128>}, {transform_indices = @transform_8, window_bounds = array<i64: 1, 128, 256>}, {transform_indices = @transform_9, window_bounds = array<i64: 1, 1, 256>}, {transform_indices = @transform_10, window_bounds = array<i64: 1, 256, 128>}, {transform_indices = @transform_11, window_bounds = array<i64: 1, 1, 128>}, {pipeline_mode = #tpu.pipeline_mode<synchronous>, transform_indices = @transform_12, window_bounds = array<i64: 1, 128>}, {pipeline_mode = #tpu.pipeline_mode<synchronous>, transform_indices = @transform_13, window_bounds = array<i64: 1, 128>}, {transform_indices = @transform_14, window_bounds = array<i64: 1, 5, 128>}]} {
    %c0_i32 = arith.constant 0 : i32
    %0 = arith.cmpi eq, %arg1, %c0_i32 : i32
    %1 = arith.extui %0 : i1 to i32
    %c0_i32_0 = arith.constant 0 : i32
    %2 = arith.cmpi ne, %1, %c0_i32_0 : i32
    scf.if %2 {
      %c0_72 = arith.constant 0 : index
      %c0_73 = arith.constant 0 : index
      %c0_74 = arith.constant 0 : index
      %157 = vector.load %arg2[%c0_72, %c0_73, %c0_74] : memref<1x5x128xf32, #tpu.memory_space<vmem>>, vector<1x5x128xf32>
      %158 = vector.shape_cast %157 : vector<1x5x128xf32> to vector<5x128xf32>
      %c0_75 = arith.constant 0 : index
      %c0_76 = arith.constant 0 : index
      %159 = vector.load %arg17[%c0_75, %c0_76] : memref<5x128xf32, #tpu.memory_space<vmem>>, vector<5x128xf32>
      tpu.vector_store %arg17[%c0_75, %c0_76], %158 {strides = array<i32>} : memref<5x128xf32, #tpu.memory_space<vmem>>, vector<5x128xf32>,
    } else {
    }
    %c0 = arith.constant 0 : index
    %c0_1 = arith.constant 0 : index
    %3 = vector.load %arg17[%c0, %c0_1] : memref<5x128xf32, #tpu.memory_space<vmem>>, vector<5x128xf32>
    %c0_2 = arith.constant 0 : index
    %c0_3 = arith.constant 0 : index
    %c0_4 = arith.constant 0 : index
    %4 = vector.load %arg3[%c0_2, %c0_3, %c0_4] : memref<1x1x128xf32, #tpu.memory_space<vmem>>, vector<1x1x128xf32>
    %5 = vector.shape_cast %4 : vector<1x1x128xf32> to vector<1x128xf32>
    %c0_5 = arith.constant 0 : index
    %c0_6 = arith.constant 0 : index
    %c0_7 = arith.constant 0 : index
    %6 = vector.load %arg4[%c0_5, %c0_6, %c0_7] : memref<1x1x128xf32, #tpu.memory_space<vmem>>, vector<1x1x128xf32>
    %7 = vector.shape_cast %6 : vector<1x1x128xf32> to vector<1x128xf32>
    %c0_8 = arith.constant 0 : index
    %c0_9 = arith.constant 0 : index
    %c0_10 = arith.constant 0 : index
    %8 = vector.load %arg5[%c0_8, %c0_9, %c0_10] : memref<1x128x384xf32, #tpu.memory_space<vmem>>, vector<1x128x384xf32>
    %9 = vector.shape_cast %8 : vector<1x128x384xf32> to vector<128x384xf32>
    %c0_11 = arith.constant 0 : index
    %c0_12 = arith.constant 0 : index
    %c0_13 = arith.constant 0 : index
    %10 = vector.load %arg6[%c0_11, %c0_12, %c0_13] : memref<1x48x128xf32, #tpu.memory_space<vmem>>, vector<1x48x128xf32>
    %11 = vector.shape_cast %10 : vector<1x48x128xf32> to vector<48x128xf32>
    %c0_14 = arith.constant 0 : index
    %c0_15 = arith.constant 0 : index
    %c0_16 = arith.constant 0 : index
    %12 = vector.load %arg7[%c0_14, %c0_15, %c0_16] : memref<1x1x128xf32, #tpu.memory_space<vmem>>, vector<1x1x128xf32>
    %13 = vector.shape_cast %12 : vector<1x1x128xf32> to vector<1x128xf32>
    %c0_17 = arith.constant 0 : index
    %c0_18 = arith.constant 0 : index
    %c0_19 = arith.constant 0 : index
    %14 = vector.load %arg8[%c0_17, %c0_18, %c0_19] : memref<1x1x128xf32, #tpu.memory_space<vmem>>, vector<1x1x128xf32>
    %15 = vector.shape_cast %14 : vector<1x1x128xf32> to vector<1x128xf32>
    %c0_20 = arith.constant 0 : index
    %c0_21 = arith.constant 0 : index
    %c0_22 = arith.constant 0 : index
    %16 = vector.load %arg9[%c0_20, %c0_21, %c0_22] : memref<1x1x128xf32, #tpu.memory_space<vmem>>, vector<1x1x128xf32>
    %17 = vector.shape_cast %16 : vector<1x1x128xf32> to vector<1x128xf32>
    %c0_23 = arith.constant 0 : index
    %c0_24 = arith.constant 0 : index
    %c0_25 = arith.constant 0 : index
    %18 = vector.load %arg10[%c0_23, %c0_24, %c0_25] : memref<1x128x256xf32, #tpu.memory_space<vmem>>, vector<1x128x256xf32>
    %19 = vector.shape_cast %18 : vector<1x128x256xf32> to vector<128x256xf32>
    %c0_26 = arith.constant 0 : index
    %c0_27 = arith.constant 0 : index
    %c0_28 = arith.constant 0 : index
    %20 = vector.load %arg11[%c0_26, %c0_27, %c0_28] : memref<1x1x256xf32, #tpu.memory_space<vmem>>, vector<1x1x256xf32>
    %21 = vector.shape_cast %20 : vector<1x1x256xf32> to vector<1x256xf32>
    %c0_29 = arith.constant 0 : index
    %c0_30 = arith.constant 0 : index
    %c0_31 = arith.constant 0 : index
    %22 = vector.load %arg12[%c0_29, %c0_30, %c0_31] : memref<1x256x128xf32, #tpu.memory_space<vmem>>, vector<1x256x128xf32>
    %23 = vector.shape_cast %22 : vector<1x256x128xf32> to vector<256x128xf32>
    %c0_32 = arith.constant 0 : index
    %c0_33 = arith.constant 0 : index
    %c0_34 = arith.constant 0 : index
    %24 = vector.load %arg13[%c0_32, %c0_33, %c0_34] : memref<1x1x128xf32, #tpu.memory_space<vmem>>, vector<1x1x128xf32>
    %25 = vector.shape_cast %24 : vector<1x1x128xf32> to vector<1x128xf32>
    %cst = arith.constant dense<0.000000e+00> : vector<5xf32>
    %26 = vector.multi_reduction <add>, %3, %cst [1] : vector<5x128xf32> to vector<5xf32>
    %27 = vector.shape_cast %26 : vector<5xf32> to vector<5x1xf32>
    %cst_35 = arith.constant 0.020833334 : f32
    %28 = vector.broadcast %cst_35 : f32 to vector<5x1xf32>
    %29 = arith.mulf %27, %28 : vector<5x1xf32>
    %30 = arith.mulf %3, %3 : vector<5x128xf32>
    %cst_36 = arith.constant dense<0.000000e+00> : vector<5xf32>
    %31 = vector.multi_reduction <add>, %30, %cst_36 [1] : vector<5x128xf32> to vector<5xf32>
    %32 = vector.shape_cast %31 : vector<5xf32> to vector<5x1xf32>
    %cst_37 = arith.constant 0.020833334 : f32
    %33 = vector.broadcast %cst_37 : f32 to vector<5x1xf32>
    %34 = arith.mulf %32, %33 : vector<5x1xf32>
    %35 = arith.mulf %29, %29 : vector<5x1xf32>
    %36 = arith.subf %34, %35 : vector<5x1xf32>
    %37 = vector.broadcast %29 : vector<5x1xf32> to vector<5x128xf32>
    %38 = arith.subf %3, %37 : vector<5x128xf32>
    %cst_38 = arith.constant 9.99999974E-6 : f32
    %39 = vector.broadcast %cst_38 : f32 to vector<5x1xf32>
    %40 = arith.addf %36, %39 : vector<5x1xf32>
    %41 = math.rsqrt %40 : vector<5x1xf32>
    %42 = vector.broadcast %41 : vector<5x1xf32> to vector<5x128xf32>
    %43 = arith.mulf %38, %42 : vector<5x128xf32>
    %44 = vector.broadcast %5 : vector<1x128xf32> to vector<5x128xf32>
    %45 = arith.mulf %43, %44 : vector<5x128xf32>
    %46 = vector.broadcast %7 : vector<1x128xf32> to vector<5x128xf32>
    %47 = arith.addf %45, %46 : vector<5x128xf32>
    %cst_39 = arith.constant dense<0.000000e+00> : vector<5x384xf32>
    %48 = tpu.matmul %47, %9, %cst_39 {dimension_numbers = #tpu.dot_dimension_numbers<[1], [0], [0], [1], [0, 0, 1, 1], [], []>} : vector<5x128xf32>, vector<128x384xf32>, vector<5x384xf32> -> vector<5x384xf32>
    %49 = vector.extract_strided_slice %48 {offsets = [0, 0], sizes = [5, 16], strides = [1, 1]} : vector<5x384xf32> to vector<5x16xf32>
    %50 = vector.extract_strided_slice %48 {offsets = [0, 128], sizes = [5, 16], strides = [1, 1]} : vector<5x384xf32> to vector<5x16xf32>
    %51 = vector.extract_strided_slice %48 {offsets = [0, 256], sizes = [5, 16], strides = [1, 1]} : vector<5x384xf32> to vector<5x16xf32>
    %cst_40 = arith.constant dense<0.000000e+00> : vector<5x5xf32>
    %52 = tpu.matmul %49, %50, %cst_40 {dimension_numbers = #tpu.dot_dimension_numbers<[1], [1], [0], [0], [0, 0, 1, 0], [], []>} : vector<5x16xf32>, vector<5x16xf32>, vector<5x5xf32> -> vector<5x5xf32>
    %cst_41 = arith.constant 2.500000e-01 : f32
    %53 = vector.broadcast %cst_41 : f32 to vector<5x5xf32>
    %54 = arith.mulf %52, %53 : vector<5x5xf32>
    %cst_42 = arith.constant dense<0xFF800000> : vector<5xf32>
    %55 = vector.multi_reduction <maximumf>, %54, %cst_42 [1] : vector<5x5xf32> to vector<5xf32>
    %56 = vector.shape_cast %55 : vector<5xf32> to vector<5x1xf32>
    %57 = vector.broadcast %56 : vector<5x1xf32> to vector<5x5xf32>
    %58 = arith.subf %54, %57 : vector<5x5xf32>
    %59 = math.exp %58 : vector<5x5xf32>
    %cst_43 = arith.constant dense<0.000000e+00> : vector<5xf32>
    %60 = vector.multi_reduction <add>, %59, %cst_43 [1] : vector<5x5xf32> to vector<5xf32>
    %61 = vector.shape_cast %60 : vector<5xf32> to vector<5x1xf32>
    %62 = tpu.reciprocal %61 {approx = true} : vector<5x1xf32> -> vector<5x1xf32>
    %63 = vector.broadcast %62 : vector<5x1xf32> to vector<5x5xf32>
    %64 = arith.mulf %59, %63 : vector<5x5xf32>
    %cst_44 = arith.constant dense<0.000000e+00> : vector<5x16xf32>
    %65 = tpu.matmul %64, %51, %cst_44 {dimension_numbers = #tpu.dot_dimension_numbers<[1], [0], [0], [1], [0, 0, 1, 1], [], []>} : vector<5x5xf32>, vector<5x16xf32>, vector<5x16xf32> -> vector<5x16xf32>
    %66 = vector.extract_strided_slice %11 {offsets = [0, 0], sizes = [16, 128], strides = [1, 1]} : vector<48x128xf32> to vector<16x128xf32>
    %cst_45 = arith.constant dense<0.000000e+00> : vector<5x128xf32>
    %67 = tpu.matmul %65, %66, %cst_45 {dimension_numbers = #tpu.dot_dimension_numbers<[1], [0], [0], [1], [0, 0, 1, 1], [], []>} : vector<5x16xf32>, vector<16x128xf32>, vector<5x128xf32> -> vector<5x128xf32>
    %68 = vector.extract_strided_slice %48 {offsets = [0, 16], sizes = [5, 16], strides = [1, 1]} : vector<5x384xf32> to vector<5x16xf32>
    %69 = vector.extract_strided_slice %48 {offsets = [0, 144], sizes = [5, 16], strides = [1, 1]} : vector<5x384xf32> to vector<5x16xf32>
    %70 = vector.extract_strided_slice %48 {offsets = [0, 272], sizes = [5, 16], strides = [1, 1]} : vector<5x384xf32> to vector<5x16xf32>
    %cst_46 = arith.constant dense<0.000000e+00> : vector<5x5xf32>
    %71 = tpu.matmul %68, %69, %cst_46 {dimension_numbers = #tpu.dot_dimension_numbers<[1], [1], [0], [0], [0, 0, 1, 0], [], []>} : vector<5x16xf32>, vector<5x16xf32>, vector<5x5xf32> -> vector<5x5xf32>
    %cst_47 = arith.constant 2.500000e-01 : f32
    %72 = vector.broadcast %cst_47 : f32 to vector<5x5xf32>
    %73 = arith.mulf %71, %72 : vector<5x5xf32>
    %cst_48 = arith.constant dense<0xFF800000> : vector<5xf32>
    %74 = vector.multi_reduction <maximumf>, %73, %cst_48 [1] : vector<5x5xf32> to vector<5xf32>
    %75 = vector.shape_cast %74 : vector<5xf32> to vector<5x1xf32>
    %76 = vector.broadcast %75 : vector<5x1xf32> to vector<5x5xf32>
    %77 = arith.subf %73, %76 : vector<5x5xf32>
    %78 = math.exp %77 : vector<5x5xf32>
    %cst_49 = arith.constant dense<0.000000e+00> : vector<5xf32>
    %79 = vector.multi_reduction <add>, %78, %cst_49 [1] : vector<5x5xf32> to vector<5xf32>
    %80 = vector.shape_cast %79 : vector<5xf32> to vector<5x1xf32>
    %81 = tpu.reciprocal %80 {approx = true} : vector<5x1xf32> -> vector<5x1xf32>
    %82 = vector.broadcast %81 : vector<5x1xf32> to vector<5x5xf32>
    %83 = arith.mulf %78, %82 : vector<5x5xf32>
    %cst_50 = arith.constant dense<0.000000e+00> : vector<5x16xf32>
    %84 = tpu.matmul %83, %70, %cst_50 {dimension_numbers = #tpu.dot_dimension_numbers<[1], [0], [0], [1], [0, 0, 1, 1], [], []>} : vector<5x5xf32>, vector<5x16xf32>, vector<5x16xf32> -> vector<5x16xf32>
    %85 = vector.extract_strided_slice %11 {offsets = [16, 0], sizes = [16, 128], strides = [1, 1]} : vector<48x128xf32> to vector<16x128xf32>
    %cst_51 = arith.constant dense<0.000000e+00> : vector<5x128xf32>
    %86 = tpu.matmul %84, %85, %cst_51 {dimension_numbers = #tpu.dot_dimension_numbers<[1], [0], [0], [1], [0, 0, 1, 1], [], []>} : vector<5x16xf32>, vector<16x128xf32>, vector<5x128xf32> -> vector<5x128xf32>
    %87 = arith.addf %67, %86 : vector<5x128xf32>
    %88 = vector.extract_strided_slice %48 {offsets = [0, 32], sizes = [5, 16], strides = [1, 1]} : vector<5x384xf32> to vector<5x16xf32>
    %89 = vector.extract_strided_slice %48 {offsets = [0, 160], sizes = [5, 16], strides = [1, 1]} : vector<5x384xf32> to vector<5x16xf32>
    %90 = vector.extract_strided_slice %48 {offsets = [0, 288], sizes = [5, 16], strides = [1, 1]} : vector<5x384xf32> to vector<5x16xf32>
    %cst_52 = arith.constant dense<0.000000e+00> : vector<5x5xf32>
    %91 = tpu.matmul %88, %89, %cst_52 {dimension_numbers = #tpu.dot_dimension_numbers<[1], [1], [0], [0], [0, 0, 1, 0], [], []>} : vector<5x16xf32>, vector<5x16xf32>, vector<5x5xf32> -> vector<5x5xf32>
    %cst_53 = arith.constant 2.500000e-01 : f32
    %92 = vector.broadcast %cst_53 : f32 to vector<5x5xf32>
    %93 = arith.mulf %91, %92 : vector<5x5xf32>
    %cst_54 = arith.constant dense<0xFF800000> : vector<5xf32>
    %94 = vector.multi_reduction <maximumf>, %93, %cst_54 [1] : vector<5x5xf32> to vector<5xf32>
    %95 = vector.shape_cast %94 : vector<5xf32> to vector<5x1xf32>
    %96 = vector.broadcast %95 : vector<5x1xf32> to vector<5x5xf32>
    %97 = arith.subf %93, %96 : vector<5x5xf32>
    %98 = math.exp %97 : vector<5x5xf32>
    %cst_55 = arith.constant dense<0.000000e+00> : vector<5xf32>
    %99 = vector.multi_reduction <add>, %98, %cst_55 [1] : vector<5x5xf32> to vector<5xf32>
    %100 = vector.shape_cast %99 : vector<5xf32> to vector<5x1xf32>
    %101 = tpu.reciprocal %100 {approx = true} : vector<5x1xf32> -> vector<5x1xf32>
    %102 = vector.broadcast %101 : vector<5x1xf32> to vector<5x5xf32>
    %103 = arith.mulf %98, %102 : vector<5x5xf32>
    %cst_56 = arith.constant dense<0.000000e+00> : vector<5x16xf32>
    %104 = tpu.matmul %103, %90, %cst_56 {dimension_numbers = #tpu.dot_dimension_numbers<[1], [0], [0], [1], [0, 0, 1, 1], [], []>} : vector<5x5xf32>, vector<5x16xf32>, vector<5x16xf32> -> vector<5x16xf32>
    %105 = vector.extract_strided_slice %11 {offsets = [32, 0], sizes = [16, 128], strides = [1, 1]} : vector<48x128xf32> to vector<16x128xf32>
    %cst_57 = arith.constant dense<0.000000e+00> : vector<5x128xf32>
    %106 = tpu.matmul %104, %105, %cst_57 {dimension_numbers = #tpu.dot_dimension_numbers<[1], [0], [0], [1], [0, 0, 1, 1], [], []>} : vector<5x16xf32>, vector<16x128xf32>, vector<5x128xf32> -> vector<5x128xf32>
    %107 = arith.addf %87, %106 : vector<5x128xf32>
    %108 = arith.addf %3, %107 : vector<5x128xf32>
    %109 = vector.broadcast %13 : vector<1x128xf32> to vector<5x128xf32>
    %110 = arith.addf %108, %109 : vector<5x128xf32>
    %cst_58 = arith.constant dense<0.000000e+00> : vector<5xf32>
    %111 = vector.multi_reduction <add>, %110, %cst_58 [1] : vector<5x128xf32> to vector<5xf32>
    %112 = vector.shape_cast %111 : vector<5xf32> to vector<5x1xf32>
    %cst_59 = arith.constant 0.020833334 : f32
    %113 = vector.broadcast %cst_59 : f32 to vector<5x1xf32>
    %114 = arith.mulf %112, %113 : vector<5x1xf32>
    %115 = arith.mulf %110, %110 : vector<5x128xf32>
    %cst_60 = arith.constant dense<0.000000e+00> : vector<5xf32>
    %116 = vector.multi_reduction <add>, %115, %cst_60 [1] : vector<5x128xf32> to vector<5xf32>
    %117 = vector.shape_cast %116 : vector<5xf32> to vector<5x1xf32>
    %cst_61 = arith.constant 0.020833334 : f32
    %118 = vector.broadcast %cst_61 : f32 to vector<5x1xf32>
    %119 = arith.mulf %117, %118 : vector<5x1xf32>
    %120 = arith.mulf %114, %114 : vector<5x1xf32>
    %121 = arith.subf %119, %120 : vector<5x1xf32>
    %122 = vector.broadcast %114 : vector<5x1xf32> to vector<5x128xf32>
    %123 = arith.subf %110, %122 : vector<5x128xf32>
    %cst_62 = arith.constant 9.99999974E-6 : f32
    %124 = vector.broadcast %cst_62 : f32 to vector<5x1xf32>
    %125 = arith.addf %121, %124 : vector<5x1xf32>
    %126 = math.rsqrt %125 : vector<5x1xf32>
    %127 = vector.broadcast %126 : vector<5x1xf32> to vector<5x128xf32>
    %128 = arith.mulf %123, %127 : vector<5x128xf32>
    %129 = vector.broadcast %15 : vector<1x128xf32> to vector<5x128xf32>
    %130 = arith.mulf %128, %129 : vector<5x128xf32>
    %131 = vector.broadcast %17 : vector<1x128xf32> to vector<5x128xf32>
    %132 = arith.addf %130, %131 : vector<5x128xf32>
    %cst_63 = arith.constant dense<0.000000e+00> : vector<5x256xf32>
    %133 = tpu.matmul %132, %19, %cst_63 {dimension_numbers = #tpu.dot_dimension_numbers<[1], [0], [0], [1], [0, 0, 1, 1], [], []>} : vector<5x128xf32>, vector<128x256xf32>, vector<5x256xf32> -> vector<5x256xf32>
    %134 = vector.broadcast %21 : vector<1x256xf32> to vector<5x256xf32>
    %135 = arith.addf %133, %134 : vector<5x256xf32>
    %cst_64 = arith.constant 5.000000e-01 : f32
    %136 = vector.broadcast %cst_64 : f32 to vector<5x256xf32>
    %137 = arith.mulf %136, %135 : vector<5x256xf32>
    %cst_65 = arith.constant 4.471500e-02 : f32
    %138 = vector.broadcast %cst_65 : f32 to vector<5x256xf32>
    %139 = arith.mulf %138, %135 : vector<5x256xf32>
    %140 = arith.mulf %139, %135 : vector<5x256xf32>
    %141 = arith.mulf %140, %135 : vector<5x256xf32>
    %142 = arith.addf %135, %141 : vector<5x256xf32>
    %cst_66 = arith.constant 0.797884583 : f32
    %143 = vector.broadcast %cst_66 : f32 to vector<5x256xf32>
    %144 = arith.mulf %143, %142 : vector<5x256xf32>
    %145 = math.tanh %144 : vector<5x256xf32>
    %cst_67 = arith.constant 1.000000e+00 : f32
    %146 = vector.broadcast %cst_67 : f32 to vector<5x256xf32>
    %147 = arith.addf %146, %145 : vector<5x256xf32>
    %148 = arith.mulf %137, %147 : vector<5x256xf32>
    %cst_68 = arith.constant dense<0.000000e+00> : vector<5x128xf32>
    %149 = tpu.matmul %148, %23, %cst_68 {dimension_numbers = #tpu.dot_dimension_numbers<[1], [0], [0], [1], [0, 0, 1, 1], [], []>} : vector<5x256xf32>, vector<256x128xf32>, vector<5x128xf32> -> vector<5x128xf32>
    %150 = arith.addf %110, %149 : vector<5x128xf32>
    %151 = vector.broadcast %25 : vector<1x128xf32> to vector<5x128xf32>
    %152 = arith.addf %150, %151 : vector<5x128xf32>
    %c0_69 = arith.constant 0 : index
    %c0_70 = arith.constant 0 : index
    %153 = vector.load %arg17[%c0_69, %c0_70] : memref<5x128xf32, #tpu.memory_space<vmem>>, vector<5x128xf32>
    tpu.vector_store %arg17[%c0_69, %c0_70], %152 {strides = array<i32>} : memref<5x128xf32, #tpu.memory_space<vmem>>, vector<5x128xf32>,
    %c1_i32 = arith.constant 1 : i32
    %154 = arith.cmpi eq, %arg1, %c1_i32 : i32
    %155 = arith.extui %154 : i1 to i32
    %c0_i32_71 = arith.constant 0 : i32
    %156 = arith.cmpi ne, %155, %c0_i32_71 : i32
    scf.if %156 {
      %c0_72 = arith.constant 0 : index
      %c0_73 = arith.constant 0 : index
      %157 = vector.load %arg17[%c0_72, %c0_73] : memref<5x128xf32, #tpu.memory_space<vmem>>, vector<5x128xf32>
      %c0_74 = arith.constant 0 : index
      %c0_75 = arith.constant 0 : index
      %158 = vector.load %arg14[%c0_74, %c0_75] : memref<1x128xf32, #tpu.memory_space<vmem>>, vector<1x128xf32>
      %c0_76 = arith.constant 0 : index
      %c0_77 = arith.constant 0 : index
      %159 = vector.load %arg15[%c0_76, %c0_77] : memref<1x128xf32, #tpu.memory_space<vmem>>, vector<1x128xf32>
      %cst_78 = arith.constant dense<0.000000e+00> : vector<5xf32>
      %160 = vector.multi_reduction <add>, %157, %cst_78 [1] : vector<5x128xf32> to vector<5xf32>
      %161 = vector.shape_cast %160 : vector<5xf32> to vector<5x1xf32>
      %cst_79 = arith.constant 0.020833334 : f32
      %162 = vector.broadcast %cst_79 : f32 to vector<5x1xf32>
      %163 = arith.mulf %161, %162 : vector<5x1xf32>
      %164 = arith.mulf %157, %157 : vector<5x128xf32>
      %cst_80 = arith.constant dense<0.000000e+00> : vector<5xf32>
      %165 = vector.multi_reduction <add>, %164, %cst_80 [1] : vector<5x128xf32> to vector<5xf32>
      %166 = vector.shape_cast %165 : vector<5xf32> to vector<5x1xf32>
      %cst_81 = arith.constant 0.020833334 : f32
      %167 = vector.broadcast %cst_81 : f32 to vector<5x1xf32>
      %168 = arith.mulf %166, %167 : vector<5x1xf32>
      %169 = arith.mulf %163, %163 : vector<5x1xf32>
      %170 = arith.subf %168, %169 : vector<5x1xf32>
      %171 = vector.broadcast %163 : vector<5x1xf32> to vector<5x128xf32>
      %172 = arith.subf %157, %171 : vector<5x128xf32>
      %cst_82 = arith.constant 9.99999974E-6 : f32
      %173 = vector.broadcast %cst_82 : f32 to vector<5x1xf32>
      %174 = arith.addf %170, %173 : vector<5x1xf32>
      %175 = math.rsqrt %174 : vector<5x1xf32>
      %176 = vector.broadcast %175 : vector<5x1xf32> to vector<5x128xf32>
      %177 = arith.mulf %172, %176 : vector<5x128xf32>
      %178 = vector.broadcast %158 : vector<1x128xf32> to vector<5x128xf32>
      %179 = arith.mulf %177, %178 : vector<5x128xf32>
      %180 = vector.broadcast %159 : vector<1x128xf32> to vector<5x128xf32>
      %181 = arith.addf %179, %180 : vector<5x128xf32>
      %c0_83 = arith.constant 0 : index
      %c0_84 = arith.constant 0 : index
      %c0_85 = arith.constant 0 : index
      %182 = vector.load %arg16[%c0_83, %c0_84, %c0_85] : memref<1x5x128xf32, #tpu.memory_space<vmem>>, vector<1x5x128xf32>
      %183 = vector.shape_cast %182 : vector<1x5x128xf32> to vector<5x128xf32>
      %184 = vector.shape_cast %181 : vector<5x128xf32> to vector<1x5x128xf32>
      tpu.vector_store %arg16[%c0_83, %c0_84, %c0_85], %184 {strides = array<i32>} : memref<1x5x128xf32, #tpu.memory_space<vmem>>, vector<1x5x128xf32>,
    } else {
    }
    return
  }
  func.func @transform_0(%arg0: i32, %arg1: i32) -> (i32, i32, i32) {
    %c0_i32 = arith.constant 0 : i32
    %c0_i32_0 = arith.constant 0 : i32
    %c0_i32_1 = arith.constant 0 : i32
    return %arg0, %c0_i32, %c0_i32_0 : i32, i32, i32
  }
  func.func @transform_1(%arg0: i32, %arg1: i32) -> (i32, i32, i32) {
    %c0_i32 = arith.constant 0 : i32
    %c0_i32_0 = arith.constant 0 : i32
    %c0_i32_1 = arith.constant 0 : i32
    return %arg1, %c0_i32, %c0_i32_0 : i32, i32, i32
  }
  func.func @transform_2(%arg0: i32, %arg1: i32) -> (i32, i32, i32) {
    %c0_i32 = arith.constant 0 : i32
    %c0_i32_0 = arith.constant 0 : i32
    %c0_i32_1 = arith.constant 0 : i32
    return %arg1, %c0_i32, %c0_i32_0 : i32, i32, i32
  }
  func.func @transform_3(%arg0: i32, %arg1: i32) -> (i32, i32, i32) {
    %c0_i32 = arith.constant 0 : i32
    %c0_i32_0 = arith.constant 0 : i32
    %c0_i32_1 = arith.constant 0 : i32
    return %arg1, %c0_i32, %c0_i32_0 : i32, i32, i32
  }
  func.func @transform_4(%arg0: i32, %arg1: i32) -> (i32, i32, i32) {
    %c0_i32 = arith.constant 0 : i32
    %c0_i32_0 = arith.constant 0 : i32
    %c0_i32_1 = arith.constant 0 : i32
    return %arg1, %c0_i32, %c0_i32_0 : i32, i32, i32
  }
  func.func @transform_5(%arg0: i32, %arg1: i32) -> (i32, i32, i32) {
    %c0_i32 = arith.constant 0 : i32
    %c0_i32_0 = arith.constant 0 : i32
    %c0_i32_1 = arith.constant 0 : i32
    return %arg1, %c0_i32, %c0_i32_0 : i32, i32, i32
  }
  func.func @transform_6(%arg0: i32, %arg1: i32) -> (i32, i32, i32) {
    %c0_i32 = arith.constant 0 : i32
    %c0_i32_0 = arith.constant 0 : i32
    %c0_i32_1 = arith.constant 0 : i32
    return %arg1, %c0_i32, %c0_i32_0 : i32, i32, i32
  }
  func.func @transform_7(%arg0: i32, %arg1: i32) -> (i32, i32, i32) {
    %c0_i32 = arith.constant 0 : i32
    %c0_i32_0 = arith.constant 0 : i32
    %c0_i32_1 = arith.constant 0 : i32
    return %arg1, %c0_i32, %c0_i32_0 : i32, i32, i32
  }
  func.func @transform_8(%arg0: i32, %arg1: i32) -> (i32, i32, i32) {
    %c0_i32 = arith.constant 0 : i32
    %c0_i32_0 = arith.constant 0 : i32
    %c0_i32_1 = arith.constant 0 : i32
    return %arg1, %c0_i32, %c0_i32_0 : i32, i32, i32
  }
  func.func @transform_9(%arg0: i32, %arg1: i32) -> (i32, i32, i32) {
    %c0_i32 = arith.constant 0 : i32
    %c0_i32_0 = arith.constant 0 : i32
    %c0_i32_1 = arith.constant 0 : i32
    return %arg1, %c0_i32, %c0_i32_0 : i32, i32, i32
  }
  func.func @transform_10(%arg0: i32, %arg1: i32) -> (i32, i32, i32) {
    %c0_i32 = arith.constant 0 : i32
    %c0_i32_0 = arith.constant 0 : i32
    %c0_i32_1 = arith.constant 0 : i32
    return %arg1, %c0_i32, %c0_i32_0 : i32, i32, i32
  }
  func.func @transform_11(%arg0: i32, %arg1: i32) -> (i32, i32, i32) {
    %c0_i32 = arith.constant 0 : i32
    %c0_i32_0 = arith.constant 0 : i32
    %c0_i32_1 = arith.constant 0 : i32
    return %arg1, %c0_i32, %c0_i32_0 : i32, i32, i32
  }
  func.func @transform_12(%arg0: i32, %arg1: i32) -> (i32, i32) {
    %c0_i32 = arith.constant 0 : i32
    %c0_i32_0 = arith.constant 0 : i32
    %c0_i32_1 = arith.constant 0 : i32
    return %c0_i32, %c0_i32_0 : i32, i32
  }
  func.func @transform_13(%arg0: i32, %arg1: i32) -> (i32, i32) {
    %c0_i32 = arith.constant 0 : i32
    %c0_i32_0 = arith.constant 0 : i32
    %c0_i32_1 = arith.constant 0 : i32
    return %c0_i32, %c0_i32_0 : i32, i32
  }
  func.func @transform_14(%arg0: i32, %arg1: i32) -> (i32, i32, i32) {
    %c0_i32 = arith.constant 0 : i32
    %c0_i32_0 = arith.constant 0 : i32
    %c0_i32_1 = arith.constant 0 : i32
    return %arg0, %c0_i32, %c0_i32_0 : i32, i32, i32
  }
}

module attributes {stable_mosaic.version = 11 : i64} {
  func.func @_stack_head_kernel(%arg0: i32, %arg1: i32, %arg2: memref<1x17x128xf32, #tpu.memory_space<vmem>>, %arg3: memref<1x1x128xf32, #tpu.memory_space<vmem>>, %arg4: memref<1x1x128xf32, #tpu.memory_space<vmem>>, %arg5: memref<1x128x384xf32, #tpu.memory_space<vmem>>, %arg6: memref<1x48x128xf32, #tpu.memory_space<vmem>>, %arg7: memref<1x1x128xf32, #tpu.memory_space<vmem>>, %arg8: memref<1x1x128xf32, #tpu.memory_space<vmem>>, %arg9: memref<1x1x128xf32, #tpu.memory_space<vmem>>, %arg10: memref<1x128x256xf32, #tpu.memory_space<vmem>>, %arg11: memref<1x1x256xf32, #tpu.memory_space<vmem>>, %arg12: memref<1x256x128xf32, #tpu.memory_space<vmem>>, %arg13: memref<1x1x128xf32, #tpu.memory_space<vmem>>, %arg14: memref<128x128xf32, #tpu.memory_space<vmem>>, %arg15: memref<1x128xf32, #tpu.memory_space<vmem>>, %arg16: memref<1x17x128xf32, #tpu.memory_space<vmem>>, %arg17: memref<17x128xf32, #tpu.memory_space<vmem>>) attributes {dimension_semantics = [#tpu.dimension_semantics<parallel>, #tpu.dimension_semantics<arbitrary>], iteration_bounds = array<i64: 2, 2>, scalar_prefetch = 0 : i64, scratch_operands = 1 : i64, tpu.core_type = #tpu.core_type<tc>, window_params = [{transform_indices = @transform_0, window_bounds = array<i64: 1, 17, 128>}, {transform_indices = @transform_1, window_bounds = array<i64: 1, 1, 128>}, {transform_indices = @transform_2, window_bounds = array<i64: 1, 1, 128>}, {transform_indices = @transform_3, window_bounds = array<i64: 1, 128, 384>}, {transform_indices = @transform_4, window_bounds = array<i64: 1, 48, 128>}, {transform_indices = @transform_5, window_bounds = array<i64: 1, 1, 128>}, {transform_indices = @transform_6, window_bounds = array<i64: 1, 1, 128>}, {transform_indices = @transform_7, window_bounds = array<i64: 1, 1, 128>}, {transform_indices = @transform_8, window_bounds = array<i64: 1, 128, 256>}, {transform_indices = @transform_9, window_bounds = array<i64: 1, 1, 256>}, {transform_indices = @transform_10, window_bounds = array<i64: 1, 256, 128>}, {transform_indices = @transform_11, window_bounds = array<i64: 1, 1, 128>}, {pipeline_mode = #tpu.pipeline_mode<synchronous>, transform_indices = @transform_12, window_bounds = array<i64: 128, 128>}, {pipeline_mode = #tpu.pipeline_mode<synchronous>, transform_indices = @transform_13, window_bounds = array<i64: 1, 128>}, {transform_indices = @transform_14, window_bounds = array<i64: 1, 17, 128>}]} {
    %c0_i32 = arith.constant 0 : i32
    %0 = arith.cmpi eq, %arg1, %c0_i32 : i32
    %1 = arith.extui %0 : i1 to i32
    %c0_i32_0 = arith.constant 0 : i32
    %2 = arith.cmpi ne, %1, %c0_i32_0 : i32
    scf.if %2 {
      %c0_72 = arith.constant 0 : index
      %c0_73 = arith.constant 0 : index
      %c0_74 = arith.constant 0 : index
      %157 = vector.load %arg2[%c0_72, %c0_73, %c0_74] : memref<1x17x128xf32, #tpu.memory_space<vmem>>, vector<1x17x128xf32>
      %158 = vector.shape_cast %157 : vector<1x17x128xf32> to vector<17x128xf32>
      %c0_75 = arith.constant 0 : index
      %c0_76 = arith.constant 0 : index
      %159 = vector.load %arg17[%c0_75, %c0_76] : memref<17x128xf32, #tpu.memory_space<vmem>>, vector<17x128xf32>
      tpu.vector_store %arg17[%c0_75, %c0_76], %158 {strides = array<i32>} : memref<17x128xf32, #tpu.memory_space<vmem>>, vector<17x128xf32>,
    } else {
    }
    %c0 = arith.constant 0 : index
    %c0_1 = arith.constant 0 : index
    %3 = vector.load %arg17[%c0, %c0_1] : memref<17x128xf32, #tpu.memory_space<vmem>>, vector<17x128xf32>
    %c0_2 = arith.constant 0 : index
    %c0_3 = arith.constant 0 : index
    %c0_4 = arith.constant 0 : index
    %4 = vector.load %arg3[%c0_2, %c0_3, %c0_4] : memref<1x1x128xf32, #tpu.memory_space<vmem>>, vector<1x1x128xf32>
    %5 = vector.shape_cast %4 : vector<1x1x128xf32> to vector<1x128xf32>
    %c0_5 = arith.constant 0 : index
    %c0_6 = arith.constant 0 : index
    %c0_7 = arith.constant 0 : index
    %6 = vector.load %arg4[%c0_5, %c0_6, %c0_7] : memref<1x1x128xf32, #tpu.memory_space<vmem>>, vector<1x1x128xf32>
    %7 = vector.shape_cast %6 : vector<1x1x128xf32> to vector<1x128xf32>
    %c0_8 = arith.constant 0 : index
    %c0_9 = arith.constant 0 : index
    %c0_10 = arith.constant 0 : index
    %8 = vector.load %arg5[%c0_8, %c0_9, %c0_10] : memref<1x128x384xf32, #tpu.memory_space<vmem>>, vector<1x128x384xf32>
    %9 = vector.shape_cast %8 : vector<1x128x384xf32> to vector<128x384xf32>
    %c0_11 = arith.constant 0 : index
    %c0_12 = arith.constant 0 : index
    %c0_13 = arith.constant 0 : index
    %10 = vector.load %arg6[%c0_11, %c0_12, %c0_13] : memref<1x48x128xf32, #tpu.memory_space<vmem>>, vector<1x48x128xf32>
    %11 = vector.shape_cast %10 : vector<1x48x128xf32> to vector<48x128xf32>
    %c0_14 = arith.constant 0 : index
    %c0_15 = arith.constant 0 : index
    %c0_16 = arith.constant 0 : index
    %12 = vector.load %arg7[%c0_14, %c0_15, %c0_16] : memref<1x1x128xf32, #tpu.memory_space<vmem>>, vector<1x1x128xf32>
    %13 = vector.shape_cast %12 : vector<1x1x128xf32> to vector<1x128xf32>
    %c0_17 = arith.constant 0 : index
    %c0_18 = arith.constant 0 : index
    %c0_19 = arith.constant 0 : index
    %14 = vector.load %arg8[%c0_17, %c0_18, %c0_19] : memref<1x1x128xf32, #tpu.memory_space<vmem>>, vector<1x1x128xf32>
    %15 = vector.shape_cast %14 : vector<1x1x128xf32> to vector<1x128xf32>
    %c0_20 = arith.constant 0 : index
    %c0_21 = arith.constant 0 : index
    %c0_22 = arith.constant 0 : index
    %16 = vector.load %arg9[%c0_20, %c0_21, %c0_22] : memref<1x1x128xf32, #tpu.memory_space<vmem>>, vector<1x1x128xf32>
    %17 = vector.shape_cast %16 : vector<1x1x128xf32> to vector<1x128xf32>
    %c0_23 = arith.constant 0 : index
    %c0_24 = arith.constant 0 : index
    %c0_25 = arith.constant 0 : index
    %18 = vector.load %arg10[%c0_23, %c0_24, %c0_25] : memref<1x128x256xf32, #tpu.memory_space<vmem>>, vector<1x128x256xf32>
    %19 = vector.shape_cast %18 : vector<1x128x256xf32> to vector<128x256xf32>
    %c0_26 = arith.constant 0 : index
    %c0_27 = arith.constant 0 : index
    %c0_28 = arith.constant 0 : index
    %20 = vector.load %arg11[%c0_26, %c0_27, %c0_28] : memref<1x1x256xf32, #tpu.memory_space<vmem>>, vector<1x1x256xf32>
    %21 = vector.shape_cast %20 : vector<1x1x256xf32> to vector<1x256xf32>
    %c0_29 = arith.constant 0 : index
    %c0_30 = arith.constant 0 : index
    %c0_31 = arith.constant 0 : index
    %22 = vector.load %arg12[%c0_29, %c0_30, %c0_31] : memref<1x256x128xf32, #tpu.memory_space<vmem>>, vector<1x256x128xf32>
    %23 = vector.shape_cast %22 : vector<1x256x128xf32> to vector<256x128xf32>
    %c0_32 = arith.constant 0 : index
    %c0_33 = arith.constant 0 : index
    %c0_34 = arith.constant 0 : index
    %24 = vector.load %arg13[%c0_32, %c0_33, %c0_34] : memref<1x1x128xf32, #tpu.memory_space<vmem>>, vector<1x1x128xf32>
    %25 = vector.shape_cast %24 : vector<1x1x128xf32> to vector<1x128xf32>
    %cst = arith.constant dense<0.000000e+00> : vector<17xf32>
    %26 = vector.multi_reduction <add>, %3, %cst [1] : vector<17x128xf32> to vector<17xf32>
    %27 = vector.shape_cast %26 : vector<17xf32> to vector<17x1xf32>
    %cst_35 = arith.constant 0.020833334 : f32
    %28 = vector.broadcast %cst_35 : f32 to vector<17x1xf32>
    %29 = arith.mulf %27, %28 : vector<17x1xf32>
    %30 = arith.mulf %3, %3 : vector<17x128xf32>
    %cst_36 = arith.constant dense<0.000000e+00> : vector<17xf32>
    %31 = vector.multi_reduction <add>, %30, %cst_36 [1] : vector<17x128xf32> to vector<17xf32>
    %32 = vector.shape_cast %31 : vector<17xf32> to vector<17x1xf32>
    %cst_37 = arith.constant 0.020833334 : f32
    %33 = vector.broadcast %cst_37 : f32 to vector<17x1xf32>
    %34 = arith.mulf %32, %33 : vector<17x1xf32>
    %35 = arith.mulf %29, %29 : vector<17x1xf32>
    %36 = arith.subf %34, %35 : vector<17x1xf32>
    %37 = vector.broadcast %29 : vector<17x1xf32> to vector<17x128xf32>
    %38 = arith.subf %3, %37 : vector<17x128xf32>
    %cst_38 = arith.constant 9.99999974E-6 : f32
    %39 = vector.broadcast %cst_38 : f32 to vector<17x1xf32>
    %40 = arith.addf %36, %39 : vector<17x1xf32>
    %41 = math.rsqrt %40 : vector<17x1xf32>
    %42 = vector.broadcast %41 : vector<17x1xf32> to vector<17x128xf32>
    %43 = arith.mulf %38, %42 : vector<17x128xf32>
    %44 = vector.broadcast %5 : vector<1x128xf32> to vector<17x128xf32>
    %45 = arith.mulf %43, %44 : vector<17x128xf32>
    %46 = vector.broadcast %7 : vector<1x128xf32> to vector<17x128xf32>
    %47 = arith.addf %45, %46 : vector<17x128xf32>
    %cst_39 = arith.constant dense<0.000000e+00> : vector<17x384xf32>
    %48 = tpu.matmul %47, %9, %cst_39 {dimension_numbers = #tpu.dot_dimension_numbers<[1], [0], [0], [1], [0, 0, 1, 1], [], []>} : vector<17x128xf32>, vector<128x384xf32>, vector<17x384xf32> -> vector<17x384xf32>
    %49 = vector.extract_strided_slice %48 {offsets = [0, 0], sizes = [17, 16], strides = [1, 1]} : vector<17x384xf32> to vector<17x16xf32>
    %50 = vector.extract_strided_slice %48 {offsets = [0, 128], sizes = [17, 16], strides = [1, 1]} : vector<17x384xf32> to vector<17x16xf32>
    %51 = vector.extract_strided_slice %48 {offsets = [0, 256], sizes = [17, 16], strides = [1, 1]} : vector<17x384xf32> to vector<17x16xf32>
    %cst_40 = arith.constant dense<0.000000e+00> : vector<17x17xf32>
    %52 = tpu.matmul %49, %50, %cst_40 {dimension_numbers = #tpu.dot_dimension_numbers<[1], [1], [0], [0], [0, 0, 1, 0], [], []>} : vector<17x16xf32>, vector<17x16xf32>, vector<17x17xf32> -> vector<17x17xf32>
    %cst_41 = arith.constant 2.500000e-01 : f32
    %53 = vector.broadcast %cst_41 : f32 to vector<17x17xf32>
    %54 = arith.mulf %52, %53 : vector<17x17xf32>
    %cst_42 = arith.constant dense<0xFF800000> : vector<17xf32>
    %55 = vector.multi_reduction <maximumf>, %54, %cst_42 [1] : vector<17x17xf32> to vector<17xf32>
    %56 = vector.shape_cast %55 : vector<17xf32> to vector<17x1xf32>
    %57 = vector.broadcast %56 : vector<17x1xf32> to vector<17x17xf32>
    %58 = arith.subf %54, %57 : vector<17x17xf32>
    %59 = math.exp %58 : vector<17x17xf32>
    %cst_43 = arith.constant dense<0.000000e+00> : vector<17xf32>
    %60 = vector.multi_reduction <add>, %59, %cst_43 [1] : vector<17x17xf32> to vector<17xf32>
    %61 = vector.shape_cast %60 : vector<17xf32> to vector<17x1xf32>
    %62 = tpu.reciprocal %61 {approx = true} : vector<17x1xf32> -> vector<17x1xf32>
    %63 = vector.broadcast %62 : vector<17x1xf32> to vector<17x17xf32>
    %64 = arith.mulf %59, %63 : vector<17x17xf32>
    %cst_44 = arith.constant dense<0.000000e+00> : vector<17x16xf32>
    %65 = tpu.matmul %64, %51, %cst_44 {dimension_numbers = #tpu.dot_dimension_numbers<[1], [0], [0], [1], [0, 0, 1, 1], [], []>} : vector<17x17xf32>, vector<17x16xf32>, vector<17x16xf32> -> vector<17x16xf32>
    %66 = vector.extract_strided_slice %11 {offsets = [0, 0], sizes = [16, 128], strides = [1, 1]} : vector<48x128xf32> to vector<16x128xf32>
    %cst_45 = arith.constant dense<0.000000e+00> : vector<17x128xf32>
    %67 = tpu.matmul %65, %66, %cst_45 {dimension_numbers = #tpu.dot_dimension_numbers<[1], [0], [0], [1], [0, 0, 1, 1], [], []>} : vector<17x16xf32>, vector<16x128xf32>, vector<17x128xf32> -> vector<17x128xf32>
    %68 = vector.extract_strided_slice %48 {offsets = [0, 16], sizes = [17, 16], strides = [1, 1]} : vector<17x384xf32> to vector<17x16xf32>
    %69 = vector.extract_strided_slice %48 {offsets = [0, 144], sizes = [17, 16], strides = [1, 1]} : vector<17x384xf32> to vector<17x16xf32>
    %70 = vector.extract_strided_slice %48 {offsets = [0, 272], sizes = [17, 16], strides = [1, 1]} : vector<17x384xf32> to vector<17x16xf32>
    %cst_46 = arith.constant dense<0.000000e+00> : vector<17x17xf32>
    %71 = tpu.matmul %68, %69, %cst_46 {dimension_numbers = #tpu.dot_dimension_numbers<[1], [1], [0], [0], [0, 0, 1, 0], [], []>} : vector<17x16xf32>, vector<17x16xf32>, vector<17x17xf32> -> vector<17x17xf32>
    %cst_47 = arith.constant 2.500000e-01 : f32
    %72 = vector.broadcast %cst_47 : f32 to vector<17x17xf32>
    %73 = arith.mulf %71, %72 : vector<17x17xf32>
    %cst_48 = arith.constant dense<0xFF800000> : vector<17xf32>
    %74 = vector.multi_reduction <maximumf>, %73, %cst_48 [1] : vector<17x17xf32> to vector<17xf32>
    %75 = vector.shape_cast %74 : vector<17xf32> to vector<17x1xf32>
    %76 = vector.broadcast %75 : vector<17x1xf32> to vector<17x17xf32>
    %77 = arith.subf %73, %76 : vector<17x17xf32>
    %78 = math.exp %77 : vector<17x17xf32>
    %cst_49 = arith.constant dense<0.000000e+00> : vector<17xf32>
    %79 = vector.multi_reduction <add>, %78, %cst_49 [1] : vector<17x17xf32> to vector<17xf32>
    %80 = vector.shape_cast %79 : vector<17xf32> to vector<17x1xf32>
    %81 = tpu.reciprocal %80 {approx = true} : vector<17x1xf32> -> vector<17x1xf32>
    %82 = vector.broadcast %81 : vector<17x1xf32> to vector<17x17xf32>
    %83 = arith.mulf %78, %82 : vector<17x17xf32>
    %cst_50 = arith.constant dense<0.000000e+00> : vector<17x16xf32>
    %84 = tpu.matmul %83, %70, %cst_50 {dimension_numbers = #tpu.dot_dimension_numbers<[1], [0], [0], [1], [0, 0, 1, 1], [], []>} : vector<17x17xf32>, vector<17x16xf32>, vector<17x16xf32> -> vector<17x16xf32>
    %85 = vector.extract_strided_slice %11 {offsets = [16, 0], sizes = [16, 128], strides = [1, 1]} : vector<48x128xf32> to vector<16x128xf32>
    %cst_51 = arith.constant dense<0.000000e+00> : vector<17x128xf32>
    %86 = tpu.matmul %84, %85, %cst_51 {dimension_numbers = #tpu.dot_dimension_numbers<[1], [0], [0], [1], [0, 0, 1, 1], [], []>} : vector<17x16xf32>, vector<16x128xf32>, vector<17x128xf32> -> vector<17x128xf32>
    %87 = arith.addf %67, %86 : vector<17x128xf32>
    %88 = vector.extract_strided_slice %48 {offsets = [0, 32], sizes = [17, 16], strides = [1, 1]} : vector<17x384xf32> to vector<17x16xf32>
    %89 = vector.extract_strided_slice %48 {offsets = [0, 160], sizes = [17, 16], strides = [1, 1]} : vector<17x384xf32> to vector<17x16xf32>
    %90 = vector.extract_strided_slice %48 {offsets = [0, 288], sizes = [17, 16], strides = [1, 1]} : vector<17x384xf32> to vector<17x16xf32>
    %cst_52 = arith.constant dense<0.000000e+00> : vector<17x17xf32>
    %91 = tpu.matmul %88, %89, %cst_52 {dimension_numbers = #tpu.dot_dimension_numbers<[1], [1], [0], [0], [0, 0, 1, 0], [], []>} : vector<17x16xf32>, vector<17x16xf32>, vector<17x17xf32> -> vector<17x17xf32>
    %cst_53 = arith.constant 2.500000e-01 : f32
    %92 = vector.broadcast %cst_53 : f32 to vector<17x17xf32>
    %93 = arith.mulf %91, %92 : vector<17x17xf32>
    %cst_54 = arith.constant dense<0xFF800000> : vector<17xf32>
    %94 = vector.multi_reduction <maximumf>, %93, %cst_54 [1] : vector<17x17xf32> to vector<17xf32>
    %95 = vector.shape_cast %94 : vector<17xf32> to vector<17x1xf32>
    %96 = vector.broadcast %95 : vector<17x1xf32> to vector<17x17xf32>
    %97 = arith.subf %93, %96 : vector<17x17xf32>
    %98 = math.exp %97 : vector<17x17xf32>
    %cst_55 = arith.constant dense<0.000000e+00> : vector<17xf32>
    %99 = vector.multi_reduction <add>, %98, %cst_55 [1] : vector<17x17xf32> to vector<17xf32>
    %100 = vector.shape_cast %99 : vector<17xf32> to vector<17x1xf32>
    %101 = tpu.reciprocal %100 {approx = true} : vector<17x1xf32> -> vector<17x1xf32>
    %102 = vector.broadcast %101 : vector<17x1xf32> to vector<17x17xf32>
    %103 = arith.mulf %98, %102 : vector<17x17xf32>
    %cst_56 = arith.constant dense<0.000000e+00> : vector<17x16xf32>
    %104 = tpu.matmul %103, %90, %cst_56 {dimension_numbers = #tpu.dot_dimension_numbers<[1], [0], [0], [1], [0, 0, 1, 1], [], []>} : vector<17x17xf32>, vector<17x16xf32>, vector<17x16xf32> -> vector<17x16xf32>
    %105 = vector.extract_strided_slice %11 {offsets = [32, 0], sizes = [16, 128], strides = [1, 1]} : vector<48x128xf32> to vector<16x128xf32>
    %cst_57 = arith.constant dense<0.000000e+00> : vector<17x128xf32>
    %106 = tpu.matmul %104, %105, %cst_57 {dimension_numbers = #tpu.dot_dimension_numbers<[1], [0], [0], [1], [0, 0, 1, 1], [], []>} : vector<17x16xf32>, vector<16x128xf32>, vector<17x128xf32> -> vector<17x128xf32>
    %107 = arith.addf %87, %106 : vector<17x128xf32>
    %108 = arith.addf %3, %107 : vector<17x128xf32>
    %109 = vector.broadcast %13 : vector<1x128xf32> to vector<17x128xf32>
    %110 = arith.addf %108, %109 : vector<17x128xf32>
    %cst_58 = arith.constant dense<0.000000e+00> : vector<17xf32>
    %111 = vector.multi_reduction <add>, %110, %cst_58 [1] : vector<17x128xf32> to vector<17xf32>
    %112 = vector.shape_cast %111 : vector<17xf32> to vector<17x1xf32>
    %cst_59 = arith.constant 0.020833334 : f32
    %113 = vector.broadcast %cst_59 : f32 to vector<17x1xf32>
    %114 = arith.mulf %112, %113 : vector<17x1xf32>
    %115 = arith.mulf %110, %110 : vector<17x128xf32>
    %cst_60 = arith.constant dense<0.000000e+00> : vector<17xf32>
    %116 = vector.multi_reduction <add>, %115, %cst_60 [1] : vector<17x128xf32> to vector<17xf32>
    %117 = vector.shape_cast %116 : vector<17xf32> to vector<17x1xf32>
    %cst_61 = arith.constant 0.020833334 : f32
    %118 = vector.broadcast %cst_61 : f32 to vector<17x1xf32>
    %119 = arith.mulf %117, %118 : vector<17x1xf32>
    %120 = arith.mulf %114, %114 : vector<17x1xf32>
    %121 = arith.subf %119, %120 : vector<17x1xf32>
    %122 = vector.broadcast %114 : vector<17x1xf32> to vector<17x128xf32>
    %123 = arith.subf %110, %122 : vector<17x128xf32>
    %cst_62 = arith.constant 9.99999974E-6 : f32
    %124 = vector.broadcast %cst_62 : f32 to vector<17x1xf32>
    %125 = arith.addf %121, %124 : vector<17x1xf32>
    %126 = math.rsqrt %125 : vector<17x1xf32>
    %127 = vector.broadcast %126 : vector<17x1xf32> to vector<17x128xf32>
    %128 = arith.mulf %123, %127 : vector<17x128xf32>
    %129 = vector.broadcast %15 : vector<1x128xf32> to vector<17x128xf32>
    %130 = arith.mulf %128, %129 : vector<17x128xf32>
    %131 = vector.broadcast %17 : vector<1x128xf32> to vector<17x128xf32>
    %132 = arith.addf %130, %131 : vector<17x128xf32>
    %cst_63 = arith.constant dense<0.000000e+00> : vector<17x256xf32>
    %133 = tpu.matmul %132, %19, %cst_63 {dimension_numbers = #tpu.dot_dimension_numbers<[1], [0], [0], [1], [0, 0, 1, 1], [], []>} : vector<17x128xf32>, vector<128x256xf32>, vector<17x256xf32> -> vector<17x256xf32>
    %134 = vector.broadcast %21 : vector<1x256xf32> to vector<17x256xf32>
    %135 = arith.addf %133, %134 : vector<17x256xf32>
    %cst_64 = arith.constant 5.000000e-01 : f32
    %136 = vector.broadcast %cst_64 : f32 to vector<17x256xf32>
    %137 = arith.mulf %136, %135 : vector<17x256xf32>
    %cst_65 = arith.constant 4.471500e-02 : f32
    %138 = vector.broadcast %cst_65 : f32 to vector<17x256xf32>
    %139 = arith.mulf %138, %135 : vector<17x256xf32>
    %140 = arith.mulf %139, %135 : vector<17x256xf32>
    %141 = arith.mulf %140, %135 : vector<17x256xf32>
    %142 = arith.addf %135, %141 : vector<17x256xf32>
    %cst_66 = arith.constant 0.797884583 : f32
    %143 = vector.broadcast %cst_66 : f32 to vector<17x256xf32>
    %144 = arith.mulf %143, %142 : vector<17x256xf32>
    %145 = math.tanh %144 : vector<17x256xf32>
    %cst_67 = arith.constant 1.000000e+00 : f32
    %146 = vector.broadcast %cst_67 : f32 to vector<17x256xf32>
    %147 = arith.addf %146, %145 : vector<17x256xf32>
    %148 = arith.mulf %137, %147 : vector<17x256xf32>
    %cst_68 = arith.constant dense<0.000000e+00> : vector<17x128xf32>
    %149 = tpu.matmul %148, %23, %cst_68 {dimension_numbers = #tpu.dot_dimension_numbers<[1], [0], [0], [1], [0, 0, 1, 1], [], []>} : vector<17x256xf32>, vector<256x128xf32>, vector<17x128xf32> -> vector<17x128xf32>
    %150 = arith.addf %110, %149 : vector<17x128xf32>
    %151 = vector.broadcast %25 : vector<1x128xf32> to vector<17x128xf32>
    %152 = arith.addf %150, %151 : vector<17x128xf32>
    %c0_69 = arith.constant 0 : index
    %c0_70 = arith.constant 0 : index
    %153 = vector.load %arg17[%c0_69, %c0_70] : memref<17x128xf32, #tpu.memory_space<vmem>>, vector<17x128xf32>
    tpu.vector_store %arg17[%c0_69, %c0_70], %152 {strides = array<i32>} : memref<17x128xf32, #tpu.memory_space<vmem>>, vector<17x128xf32>,
    %c1_i32 = arith.constant 1 : i32
    %154 = arith.cmpi eq, %arg1, %c1_i32 : i32
    %155 = arith.extui %154 : i1 to i32
    %c0_i32_71 = arith.constant 0 : i32
    %156 = arith.cmpi ne, %155, %c0_i32_71 : i32
    scf.if %156 {
      %c0_72 = arith.constant 0 : index
      %c0_73 = arith.constant 0 : index
      %157 = vector.load %arg17[%c0_72, %c0_73] : memref<17x128xf32, #tpu.memory_space<vmem>>, vector<17x128xf32>
      %c0_74 = arith.constant 0 : index
      %c0_75 = arith.constant 0 : index
      %158 = vector.load %arg14[%c0_74, %c0_75] : memref<128x128xf32, #tpu.memory_space<vmem>>, vector<128x128xf32>
      %cst_76 = arith.constant dense<0.000000e+00> : vector<17x128xf32>
      %159 = tpu.matmul %157, %158, %cst_76 {dimension_numbers = #tpu.dot_dimension_numbers<[1], [0], [0], [1], [0, 0, 1, 1], [], []>} : vector<17x128xf32>, vector<128x128xf32>, vector<17x128xf32> -> vector<17x128xf32>
      %c0_77 = arith.constant 0 : index
      %c0_78 = arith.constant 0 : index
      %160 = vector.load %arg15[%c0_77, %c0_78] : memref<1x128xf32, #tpu.memory_space<vmem>>, vector<1x128xf32>
      %161 = vector.broadcast %160 : vector<1x128xf32> to vector<17x128xf32>
      %162 = arith.addf %159, %161 : vector<17x128xf32>
      %c0_79 = arith.constant 0 : index
      %c0_80 = arith.constant 0 : index
      %c0_81 = arith.constant 0 : index
      %163 = vector.load %arg16[%c0_79, %c0_80, %c0_81] : memref<1x17x128xf32, #tpu.memory_space<vmem>>, vector<1x17x128xf32>
      %164 = vector.shape_cast %163 : vector<1x17x128xf32> to vector<17x128xf32>
      %165 = vector.shape_cast %162 : vector<17x128xf32> to vector<1x17x128xf32>
      tpu.vector_store %arg16[%c0_79, %c0_80, %c0_81], %165 {strides = array<i32>} : memref<1x17x128xf32, #tpu.memory_space<vmem>>, vector<1x17x128xf32>,
    } else {
    }
    return
  }
  func.func @transform_0(%arg0: i32, %arg1: i32) -> (i32, i32, i32) {
    %c0_i32 = arith.constant 0 : i32
    %c0_i32_0 = arith.constant 0 : i32
    %c0_i32_1 = arith.constant 0 : i32
    return %arg0, %c0_i32, %c0_i32_0 : i32, i32, i32
  }
  func.func @transform_1(%arg0: i32, %arg1: i32) -> (i32, i32, i32) {
    %c0_i32 = arith.constant 0 : i32
    %c0_i32_0 = arith.constant 0 : i32
    %c0_i32_1 = arith.constant 0 : i32
    return %arg1, %c0_i32, %c0_i32_0 : i32, i32, i32
  }
  func.func @transform_2(%arg0: i32, %arg1: i32) -> (i32, i32, i32) {
    %c0_i32 = arith.constant 0 : i32
    %c0_i32_0 = arith.constant 0 : i32
    %c0_i32_1 = arith.constant 0 : i32
    return %arg1, %c0_i32, %c0_i32_0 : i32, i32, i32
  }
  func.func @transform_3(%arg0: i32, %arg1: i32) -> (i32, i32, i32) {
    %c0_i32 = arith.constant 0 : i32
    %c0_i32_0 = arith.constant 0 : i32
    %c0_i32_1 = arith.constant 0 : i32
    return %arg1, %c0_i32, %c0_i32_0 : i32, i32, i32
  }
  func.func @transform_4(%arg0: i32, %arg1: i32) -> (i32, i32, i32) {
    %c0_i32 = arith.constant 0 : i32
    %c0_i32_0 = arith.constant 0 : i32
    %c0_i32_1 = arith.constant 0 : i32
    return %arg1, %c0_i32, %c0_i32_0 : i32, i32, i32
  }
  func.func @transform_5(%arg0: i32, %arg1: i32) -> (i32, i32, i32) {
    %c0_i32 = arith.constant 0 : i32
    %c0_i32_0 = arith.constant 0 : i32
    %c0_i32_1 = arith.constant 0 : i32
    return %arg1, %c0_i32, %c0_i32_0 : i32, i32, i32
  }
  func.func @transform_6(%arg0: i32, %arg1: i32) -> (i32, i32, i32) {
    %c0_i32 = arith.constant 0 : i32
    %c0_i32_0 = arith.constant 0 : i32
    %c0_i32_1 = arith.constant 0 : i32
    return %arg1, %c0_i32, %c0_i32_0 : i32, i32, i32
  }
  func.func @transform_7(%arg0: i32, %arg1: i32) -> (i32, i32, i32) {
    %c0_i32 = arith.constant 0 : i32
    %c0_i32_0 = arith.constant 0 : i32
    %c0_i32_1 = arith.constant 0 : i32
    return %arg1, %c0_i32, %c0_i32_0 : i32, i32, i32
  }
  func.func @transform_8(%arg0: i32, %arg1: i32) -> (i32, i32, i32) {
    %c0_i32 = arith.constant 0 : i32
    %c0_i32_0 = arith.constant 0 : i32
    %c0_i32_1 = arith.constant 0 : i32
    return %arg1, %c0_i32, %c0_i32_0 : i32, i32, i32
  }
  func.func @transform_9(%arg0: i32, %arg1: i32) -> (i32, i32, i32) {
    %c0_i32 = arith.constant 0 : i32
    %c0_i32_0 = arith.constant 0 : i32
    %c0_i32_1 = arith.constant 0 : i32
    return %arg1, %c0_i32, %c0_i32_0 : i32, i32, i32
  }
  func.func @transform_10(%arg0: i32, %arg1: i32) -> (i32, i32, i32) {
    %c0_i32 = arith.constant 0 : i32
    %c0_i32_0 = arith.constant 0 : i32
    %c0_i32_1 = arith.constant 0 : i32
    return %arg1, %c0_i32, %c0_i32_0 : i32, i32, i32
  }
  func.func @transform_11(%arg0: i32, %arg1: i32) -> (i32, i32, i32) {
    %c0_i32 = arith.constant 0 : i32
    %c0_i32_0 = arith.constant 0 : i32
    %c0_i32_1 = arith.constant 0 : i32
    return %arg1, %c0_i32, %c0_i32_0 : i32, i32, i32
  }
  func.func @transform_12(%arg0: i32, %arg1: i32) -> (i32, i32) {
    %c0_i32 = arith.constant 0 : i32
    %c0_i32_0 = arith.constant 0 : i32
    %c0_i32_1 = arith.constant 0 : i32
    return %c0_i32, %c0_i32_0 : i32, i32
  }
  func.func @transform_13(%arg0: i32, %arg1: i32) -> (i32, i32) {
    %c0_i32 = arith.constant 0 : i32
    %c0_i32_0 = arith.constant 0 : i32
    %c0_i32_1 = arith.constant 0 : i32
    return %c0_i32, %c0_i32_0 : i32, i32
  }
  func.func @transform_14(%arg0: i32, %arg1: i32) -> (i32, i32, i32) {
    %c0_i32 = arith.constant 0 : i32
    %c0_i32_0 = arith.constant 0 : i32
    %c0_i32_1 = arith.constant 0 : i32
    return %arg0, %c0_i32, %c0_i32_0 : i32, i32, i32
  }
}

</mosaic_0001>

<llo_original>
// kernel: _lambda_.4
$region0: #{_lambda_.4}
  #allocation0 [shape = 'u32[]', space=smem, size = 0x4, offset = 0x4, fixed_abs, tag = 'smem constant byte address 0x4 - core index']
  #allocation1 [shape = 'u32[72,128]{1,0:T(1,128)}', space=vmem, size = 0x9000, scoped, tag = 'internal scratch']
  %s0 = inlined_call_operand.vmem [shape: f32[32,128], index: 0, kind: input, shape index: {}]
  %s1 = inlined_call_operand.vmem [shape: f32[128,128], index: 1, kind: input, shape index: {}]
  %s2 = inlined_call_operand.vmem [shape: f32[1,128], index: 2, kind: input, shape index: {}]
  %s3 = inlined_call_operand.vmem [shape: f32[32,128], index: 3, kind: output, shape index: {}]
  %s4 = sld [smem:[#allocation0]]
  $region22: #{_lambda_.4} parent=0
    _
  %s6 = ssub.s32 1, %s4
  %s7 = scalar_select 0, %s6, %s4
  // Predicated region
  $region2: #{_lambda_.4} parent=0 // pred_check
    _
  $region3: #{_lambda_.4} parent=0 // pred_check_branch
    %9 = sbr.rel (0) target = $region5
  $region4: #{_lambda_.4} parent=0 // pred_region
    _
  $region5: #{_lambda_.4} parent=0 // pred_fallthru
    _
  // Predicated region
  $region6: #{_lambda_.4} parent=0 // pred_check
    _
  $region7: #{_lambda_.4} parent=0 // pred_check_branch
    %11 = sbr.rel (0) target = $region9
  $region8: #{_lambda_.4} parent=0 // pred_region
    _
  $region9: #{_lambda_.4} parent=0 // pred_fallthru
    _
  // Predicated region
  $region10: #{_lambda_.4} parent=0 // pred_check
    _
  $region11: #{_lambda_.4} parent=0 // pred_check_branch
    %13 = sbr.rel (0) target = $region13
  $region12: #{_lambda_.4} parent=0 // pred_region
    _
  $region13: #{_lambda_.4} parent=0 // pred_fallthru
    _
  %v14 = vld [vmem:[%s0] sm:$0xff]
  %v15 = vld [vmem:[%s0 + $0x8] sm:$0xff]
  %v16 = vld [vmem:[%s0 + $0x10] sm:$0xff]
  %v17 = vld [vmem:[%s0 + $0x18] sm:$0xff]
  %v18 = vld [vmem:[%s1] sm:$0xff]
  %v19 = vld [vmem:[%s1 + $0x8] sm:$0xff]
  %v20 = vld [vmem:[%s1 + $0x10] sm:$0xff]
  %v21 = vld [vmem:[%s1 + $0x18] sm:$0xff]
  %v22 = vld [vmem:[%s1 + $0x20] sm:$0xff]
  %v23 = vld [vmem:[%s1 + $0x28] sm:$0xff]
  %v24 = vld [vmem:[%s1 + $0x30] sm:$0xff]
  %v25 = vld [vmem:[%s1 + $0x38] sm:$0xff]
  %v26 = vld [vmem:[%s1 + $0x40] sm:$0xff]
  %v27 = vld [vmem:[%s1 + $0x48] sm:$0xff]
  %v28 = vld [vmem:[%s1 + $0x50] sm:$0xff]
  %v29 = vld [vmem:[%s1 + $0x58] sm:$0xff]
  %v30 = vld [vmem:[%s1 + $0x60] sm:$0xff]
  %v31 = vld [vmem:[%s1 + $0x68] sm:$0xff]
  %v32 = vld [vmem:[%s1 + $0x70] sm:$0xff]
  %v33 = vld [vmem:[%s1 + $0x78] sm:$0xff]
  %v34 = vld [vmem:[%s2] sm:$0x1]
  %v36 = vperm.slane %v34, 0
  %38 = vmatpush.msra.mxu0 %v33
  %39 = vmatpush.msra.mxu0 %v32
  %40 = vmatpush.msra.mxu0 %v31
  %41 = vmatpush.msra.mxu0 %v30
  %42 = vmatpush.msra.mxu0 %v29
  %43 = vmatpush.msra.mxu0 %v28
  %44 = vmatpush.msra.mxu0 %v27
  %45 = vmatpush.msra.mxu0 %v26
  %46 = vmatpush.msra.mxu0 %v25
  %47 = vmatpush.msra.mxu0 %v24
  %48 = vmatpush.msra.mxu0 %v23
  %49 = vmatpush.msra.mxu0 %v22
  %50 = vmatpush.msra.mxu0 %v21
  %51 = vmatpush.msra.mxu0 %v20
  %52 = vmatpush.msra.mxu0 %v19
  %53 = vmatpush.msra.mxu0 %v18
  %54 = vmatmul.f32.gmra.mxu0 %v14
  %v55 = vpop.f32.mrf.mxu0
  %v56 = vadd.f32 %v36, %v55
  %57 = vmatmul.f32.gmra.mxu0 %v15
  %v58 = vpop.f32.mrf.mxu0
  %v59 = vadd.f32 %v36, %v58
  %60 = vmatmul.f32.gmra.mxu0 %v16
  %v61 = vpop.f32.mrf.mxu0
  %v62 = vadd.f32 %v36, %v61
  %63 = vmatmul.f32.gmra.mxu0 %v17
  %v64 = vpop.f32.mrf.mxu0
  %v65 = vadd.f32 %v36, %v64
  %66 = vdwg.mxu0
  %67 = vst [vmem:[%s3] sm:$0xff] %v56
  %68 = vst [vmem:[%s3 + $0x8] sm:$0xff] %v59
  %69 = vst [vmem:[%s3 + $0x10] sm:$0xff] %v62
  %70 = vst [vmem:[%s3 + $0x18] sm:$0xff] %v65
  // Predicated region
  $region14: #{_lambda_.4} parent=0 // pred_check
    _
  $region15: #{_lambda_.4} parent=0 // pred_check_branch
    %72 = sbr.rel (0) target = $region17
  $region16: #{_lambda_.4} parent=0 // pred_region
    _
  $region17: #{_lambda_.4} parent=0 // pred_fallthru
    _
  // Predicated region
  $region18: #{_lambda_.4} parent=0 // pred_check
    _
  $region19: #{_lambda_.4} parent=0 // pred_check_branch
    %74 = sbr.rel (0) target = $region21
  $region20: #{_lambda_.4} parent=0 // pred_region
    _
  $region21: #{_lambda_.4} parent=0 // pred_fallthru
    _

// kernel: _lambda_.6
$region0: #{_lambda_.6}
  #allocation0 [shape = 'u32[]', space=smem, size = 0x4, offset = 0x4, fixed_abs, tag = 'smem constant byte address 0x4 - core index']
  #allocation1 [shape = 'u32[72,128]{1,0:T(1,128)}', space=vmem, size = 0x9000, scoped, tag = 'internal scratch']
  %s0 = inlined_call_operand.vmem [shape: f32[2,512], index: 0, kind: input, shape index: {}]
  %s1 = inlined_call_operand.vmem [shape: f32[512,128], index: 1, kind: input, shape index: {}]
  %s2 = inlined_call_operand.vmem [shape: f32[2,128], index: 2, kind: output, shape index: {}]
  %s3 = sld [smem:[#allocation0]]
  $region18: #{_lambda_.6} parent=0
    _
  %s5 = ssub.s32 1, %s3
  %s6 = scalar_select 0, %s5, %s3
  // Predicated region
  $region2: #{_lambda_.6} parent=0 // pred_check
    _
  $region3: #{_lambda_.6} parent=0 // pred_check_branch
    %8 = sbr.rel (0) target = $region5
  $region4: #{_lambda_.6} parent=0 // pred_region
    _
  $region5: #{_lambda_.6} parent=0 // pred_fallthru
    _
  // Predicated region
  $region6: #{_lambda_.6} parent=0 // pred_check
    _
  $region7: #{_lambda_.6} parent=0 // pred_check_branch
    %10 = sbr.rel (0) target = $region9
  $region8: #{_lambda_.6} parent=0 // pred_region
    _
  $region9: #{_lambda_.6} parent=0 // pred_fallthru
    _
  %v11 = vld [vmem:[%s0] sm:$0xff]
  %v12 = vld [vmem:[%s1] sm:$0xff]
  %v13 = vld [vmem:[%s1 + $0x8] sm:$0xff]
  %v14 = vld [vmem:[%s1 + $0x10] sm:$0xff]
  %v15 = vld [vmem:[%s1 + $0x18] sm:$0xff]
  %v16 = vld [vmem:[%s1 + $0x20] sm:$0xff]
  %v17 = vld [vmem:[%s1 + $0x28] sm:$0xff]
  %v18 = vld [vmem:[%s1 + $0x30] sm:$0xff]
  %v19 = vld [vmem:[%s1 + $0x38] sm:$0xff]
  %v20 = vld [vmem:[%s1 + $0x40] sm:$0xff]
  %v21 = vld [vmem:[%s1 + $0x48] sm:$0xff]
  %v22 = vld [vmem:[%s1 + $0x50] sm:$0xff]
  %v23 = vld [vmem:[%s1 + $0x58] sm:$0xff]
  %v24 = vld [vmem:[%s1 + $0x60] sm:$0xff]
  %v25 = vld [vmem:[%s1 + $0x68] sm:$0xff]
  %v26 = vld [vmem:[%s1 + $0x70] sm:$0xff]
  %v27 = vld [vmem:[%s1 + $0x78] sm:$0xff]
  %v28 = vld [vmem:[%s1 + $0x80] sm:$0xff]
  %v29 = vld [vmem:[%s1 + $0x88] sm:$0xff]
  %v30 = vld [vmem:[%s1 + $0x90] sm:$0xff]
  %v31 = vld [vmem:[%s1 + $0x98] sm:$0xff]
  %v32 = vld [vmem:[%s1 + $0xa0] sm:$0xff]
  %v33 = vld [vmem:[%s1 + $0xa8] sm:$0xff]
  %v34 = vld [vmem:[%s1 + $0xb0] sm:$0xff]
  %v35 = vld [vmem:[%s1 + $0xb8] sm:$0xff]
  %v36 = vld [vmem:[%s1 + $0xc0] sm:$0xff]
  %v37 = vld [vmem:[%s1 + $0xc8] sm:$0xff]
  %v38 = vld [vmem:[%s1 + $0xd0] sm:$0xff]
  %v39 = vld [vmem:[%s1 + $0xd8] sm:$0xff]
  %v40 = vld [vmem:[%s1 + $0xe0] sm:$0xff]
  %v41 = vld [vmem:[%s1 + $0xe8] sm:$0xff]
  %v42 = vld [vmem:[%s1 + $0xf0] sm:$0xff]
  %v43 = vld [vmem:[%s1 + $0xf8] sm:$0xff]
  %v44 = vld [vmem:[%s1 + $0x100] sm:$0xff]
  %v45 = vld [vmem:[%s1 + $0x108] sm:$0xff]
  %v46 = vld [vmem:[%s1 + $0x110] sm:$0xff]
  %v47 = vld [vmem:[%s1 + $0x118] sm:$0xff]
  %v48 = vld [vmem:[%s1 + $0x120] sm:$0xff]
  %v49 = vld [vmem:[%s1 + $0x128] sm:$0xff]
  %v50 = vld [vmem:[%s1 + $0x130] sm:$0xff]
  %v51 = vld [vmem:[%s1 + $0x138] sm:$0xff]
  %v52 = vld [vmem:[%s1 + $0x140] sm:$0xff]
  %v53 = vld [vmem:[%s1 + $0x148] sm:$0xff]
  %v54 = vld [vmem:[%s1 + $0x150] sm:$0xff]
  %v55 = vld [vmem:[%s1 + $0x158] sm:$0xff]
  %v56 = vld [vmem:[%s1 + $0x160] sm:$0xff]
  %v57 = vld [vmem:[%s1 + $0x168] sm:$0xff]
  %v58 = vld [vmem:[%s1 + $0x170] sm:$0xff]
  %v59 = vld [vmem:[%s1 + $0x178] sm:$0xff]
  %v60 = vld [vmem:[%s1 + $0x180] sm:$0xff]
  %v61 = vld [vmem:[%s1 + $0x188] sm:$0xff]
  %v62 = vld [vmem:[%s1 + $0x190] sm:$0xff]
  %v63 = vld [vmem:[%s1 + $0x198] sm:$0xff]
  %v64 = vld [vmem:[%s1 + $0x1a0] sm:$0xff]
  %v65 = vld [vmem:[%s1 + $0x1a8] sm:$0xff]
  %v66 = vld [vmem:[%s1 + $0x1b0] sm:$0xff]
  %v67 = vld [vmem:[%s1 + $0x1b8] sm:$0xff]
  %v68 = vld [vmem:[%s1 + $0x1c0] sm:$0xff]
  %v69 = vld [vmem:[%s1 + $0x1c8] sm:$0xff]
  %v70 = vld [vmem:[%s1 + $0x1d0] sm:$0xff]
  %v71 = vld [vmem:[%s1 + $0x1d8] sm:$0xff]
  %v72 = vld [vmem:[%s1 + $0x1e0] sm:$0xff]
  %v73 = vld [vmem:[%s1 + $0x1e8] sm:$0xff]
  %v74 = vld [vmem:[%s1 + $0x1f0] sm:$0xff]
  %v75 = vld [vmem:[%s1 + $0x1f8] sm:$0xff]
  %77 = vst [vmem:[#allocation1] ss:$4 sm:$0xff] %v11
  %v78 = vld.sshfl [vmem:[#allocation1] sm:$0xff pattern:$0x73625140]
  %v79 = vld.sshfl [vmem:[#allocation1 + $0x8] sm:$0xff pattern:$0x73625140]
  %v80 = vld.sshfl [vmem:[#allocation1 + $0x10] sm:$0xff pattern:$0x73625140]
  %v81 = vld.sshfl [vmem:[#allocation1 + $0x18] sm:$0xff pattern:$0x73625140]
  %86 = vmatpush.msra.mxu0 %v27
  %87 = vmatpush.msra.mxu0 %v26
  %88 = vmatpush.msra.mxu0 %v25
  %89 = vmatpush.msra.mxu0 %v24
  %90 = vmatpush.msra.mxu0 %v23
  %91 = vmatpush.msra.mxu0 %v22
  %92 = vmatpush.msra.mxu0 %v21
  %93 = vmatpush.msra.mxu0 %v20
  %94 = vmatpush.msra.mxu0 %v19
  %95 = vmatpush.msra.mxu0 %v18
  %96 = vmatpush.msra.mxu0 %v17
  %97 = vmatpush.msra.mxu0 %v16
  %98 = vmatpush.msra.mxu0 %v15
  %99 = vmatpush.msra.mxu0 %v14
  %100 = vmatpush.msra.mxu0 %v13
  %101 = vmatpush.msra.mxu0 %v12
  %102 = vmatmul.f32.gmra.mxu0 %v78
  %v103 = vpop.f32.mrf.mxu0
  %v104 = vadd.f32 0.0, %v103
  %105 = vdwg.mxu0
  %106 = vmatpush.msra.mxu0 %v43
  %107 = vmatpush.msra.mxu0 %v42
  %108 = vmatpush.msra.mxu0 %v41
  %109 = vmatpush.msra.mxu0 %v40
  %110 = vmatpush.msra.mxu0 %v39
  %111 = vmatpush.msra.mxu0 %v38
  %112 = vmatpush.msra.mxu0 %v37
  %113 = vmatpush.msra.mxu0 %v36
  %114 = vmatpush.msra.mxu0 %v35
  %115 = vmatpush.msra.mxu0 %v34
  %116 = vmatpush.msra.mxu0 %v33
  %117 = vmatpush.msra.mxu0 %v32
  %118 = vmatpush.msra.mxu0 %v31
  %119 = vmatpush.msra.mxu0 %v30
  %120 = vmatpush.msra.mxu0 %v29
  %121 = vmatpush.msra.mxu0 %v28
  %122 = vmatmul.f32.gmra.mxu0 %v79
  %v123 = vpop.f32.mrf.mxu0
  %v124 = vadd.f32 %v104, %v123
  %125 = vdwg.mxu0
  %126 = vmatpush.msra.mxu0 %v59
  %127 = vmatpush.msra.mxu0 %v58
  %128 = vmatpush.msra.mxu0 %v57
  %129 = vmatpush.msra.mxu0 %v56
  %130 = vmatpush.msra.mxu0 %v55
  %131 = vmatpush.msra.mxu0 %v54
  %132 = vmatpush.msra.mxu0 %v53
  %133 = vmatpush.msra.mxu0 %v52
  %134 = vmatpush.msra.mxu0 %v51
  %135 = vmatpush.msra.mxu0 %v50
  %136 = vmatpush.msra.mxu0 %v49
  %137 = vmatpush.msra.mxu0 %v48
  %138 = vmatpush.msra.mxu0 %v47
  %139 = vmatpush.msra.mxu0 %v46
  %140 = vmatpush.msra.mxu0 %v45
  %141 = vmatpush.msra.mxu0 %v44
  %142 = vmatmul.f32.gmra.mxu0 %v80
  %v143 = vpop.f32.mrf.mxu0
  %v144 = vadd.f32 %v124, %v143
  %145 = vdwg.mxu0
  %146 = vmatpush.msra.mxu0 %v75
  %147 = vmatpush.msra.mxu0 %v74
  %148 = vmatpush.msra.mxu0 %v73
  %149 = vmatpush.msra.mxu0 %v72
  %150 = vmatpush.msra.mxu0 %v71
  %151 = vmatpush.msra.mxu0 %v70
  %152 = vmatpush.msra.mxu0 %v69
  %153 = vmatpush.msra.mxu0 %v68
  %154 = vmatpush.msra.mxu0 %v67
  %155 = vmatpush.msra.mxu0 %v66
  %156 = vmatpush.msra.mxu0 %v65
  %157 = vmatpush.msra.mxu0 %v64
  %158 = vmatpush.msra.mxu0 %v63
  %159 = vmatpush.msra.mxu0 %v62
  %160 = vmatpush.msra.mxu0 %v61
  %161 = vmatpush.msra.mxu0 %v60
  %162 = vmatmul.f32.gmra.mxu0 %v81
  %v163 = vpop.f32.mrf.mxu0
  %v164 = vadd.f32 %v144, %v163
  %165 = vdwg.mxu0
  %166 = vst [vmem:[%s2] sm:$0x3] %v164
  // Predicated region
  $region10: #{_lambda_.6} parent=0 // pred_check
    _
  $region11: #{_lambda_.6} parent=0 // pred_check_branch
    %168 = sbr.rel (0) target = $region13
  $region12: #{_lambda_.6} parent=0 // pred_region
    _
  $region13: #{_lambda_.6} parent=0 // pred_fallthru
    _
  // Predicated region
  $region14: #{_lambda_.6} parent=0 // pred_check
    _
  $region15: #{_lambda_.6} parent=0 // pred_check_branch
    %170 = sbr.rel (0) target = $region17
  $region16: #{_lambda_.6} parent=0 // pred_region
    _
  $region17: #{_lambda_.6} parent=0 // pred_fallthru
    _

// kernel: _lambda_.5
$region0: #{_lambda_.5}
  #allocation0 [shape = 'u32[]', space=smem, size = 0x4, offset = 0x4, fixed_abs, tag = 'smem constant byte address 0x4 - core index']
  #allocation1 [shape = 'u32[72,128]{1,0:T(1,128)}', space=vmem, size = 0x9000, scoped, tag = 'internal scratch']
  #allocation2 [shape = 'f32[5,128]{1,0:T(8,128)}', space=vmem, size = 0x1000, scoped, tag = 'scratch operand']
  %s0 = inlined_call_operand.vmem [shape: f32[2,5,128], index: 0, kind: input, shape index: {}]
  %s1 = inlined_call_operand.vmem [shape: f32[2,1,128], index: 1, kind: input, shape index: {}]
  %s2 = inlined_call_operand.vmem [shape: f32[2,1,128], index: 2, kind: input, shape index: {}]
  %s3 = inlined_call_operand.vmem [shape: f32[2,128,384], index: 3, kind: input, shape index: {}]
  %s4 = inlined_call_operand.vmem [shape: f32[2,48,128], index: 4, kind: input, shape index: {}]
  %s5 = inlined_call_operand.vmem [shape: f32[2,1,128], index: 5, kind: input, shape index: {}]
  %s6 = inlined_call_operand.vmem [shape: f32[2,1,128], index: 6, kind: input, shape index: {}]
  %s7 = inlined_call_operand.vmem [shape: f32[2,1,128], index: 7, kind: input, shape index: {}]
  %s8 = inlined_call_operand.vmem [shape: f32[2,128,256], index: 8, kind: input, shape index: {}]
  %s9 = inlined_call_operand.vmem [shape: f32[2,1,256], index: 9, kind: input, shape index: {}]
  %s10 = inlined_call_operand.vmem [shape: f32[2,256,128], index: 10, kind: input, shape index: {}]
  %s11 = inlined_call_operand.vmem [shape: f32[2,1,128], index: 11, kind: input, shape index: {}]
  %s12 = inlined_call_operand.vmem [shape: f32[1,128], index: 12, kind: input, shape index: {}]
  %s13 = inlined_call_operand.vmem [shape: f32[1,128], index: 13, kind: input, shape index: {}]
  %s14 = inlined_call_operand.vmem [shape: f32[2,5,128], index: 14, kind: output, shape index: {}]
  %s15 = sld [smem:[#allocation0]]
  $region97: #{_lambda_.5} parent=0
    _
  %s17 = ssub.s32 1, %s15
  %s18 = scalar_select 0, %s17, %s15
  loop: start=0, step=1, limit=6
  $region2: #{_lambda_.5} parent=0 // loop_pre_header
    _
  $region3: #{_lambda_.5} parent=0 // loop_header
    %s20 = sphi 0, %s24
    %p21 = scmp.ge.s32.totalorder %s20, 6
    %s27 = sphi 0, %s39
    %s28 = sphi 0, %s35
    %s29 = sphi 0, %s27
    %s30 = sphi 0, %s28
    %s31 = sphi 0, %s29
    %s32 = sphi 0, %s30
    %s42 = sphi 0, %s44
    %s45 = sphi 0, %s42
    %s46 = sphi 0, %s45
    %s62 = sphi 0, %s46
    %s68 = sphi 0, %s70
    %s71 = sphi 0, %s68
    %s72 = sphi 0, %s71
    %s88 = sphi 0, %s72
    %s94 = sphi 0, %s96
    %s97 = sphi 0, %s94
    %s98 = sphi 0, %s97
    %s114 = sphi 0, %s98
    %s120 = sphi 0, %s122
    %s123 = sphi 0, %s120
    %s124 = sphi 0, %s123
    %s140 = sphi 0, %s124
    %s146 = sphi 0, %s148
    %s149 = sphi 0, %s146
    %s150 = sphi 0, %s149
    %s166 = sphi 0, %s150
    %s172 = sphi 0, %s174
    %s175 = sphi 0, %s172
    %s176 = sphi 0, %s175
    %s192 = sphi 0, %s176
    %s198 = sphi 0, %s200
    %s201 = sphi 0, %s198
    %s202 = sphi 0, %s201
    %s218 = sphi 0, %s202
    %s224 = sphi 0, %s226
    %s227 = sphi 0, %s224
    %s228 = sphi 0, %s227
    %s244 = sphi 0, %s228
    %s250 = sphi 0, %s252
    %s253 = sphi 0, %s250
    %s254 = sphi 0, %s253
    %s270 = sphi 0, %s254
    %s276 = sphi 0, %s278
    %s279 = sphi 0, %s276
    %s280 = sphi 0, %s279
    %s296 = sphi 0, %s280
    %s302 = sphi 0, %s304
    %s305 = sphi 0, %s302
    %s306 = sphi 0, %s305
    %s322 = sphi 0, %s306
    %s328 = sphi 0, %s330
    %s331 = sphi 0, %s328
    %s332 = sphi 0, %s331
    %s348 = sphi 0, %s332
    %s352 = sphi 0, %s352
    %s354 = sphi 0, %s352
    %s355 = sphi 0, %s354
    %s369 = sphi 0, %s355
    %s373 = sphi 0, %s373
    %s375 = sphi 0, %s373
    %s376 = sphi 0, %s375
    %s390 = sphi 0, %s376
    %s396 = sphi 0, %s398
    %s399 = sphi 0, %s396
    %s400 = sphi 0, %s399
    %s416 = sphi 0, %s400
  $region4: #{_lambda_.5} parent=0 // loop_header_branch
    %23 = sbr.rel (%p21) target = $region8
  $region5: #{_lambda_.5} parent=0 // loop_body
    %s25 = ssub.s32 %s20, 1
    %s26 = ssub.s32 %s20, 2
    %s33 = sadd.s32 1, %s28
    %p34 = scmp.ge.s32.totalorder %s33, 2
    %s35 = scalar_select %p34, 0, %s33
    %s36 = sadd.s32 1, %s27
    %s37 = scalar_select %p34, %s36, %s27
    %p38 = scmp.ge.s32.totalorder %s37, 2
    %s39 = scalar_select %p38, 0, %s37
    %s40 = ssub.s32 %s27, %s39
    %p41 = scmp.eq.s32.totalorder %s40, 0
    %s43 = sadd.s32 %s42, 1
    %s44 = scalar_select %p41, %s42, %s43
    %p47 = pneg %p41
    %p48 = scmp.eq.s32.totalorder %s20, 3
    %p49 = por %p47, %p48
    %p50 = scmp.ne.s32.totalorder %s42, %s45
    %p51 = scmp.eq.s32.totalorder %s20, 0
    %p52 = por %p50, %p51
    %p53 = scmp.ne.s32.totalorder %s42, %s45
    %p54 = scmp.eq.s32.totalorder %s25, 3
    %p55 = por %p53, %p54
    %p56 = scmp.ne.s32.totalorder %s45, %s46
    %p57 = scmp.eq.s32.totalorder %s25, 0
    %p58 = por %p56, %p57
    %p59 = scmp.ne.s32.totalorder %s45, %s46
    %p60 = scmp.eq.s32.totalorder %s26, 3
    %p61 = por %p59, %p60
    %p63 = scmp.ne.s32.totalorder %s46, %s62
    %p64 = scmp.eq.s32.totalorder %s26, 0
    %p65 = por %p63, %p64
    %s66 = ssub.s32 %s28, %s35
    %p67 = scmp.eq.s32.totalorder %s66, 0
    %s69 = sadd.s32 %s68, 1
    %s70 = scalar_select %p67, %s68, %s69
    %p73 = pneg %p67
    %p74 = scmp.eq.s32.totalorder %s20, 3
    %p75 = por %p73, %p74
    %p76 = scmp.ne.s32.totalorder %s68, %s71
    %p77 = scmp.eq.s32.totalorder %s20, 0
    %p78 = por %p76, %p77
    %p79 = scmp.ne.s32.totalorder %s68, %s71
    %p80 = scmp.eq.s32.totalorder %s25, 3
    %p81 = por %p79, %p80
    %p82 = scmp.ne.s32.totalorder %s71, %s72
    %p83 = scmp.eq.s32.totalorder %s25, 0
    %p84 = por %p82, %p83
    %p85 = scmp.ne.s32.totalorder %s71, %s72
    %p86 = scmp.eq.s32.totalorder %s26, 3
    %p87 = por %p85, %p86
    %p89 = scmp.ne.s32.totalorder %s72, %s88
    %p90 = scmp.eq.s32.totalorder %s26, 0
    %p91 = por %p89, %p90
    %s92 = ssub.s32 %s28, %s35
    %p93 = scmp.eq.s32.totalorder %s92, 0
    %s95 = sadd.s32 %s94, 1
    %s96 = scalar_select %p93, %s94, %s95
    %p99 = pneg %p93
    %p100 = scmp.eq.s32.totalorder %s20, 3
    %p101 = por %p99, %p100
    %p102 = scmp.ne.s32.totalorder %s94, %s97
    %p103 = scmp.eq.s32.totalorder %s20, 0
    %p104 = por %p102, %p103
    %p105 = scmp.ne.s32.totalorder %s94, %s97
    %p106 = scmp.eq.s32.totalorder %s25, 3
    %p107 = por %p105, %p106
    %p108 = scmp.ne.s32.totalorder %s97, %s98
    %p109 = scmp.eq.s32.totalorder %s25, 0
    %p110 = por %p108, %p109
    %p111 = scmp.ne.s32.totalorder %s97, %s98
    %p112 = scmp.eq.s32.totalorder %s26, 3
    %p113 = por %p111, %p112
    %p115 = scmp.ne.s32.totalorder %s98, %s114
    %p116 = scmp.eq.s32.totalorder %s26, 0
    %p117 = por %p115, %p116
    %s118 = ssub.s32 %s28, %s35
    %p119 = scmp.eq.s32.totalorder %s118, 0
    %s121 = sadd.s32 %s120, 1
    %s122 = scalar_select %p119, %s120, %s121
    %p125 = pneg %p119
    %p126 = scmp.eq.s32.totalorder %s20, 3
    %p127 = por %p125, %p126
    %p128 = scmp.ne.s32.totalorder %s120, %s123
    %p129 = scmp.eq.s32.totalorder %s20, 0
    %p130 = por %p128, %p129
    %p131 = scmp.ne.s32.totalorder %s120, %s123
    %p132 = scmp.eq.s32.totalorder %s25, 3
    %p133 = por %p131, %p132
    %p134 = scmp.ne.s32.totalorder %s123, %s124
    %p135 = scmp.eq.s32.totalorder %s25, 0
    %p136 = por %p134, %p135
    %p137 = scmp.ne.s32.totalorder %s123, %s124
    %p138 = scmp.eq.s32.totalorder %s26, 3
    %p139 = por %p137, %p138
    %p141 = scmp.ne.s32.totalorder %s124, %s140
    %p142 = scmp.eq.s32.totalorder %s26, 0
    %p143 = por %p141, %p142
    %s144 = ssub.s32 %s28, %s35
    %p145 = scmp.eq.s32.totalorder %s144, 0
    %s147 = sadd.s32 %s146, 1
    %s148 = scalar_select %p145, %s146, %s147
    %p151 = pneg %p145
    %p152 = scmp.eq.s32.totalorder %s20, 3
    %p153 = por %p151, %p152
    %p154 = scmp.ne.s32.totalorder %s146, %s149
    %p155 = scmp.eq.s32.totalorder %s20, 0
    %p156 = por %p154, %p155
    %p157 = scmp.ne.s32.totalorder %s146, %s149
    %p158 = scmp.eq.s32.totalorder %s25, 3
    %p159 = por %p157, %p158
    %p160 = scmp.ne.s32.totalorder %s149, %s150
    %p161 = scmp.eq.s32.totalorder %s25, 0
    %p162 = por %p160, %p161
    %p163 = scmp.ne.s32.totalorder %s149, %s150
    %p164 = scmp.eq.s32.totalorder %s26, 3
    %p165 = por %p163, %p164
    %p167 = scmp.ne.s32.totalorder %s150, %s166
    %p168 = scmp.eq.s32.totalorder %s26, 0
    %p169 = por %p167, %p168
    %s170 = ssub.s32 %s28, %s35
    %p171 = scmp.eq.s32.totalorder %s170, 0
    %s173 = sadd.s32 %s172, 1
    %s174 = scalar_select %p171, %s172, %s173
    %p177 = pneg %p171
    %p178 = scmp.eq.s32.totalorder %s20, 3
    %p179 = por %p177, %p178
    %p180 = scmp.ne.s32.totalorder %s172, %s175
    %p181 = scmp.eq.s32.totalorder %s20, 0
    %p182 = por %p180, %p181
    %p183 = scmp.ne.s32.totalorder %s172, %s175
    %p184 = scmp.eq.s32.totalorder %s25, 3
    %p185 = por %p183, %p184
    %p186 = scmp.ne.s32.totalorder %s175, %s176
    %p187 = scmp.eq.s32.totalorder %s25, 0
    %p188 = por %p186, %p187
    %p189 = scmp.ne.s32.totalorder %s175, %s176
    %p190 = scmp.eq.s32.totalorder %s26, 3
    %p191 = por %p189, %p190
    %p193 = scmp.ne.s32.totalorder %s176, %s192
    %p194 = scmp.eq.s32.totalorder %s26, 0
    %p195 = por %p193, %p194
    %s196 = ssub.s32 %s28, %s35
    %p197 = scmp.eq.s32.totalorder %s196, 0
    %s199 = sadd.s32 %s198, 1
    %s200 = scalar_select %p197, %s198, %s199
    %p203 = pneg %p197
    %p204 = scmp.eq.s32.totalorder %s20, 3
    %p205 = por %p203, %p204
    %p206 = scmp.ne.s32.totalorder %s198, %s201
    %p207 = scmp.eq.s32.totalorder %s20, 0
    %p208 = por %p206, %p207
    %p209 = scmp.ne.s32.totalorder %s198, %s201
    %p210 = scmp.eq.s32.totalorder %s25, 3
    %p211 = por %p209, %p210
    %p212 = scmp.ne.s32.totalorder %s201, %s202
    %p213 = scmp.eq.s32.totalorder %s25, 0
    %p214 = por %p212, %p213
    %p215 = scmp.ne.s32.totalorder %s201, %s202
    %p216 = scmp.eq.s32.totalorder %s26, 3
    %p217 = por %p215, %p216
    %p219 = scmp.ne.s32.totalorder %s202, %s218
    %p220 = scmp.eq.s32.totalorder %s26, 0
    %p221 = por %p219, %p220
    %s222 = ssub.s32 %s28, %s35
    %p223 = scmp.eq.s32.totalorder %s222, 0
    %s225 = sadd.s32 %s224, 1
    %s226 = scalar_select %p223, %s224, %s225
    %p229 = pneg %p223
    %p230 = scmp.eq.s32.totalorder %s20, 3
    %p231 = por %p229, %p230
    %p232 = scmp.ne.s32.totalorder %s224, %s227
    %p233 = scmp.eq.s32.totalorder %s20, 0
    %p234 = por %p232, %p233
    %p235 = scmp.ne.s32.totalorder %s224, %s227
    %p236 = scmp.eq.s32.totalorder %s25, 3
    %p237 = por %p235, %p236
    %p238 = scmp.ne.s32.totalorder %s227, %s228
    %p239 = scmp.eq.s32.totalorder %s25, 0
    %p240 = por %p238, %p239
    %p241 = scmp.ne.s32.totalorder %s227, %s228
    %p242 = scmp.eq.s32.totalorder %s26, 3
    %p243 = por %p241, %p242
    %p245 = scmp.ne.s32.totalorder %s228, %s244
    %p246 = scmp.eq.s32.totalorder %s26, 0
    %p247 = por %p245, %p246
    %s248 = ssub.s32 %s28, %s35
    %p249 = scmp.eq.s32.totalorder %s248, 0
    %s251 = sadd.s32 %s250, 1
    %s252 = scalar_select %p249, %s250, %s251
    %p255 = pneg %p249
    %p256 = scmp.eq.s32.totalorder %s20, 3
    %p257 = por %p255, %p256
    %p258 = scmp.ne.s32.totalorder %s250, %s253
    %p259 = scmp.eq.s32.totalorder %s20, 0
    %p260 = por %p258, %p259
    %p261 = scmp.ne.s32.totalorder %s250, %s253
    %p262 = scmp.eq.s32.totalorder %s25, 3
    %p263 = por %p261, %p262
    %p264 = scmp.ne.s32.totalorder %s253, %s254
    %p265 = scmp.eq.s32.totalorder %s25, 0
    %p266 = por %p264, %p265
    %p267 = scmp.ne.s32.totalorder %s253, %s254
    %p268 = scmp.eq.s32.totalorder %s26, 3
    %p269 = por %p267, %p268
    %p271 = scmp.ne.s32.totalorder %s254, %s270
    %p272 = scmp.eq.s32.totalorder %s26, 0
    %p273 = por %p271, %p272
    %s274 = ssub.s32 %s28, %s35
    %p275 = scmp.eq.s32.totalorder %s274, 0
    %s277 = sadd.s32 %s276, 1
    %s278 = scalar_select %p275, %s276, %s277
    %p281 = pneg %p275
    %p282 = scmp.eq.s32.totalorder %s20, 3
    %p283 = por %p281, %p282
    %p284 = scmp.ne.s32.totalorder %s276, %s279
    %p285 = scmp.eq.s32.totalorder %s20, 0
    %p286 = por %p284, %p285
    %p287 = scmp.ne.s32.totalorder %s276, %s279
    %p288 = scmp.eq.s32.totalorder %s25, 3
    %p289 = por %p287, %p288
    %p290 = scmp.ne.s32.totalorder %s279, %s280
    %p291 = scmp.eq.s32.totalorder %s25, 0
    %p292 = por %p290, %p291
    %p293 = scmp.ne.s32.totalorder %s279, %s280
    %p294 = scmp.eq.s32.totalorder %s26, 3
    %p295 = por %p293, %p294
    %p297 = scmp.ne.s32.totalorder %s280, %s296
    %p298 = scmp.eq.s32.totalorder %s26, 0
    %p299 = por %p297, %p298
    %s300 = ssub.s32 %s28, %s35
    %p301 = scmp.eq.s32.totalorder %s300, 0
    %s303 = sadd.s32 %s302, 1
    %s304 = scalar_select %p301, %s302, %s303
    %p307 = pneg %p301
    %p308 = scmp.eq.s32.totalorder %s20, 3
    %p309 = por %p307, %p308
    %p310 = scmp.ne.s32.totalorder %s302, %s305
    %p311 = scmp.eq.s32.totalorder %s20, 0
    %p312 = por %p310, %p311
    %p313 = scmp.ne.s32.totalorder %s302, %s305
    %p314 = scmp.eq.s32.totalorder %s25, 3
    %p315 = por %p313, %p314
    %p316 = scmp.ne.s32.totalorder %s305, %s306
    %p317 = scmp.eq.s32.totalorder %s25, 0
    %p318 = por %p316, %p317
    %p319 = scmp.ne.s32.totalorder %s305, %s306
    %p320 = scmp.eq.s32.totalorder %s26, 3
    %p321 = por %p319, %p320
    %p323 = scmp.ne.s32.totalorder %s306, %s322
    %p324 = scmp.eq.s32.totalorder %s26, 0
    %p325 = por %p323, %p324
    %s326 = ssub.s32 %s28, %s35
    %p327 = scmp.eq.s32.totalorder %s326, 0
    %s329 = sadd.s32 %s328, 1
    %s330 = scalar_select %p327, %s328, %s329
    %p333 = pneg %p327
    %p334 = scmp.eq.s32.totalorder %s20, 3
    %p335 = por %p333, %p334
    %p336 = scmp.ne.s32.totalorder %s328, %s331
    %p337 = scmp.eq.s32.totalorder %s20, 0
    %p338 = por %p336, %p337
    %p339 = scmp.ne.s32.totalorder %s328, %s331
    %p340 = scmp.eq.s32.totalorder %s25, 3
    %p341 = por %p339, %p340
    %p342 = scmp.ne.s32.totalorder %s331, %s332
    %p343 = scmp.eq.s32.totalorder %s25, 0
    %p344 = por %p342, %p343
    %p345 = scmp.ne.s32.totalorder %s331, %s332
    %p346 = scmp.eq.s32.totalorder %s26, 3
    %p347 = por %p345, %p346
    %p349 = scmp.ne.s32.totalorder %s332, %s348
    %p350 = scmp.eq.s32.totalorder %s26, 0
    %p351 = por %p349, %p350
    %s353 = sadd.s32 %s352, 1
    %p356 = scmp.eq.s32.totalorder %s20, 3
    %p357 = scmp.ne.s32.totalorder %s352, %s354
    %p358 = scmp.eq.s32.totalorder %s20, 0
    %p359 = por %p357, %p358
    %p360 = scmp.ne.s32.totalorder %s352, %s354
    %p361 = scmp.eq.s32.totalorder %s25, 3
    %p362 = por %p360, %p361
    %p363 = scmp.ne.s32.totalorder %s354, %s355
    %p364 = scmp.eq.s32.totalorder %s25, 0
    %p365 = por %p363, %p364
    %p366 = scmp.ne.s32.totalorder %s354, %s355
    %p367 = scmp.eq.s32.totalorder %s26, 3
    %p368 = por %p366, %p367
    %p370 = scmp.ne.s32.totalorder %s355, %s369
    %p371 = scmp.eq.s32.totalorder %s26, 0
    %p372 = por %p370, %p371
    %s374 = sadd.s32 %s373, 1
    %p377 = scmp.eq.s32.totalorder %s20, 3
    %p378 = scmp.ne.s32.totalorder %s373, %s375
    %p379 = scmp.eq.s32.totalorder %s20, 0
    %p380 = por %p378, %p379
    %p381 = scmp.ne.s32.totalorder %s373, %s375
    %p382 = scmp.eq.s32.totalorder %s25, 3
    %p383 = por %p381, %p382
    %p384 = scmp.ne.s32.totalorder %s375, %s376
    %p385 = scmp.eq.s32.totalorder %s25, 0
    %p386 = por %p384, %p385
    %p387 = scmp.ne.s32.totalorder %s375, %s376
    %p388 = scmp.eq.s32.totalorder %s26, 3
    %p389 = por %p387, %p388
    %p391 = scmp.ne.s32.totalorder %s376, %s390
    %p392 = scmp.eq.s32.totalorder %s26, 0
    %p393 = por %p391, %p392
    %s394 = ssub.s32 %s27, %s39
    %p395 = scmp.eq.s32.totalorder %s394, 0
    %s397 = sadd.s32 %s396, 1
    %s398 = scalar_select %p395, %s396, %s397
    %p401 = pneg %p395
    %p402 = scmp.eq.s32.totalorder %s20, 3
    %p403 = por %p401, %p402
    %p404 = scmp.ne.s32.totalorder %s396, %s399
    %p405 = scmp.eq.s32.totalorder %s20, 0
    %p406 = por %p404, %p405
    %p407 = scmp.ne.s32.totalorder %s396, %s399
    %p408 = scmp.eq.s32.totalorder %s25, 3
    %p409 = por %p407, %p408
    %p410 = scmp.ne.s32.totalorder %s399, %s400
    %p411 = scmp.eq.s32.totalorder %s25, 0
    %p412 = por %p410, %p411
    %p413 = scmp.ne.s32.totalorder %s399, %s400
    %p414 = scmp.eq.s32.totalorder %s26, 3
    %p415 = por %p413, %p414
    %p417 = scmp.ne.s32.totalorder %s400, %s416
    %p418 = scmp.eq.s32.totalorder %s26, 0
    %p419 = por %p417, %p418
    %p420 = scmp.le.s32.totalorder 1, %s20
    %p421 = scmp.lt.s32.totalorder %s20, 5
    %p422 = pnand %p420, %p421
    %p423 = pneg %p422
    // Predicated region
    $region9: #{_lambda_.5} parent=5 // pred_check
      _
    $region10: #{_lambda_.5} parent=5 // pred_check_branch
      %425 = sbr.rel (%p422) target = $region12
    $region11: #{_lambda_.5} parent=5 // pred_region
      %s426 = ssub.s32 %s20, 1
      // Predicated region
      $region13: #{_lambda_.5} parent=11 // pred_check
        %p427 = pneg %p365
      $region14: #{_lambda_.5} parent=11 // pred_check_branch
        %429 = sbr.rel (%p427) target = $region16
      $region15: #{_lambda_.5} parent=11 // pred_region
        _
      $region16: #{_lambda_.5} parent=11 // pred_fallthru
        _
      // Predicated region
      $region17: #{_lambda_.5} parent=11 // pred_check
        %p430 = pneg %p386
      $region18: #{_lambda_.5} parent=11 // pred_check_branch
        %432 = sbr.rel (%p430) target = $region20
      $region19: #{_lambda_.5} parent=11 // pred_region
        _
      $region20: #{_lambda_.5} parent=11 // pred_fallthru
        _
    $region12: #{_lambda_.5} parent=5 // pred_fallthru
      _
    %p433 = scmp.lt.s32.totalorder %s20, 4
    // Predicated region
    $region21: #{_lambda_.5} parent=5 // pred_check
      %p434 = pneg %p433
    $region22: #{_lambda_.5} parent=5 // pred_check_branch
      %436 = sbr.rel (%p434) target = $region24
    $region23: #{_lambda_.5} parent=5 // pred_region
      // Predicated region
      $region25: #{_lambda_.5} parent=23 // pred_check
        %p437 = pneg %p52
      $region26: #{_lambda_.5} parent=23 // pred_check_branch
        %439 = sbr.rel (%p437) target = $region28
      $region27: #{_lambda_.5} parent=23 // pred_region
        %p440 = scmp.lt.s32.totalorder %s27, 1
        %s441 = scalar_select %p440, %s27, 1
        %s442 = smul.addr %s441, 8
        %s443 = scalar_lea.vmem %s0, %s442
      $region28: #{_lambda_.5} parent=23 // pred_fallthru
        _
      // Predicated region
      $region29: #{_lambda_.5} parent=23 // pred_check
        %p444 = pneg %p78
      $region30: #{_lambda_.5} parent=23 // pred_check_branch
        %446 = sbr.rel (%p444) target = $region32
      $region31: #{_lambda_.5} parent=23 // pred_region
        %p447 = scmp.lt.s32.totalorder %s28, 1
        %s448 = scalar_select %p447, %s28, 1
        %s449 = scalar_lea.vmem %s1, %s448
      $region32: #{_lambda_.5} parent=23 // pred_fallthru
        _
      // Predicated region
      $region33: #{_lambda_.5} parent=23 // pred_check
        %p450 = pneg %p104
      $region34: #{_lambda_.5} parent=23 // pred_check_branch
        %452 = sbr.rel (%p450) target = $region36
      $region35: #{_lambda_.5} parent=23 // pred_region
        %p453 = scmp.lt.s32.totalorder %s28, 1
        %s454 = scalar_select %p453, %s28, 1
        %s455 = scalar_lea.vmem %s2, %s454
      $region36: #{_lambda_.5} parent=23 // pred_fallthru
        _
      // Predicated region
      $region37: #{_lambda_.5} parent=23 // pred_check
        %p456 = pneg %p130
      $region38: #{_lambda_.5} parent=23 // pred_check_branch
        %458 = sbr.rel (%p456) target = $region40
      $region39: #{_lambda_.5} parent=23 // pred_region
        %p459 = scmp.lt.s32.totalorder %s28, 1
        %s460 = scalar_select %p459, %s28, 1
        %s461 = smul.addr %s460, 48
        %s462 = smul.addr %s461, 8
        %s463 = scalar_lea.vmem %s3, %s462
      $region40: #{_lambda_.5} parent=23 // pred_fallthru
        _
      // Predicated region
      $region41: #{_lambda_.5} parent=23 // pred_check
        %p464 = pneg %p156
      $region42: #{_lambda_.5} parent=23 // pred_check_branch
        %466 = sbr.rel (%p464) target = $region44
      $region43: #{_lambda_.5} parent=23 // pred_region
        %p467 = scmp.lt.s32.totalorder %s28, 1
        %s468 = scalar_select %p467, %s28, 1
        %s469 = smul.addr %s468, 6
        %s470 = smul.addr %s469, 8
        %s471 = scalar_lea.vmem %s4, %s470
      $region44: #{_lambda_.5} parent=23 // pred_fallthru
        _
      // Predicated region
      $region45: #{_lambda_.5} parent=23 // pred_check
        %p472 = pneg %p182
      $region46: #{_lambda_.5} parent=23 // pred_check_branch
        %474 = sbr.rel (%p472) target = $region48
      $region47: #{_lambda_.5} parent=23 // pred_region
        %p475 = scmp.lt.s32.totalorder %s28, 1
        %s476 = scalar_select %p475, %s28, 1
        %s477 = scalar_lea.vmem %s5, %s476
      $region48: #{_lambda_.5} parent=23 // pred_fallthru
        _
      // Predicated region
      $region49: #{_lambda_.5} parent=23 // pred_check
        %p478 = pneg %p208
      $region50: #{_lambda_.5} parent=23 // pred_check_branch
        %480 = sbr.rel (%p478) target = $region52
      $region51: #{_lambda_.5} parent=23 // pred_region
        %p481 = scmp.lt.s32.totalorder %s28, 1
        %s482 = scalar_select %p481, %s28, 1
        %s483 = scalar_lea.vmem %s6, %s482
      $region52: #{_lambda_.5} parent=23 // pred_fallthru
        _
      // Predicated region
      $region53: #{_lambda_.5} parent=23 // pred_check
        %p484 = pneg %p234
      $region54: #{_lambda_.5} parent=23 // pred_check_branch
        %486 = sbr.rel (%p484) target = $region56
      $region55: #{_lambda_.5} parent=23 // pred_region
        %p487 = scmp.lt.s32.totalorder %s28, 1
        %s488 = scalar_select %p487, %s28, 1
        %s489 = scalar_lea.vmem %s7, %s488
      $region56: #{_lambda_.5} parent=23 // pred_fallthru
        _
      // Predicated region
      $region57: #{_lambda_.5} parent=23 // pred_check
        %p490 = pneg %p260
      $region58: #{_lambda_.5} parent=23 // pred_check_branch
        %492 = sbr.rel (%p490) target = $region60
      $region59: #{_lambda_.5} parent=23 // pred_region
        %p493 = scmp.lt.s32.totalorder %s28, 1
        %s494 = scalar_select %p493, %s28, 1
        %s495 = smul.addr %s494, 32
        %s496 = smul.addr %s495, 8
        %s497 = scalar_lea.vmem %s8, %s496
      $region60: #{_lambda_.5} parent=23 // pred_fallthru
        _
      // Predicated region
      $region61: #{_lambda_.5} parent=23 // pred_check
        %p498 = pneg %p286
      $region62: #{_lambda_.5} parent=23 // pred_check_branch
        %500 = sbr.rel (%p498) target = $region64
      $region63: #{_lambda_.5} parent=23 // pred_region
        %p501 = scmp.lt.s32.totalorder %s28, 1
        %s502 = scalar_select %p501, %s28, 1
        %s503 = smul.addr %s502, 2
        %s504 = scalar_lea.vmem %s9, %s503
      $region64: #{_lambda_.5} parent=23 // pred_fallthru
        _
      // Predicated region
      $region65: #{_lambda_.5} parent=23 // pred_check
        %p505 = pneg %p312
      $region66: #{_lambda_.5} parent=23 // pred_check_branch
        %507 = sbr.rel (%p505) target = $region68
      $region67: #{_lambda_.5} parent=23 // pred_region
        %p508 = scmp.lt.s32.totalorder %s28, 1
        %s509 = scalar_select %p508, %s28, 1
        %s510 = smul.addr %s509, 32
        %s511 = smul.addr %s510, 8
        %s512 = scalar_lea.vmem %s10, %s511
      $region68: #{_lambda_.5} parent=23 // pred_fallthru
        _
      // Predicated region
      $region69: #{_lambda_.5} parent=23 // pred_check
        %p513 = pneg %p338
      $region70: #{_lambda_.5} parent=23 // pred_check_branch
        %515 = sbr.rel (%p513) target = $region72
      $region71: #{_lambda_.5} parent=23 // pred_region
        %p516 = scmp.lt.s32.totalorder %s28, 1
        %s517 = scalar_select %p516, %s28, 1
        %s518 = scalar_lea.vmem %s11, %s517
      $region72: #{_lambda_.5} parent=23 // pred_fallthru
        _
    $region24: #{_lambda_.5} parent=5 // pred_fallthru
      _
    %p519 = scmp.le.s32.totalorder 1, %s20
    %p520 = scmp.lt.s32.totalorder %s20, 5
    %p521 = pnand %p519, %p520
    %p522 = pneg %p521
    // Predicated region
    $region73: #{_lambda_.5} parent=5 // pred_check
      _
    $region74: #{_lambda_.5} parent=5 // pred_check_branch
      %524 = sbr.rel (%p521) target = $region76
    $region75: #{_lambda_.5} parent=5 // pred_region
      %s525 = ssub.s32 %s20, 1
      %p526 = scmp.lt.s32.totalorder %s29, 1
      %s527 = scalar_select %p526, %s29, 1
      %s528 = smul.addr %s527, 8
      %s529 = scalar_lea.vmem %s0, %s528
      %p530 = pneg %p58
      %p531 = pneg %p55
      %p532 = scmp.lt.s32.totalorder %s30, 1
      %s533 = scalar_select %p532, %s30, 1
      %s534 = scalar_lea.vmem %s1, %s533
      %p535 = pneg %p84
      %p536 = pneg %p81
      %p537 = scmp.lt.s32.totalorder %s30, 1
      %s538 = scalar_select %p537, %s30, 1
      %s539 = scalar_lea.vmem %s2, %s538
      %p540 = pneg %p110
      %p541 = pneg %p107
      %p542 = scmp.lt.s32.totalorder %s30, 1
      %s543 = scalar_select %p542, %s30, 1
      %s544 = smul.addr %s543, 48
      %s545 = smul.addr %s544, 8
      %s546 = scalar_lea.vmem %s3, %s545
      %p547 = pneg %p136
      %p548 = pneg %p133
      %p549 = scmp.lt.s32.totalorder %s30, 1
      %s550 = scalar_select %p549, %s30, 1
      %s551 = smul.addr %s550, 6
      %s552 = smul.addr %s551, 8
      %s553 = scalar_lea.vmem %s4, %s552
      %p554 = pneg %p162
      %p555 = pneg %p159
      %p556 = scmp.lt.s32.totalorder %s30, 1
      %s557 = scalar_select %p556, %s30, 1
      %s558 = scalar_lea.vmem %s5, %s557
      %p559 = pneg %p188
      %p560 = pneg %p185
      %p561 = scmp.lt.s32.totalorder %s30, 1
      %s562 = scalar_select %p561, %s30, 1
      %s563 = scalar_lea.vmem %s6, %s562
      %p564 = pneg %p214
      %p565 = pneg %p211
      %p566 = scmp.lt.s32.totalorder %s30, 1
      %s567 = scalar_select %p566, %s30, 1
      %s568 = scalar_lea.vmem %s7, %s567
      %p569 = pneg %p240
      %p570 = pneg %p237
      %p571 = scmp.lt.s32.totalorder %s30, 1
      %s572 = scalar_select %p571, %s30, 1
      %s573 = smul.addr %s572, 32
      %s574 = smul.addr %s573, 8
      %s575 = scalar_lea.vmem %s8, %s574
      %p576 = pneg %p266
      %p577 = pneg %p263
      %p578 = scmp.lt.s32.totalorder %s30, 1
      %s579 = scalar_select %p578, %s30, 1
      %s580 = smul.addr %s579, 2
      %s581 = scalar_lea.vmem %s9, %s580
      %p582 = pneg %p292
      %p583 = pneg %p289
      %p584 = scmp.lt.s32.totalorder %s30, 1
      %s585 = scalar_select %p584, %s30, 1
      %s586 = smul.addr %s585, 32
      %s587 = smul.addr %s586, 8
      %s588 = scalar_lea.vmem %s10, %s587
      %p589 = pneg %p318
      %p590 = pneg %p315
      %p591 = scmp.lt.s32.totalorder %s30, 1
      %s592 = scalar_select %p591, %s30, 1
      %s593 = scalar_lea.vmem %s11, %s592
      %p594 = pneg %p344
      %p595 = pneg %p341
      %p596 = pneg %p365
      %p597 = pneg %p362
      %p598 = pneg %p386
      %p599 = pneg %p383
      %p600 = pneg %p412
      %p601 = pneg %p409
      %p602 = scmp.lt.s32.totalorder %s29, 1
      %s603 = scalar_select %p602, %s29, 1
      %s604 = smul.addr %s603, 8
      %s605 = scalar_lea.vmem %s14, %s604
      %p606 = scmp.lt.s32.totalorder %s29, 1
      %s607 = scalar_select %p606, %s29, 1
      %s608 = smul.addr %s607, 8
      %s609 = scalar_lea.vmem %s0, %s608
      %p610 = scmp.lt.s32.totalorder %s30, 1
      %s611 = scalar_select %p610, %s30, 1
      %s612 = scalar_lea.vmem %s1, %s611
      %p613 = scmp.lt.s32.totalorder %s30, 1
      %s614 = scalar_select %p613, %s30, 1
      %s615 = scalar_lea.vmem %s2, %s614
      %p616 = scmp.lt.s32.totalorder %s30, 1
      %s617 = scalar_select %p616, %s30, 1
      %s618 = smul.addr %s617, 48
      %s619 = smul.addr %s618, 8
      %s620 = scalar_lea.vmem %s3, %s619
      %p621 = scmp.lt.s32.totalorder %s30, 1
      %s622 = scalar_select %p621, %s30, 1
      %s623 = smul.addr %s622, 6
      %s624 = smul.addr %s623, 8
      %s625 = scalar_lea.vmem %s4, %s624
      %p626 = scmp.lt.s32.totalorder %s30, 1
      %s627 = scalar_select %p626, %s30, 1
      %s628 = scalar_lea.vmem %s5, %s627
      %p629 = scmp.lt.s32.totalorder %s30, 1
      %s630 = scalar_select %p629, %s30, 1
      %s631 = scalar_lea.vmem %s6, %s630
      %p632 = scmp.lt.s32.totalorder %s30, 1
      %s633 = scalar_select %p632, %s30, 1
      %s634 = scalar_lea.vmem %s7, %s633
      %p635 = scmp.lt.s32.totalorder %s30, 1
      %s636 = scalar_select %p635, %s30, 1
      %s637 = smul.addr %s636, 32
      %s638 = smul.addr %s637, 8
      %s639 = scalar_lea.vmem %s8, %s638
      %p640 = scmp.lt.s32.totalorder %s30, 1
      %s641 = scalar_select %p640, %s30, 1
      %s642 = smul.addr %s641, 2
      %s643 = scalar_lea.vmem %s9, %s642
      %p644 = scmp.lt.s32.totalorder %s30, 1
      %s645 = scalar_select %p644, %s30, 1
      %s646 = smul.addr %s645, 32
      %s647 = smul.addr %s646, 8
      %s648 = scalar_lea.vmem %s10, %s647
      %p649 = scmp.lt.s32.totalorder %s30, 1
      %s650 = scalar_select %p649, %s30, 1
      %s651 = scalar_lea.vmem %s11, %s650
      %p652 = scmp.lt.s32.totalorder %s29, 1
      %s653 = scalar_select %p652, %s29, 1
      %s654 = smul.addr %s653, 8
      %s655 = scalar_lea.vmem %s14, %s654
      %p656 = scmp.eq.s32.totalorder %s30, 0
      // Predicated region
      $region77: #{_lambda_.5} parent=75 // pred_check
        %p657 = pneg %p656
      $region78: #{_lambda_.5} parent=75 // pred_check_branch
        %659 = sbr.rel (%p657) target = $region80
      $region79: #{_lambda_.5} parent=75 // pred_region
        %v660 = vld [vmem:[%s609] sm:$0x1f]
        %661 = vst [vmem:[#allocation2] sm:$0x1f] %v660
      $region80: #{_lambda_.5} parent=75 // pred_fallthru
        _
      %v662 = vld [vmem:[#allocation2] sm:$0x1f]
      %v663 = vld [vmem:[%s612] sm:$0x1]
      %v664 = vld [vmem:[%s615] sm:$0x1]
      %v665 = vld [vmem:[%s620] sm:$0xff]
      %v666 = vld [vmem:[%s620 + $0x8] sm:$0xff]
      %v667 = vld [vmem:[%s620 + $0x10] sm:$0xff]
      %v668 = vld [vmem:[%s620 + $0x18] sm:$0xff]
      %v669 = vld [vmem:[%s620 + $0x20] sm:$0xff]
      %v670 = vld [vmem:[%s620 + $0x28] sm:$0xff]
      %v671 = vld [vmem:[%s620 + $0x30] sm:$0xff]
      %v672 = vld [vmem:[%s620 + $0x38] sm:$0xff]
      %v673 = vld [vmem:[%s620 + $0x40] sm:$0xff]
      %v674 = vld [vmem:[%s620 + $0x48] sm:$0xff]
      %v675 = vld [vmem:[%s620 + $0x50] sm:$0xff]
      %v676 = vld [vmem:[%s620 + $0x58] sm:$0xff]
      %v677 = vld [vmem:[%s620 + $0x60] sm:$0xff]
      %v678 = vld [vmem:[%s620 + $0x68] sm:$0xff]
      %v679 = vld [vmem:[%s620 + $0x70] sm:$0xff]
      %v680 = vld [vmem:[%s620 + $0x78] sm:$0xff]
      %v681 = vld [vmem:[%s620 + $0x80] sm:$0xff]
      %v682 = vld [vmem:[%s620 + $0x88] sm:$0xff]
      %v683 = vld [vmem:[%s620 + $0x90] sm:$0xff]
      %v684 = vld [vmem:[%s620 + $0x98] sm:$0xff]
      %v685 = vld [vmem:[%s620 + $0xa0] sm:$0xff]
      %v686 = vld [vmem:[%s620 + $0xa8] sm:$0xff]
      %v687 = vld [vmem:[%s620 + $0xb0] sm:$0xff]
      %v688 = vld [vmem:[%s620 + $0xb8] sm:$0xff]
      %v689 = vld [vmem:[%s620 + $0xc0] sm:$0xff]
      %v690 = vld [vmem:[%s620 + $0xc8] sm:$0xff]
      %v691 = vld [vmem:[%s620 + $0xd0] sm:$0xff]
      %v692 = vld [vmem:[%s620 + $0xd8] sm:$0xff]
      %v693 = vld [vmem:[%s620 + $0xe0] sm:$0xff]
      %v694 = vld [vmem:[%s620 + $0xe8] sm:$0xff]
      %v695 = vld [vmem:[%s620 + $0xf0] sm:$0xff]
      %v696 = vld [vmem:[%s620 + $0xf8] sm:$0xff]
      %v697 = vld [vmem:[%s620 + $0x100] sm:$0xff]
      %v698 = vld [vmem:[%s620 + $0x108] sm:$0xff]
      %v699 = vld [vmem:[%s620 + $0x110] sm:$0xff]
      %v700 = vld [vmem:[%s620 + $0x118] sm:$0xff]
      %v701 = vld [vmem:[%s620 + $0x120] sm:$0xff]
      %v702 = vld [vmem:[%s620 + $0x128] sm:$0xff]
      %v703 = vld [vmem:[%s620 + $0x130] sm:$0xff]
      %v704 = vld [vmem:[%s620 + $0x138] sm:$0xff]
      %v705 = vld [vmem:[%s620 + $0x140] sm:$0xff]
      %v706 = vld [vmem:[%s620 + $0x148] sm:$0xff]
      %v707 = vld [vmem:[%s620 + $0x150] sm:$0xff]
      %v708 = vld [vmem:[%s620 + $0x158] sm:$0xff]
      %v709 = vld [vmem:[%s620 + $0x160] sm:$0xff]
      %v710 = vld [vmem:[%s620 + $0x168] sm:$0xff]
      %v711 = vld [vmem:[%s620 + $0x170] sm:$0xff]
      %v712 = vld [vmem:[%s620 + $0x178] sm:$0xff]
      %v713 = vld [vmem:[%s625] sm:$0xff]
      %v714 = vld [vmem:[%s625 + $0x8] sm:$0xff]
      %v715 = vld [vmem:[%s625 + $0x10] sm:$0xff]
      %v716 = vld [vmem:[%s625 + $0x18] sm:$0xff]
      %v717 = vld [vmem:[%s625 + $0x20] sm:$0xff]
      %v718 = vld [vmem:[%s625 + $0x28] sm:$0xff]
      %v719 = vld [vmem:[%s628] sm:$0x1]
      %v720 = vld [vmem:[%s631] sm:$0x1]
      %v721 = vld [vmem:[%s634] sm:$0x1]
      %v722 = vld [vmem:[%s639] sm:$0xff]
      %v723 = vld [vmem:[%s639 + $0x8] sm:$0xff]
      %v724 = vld [vmem:[%s639 + $0x10] sm:$0xff]
      %v725 = vld [vmem:[%s639 + $0x18] sm:$0xff]
      %v726 = vld [vmem:[%s639 + $0x20] sm:$0xff]
      %v727 = vld [vmem:[%s639 + $0x28] sm:$0xff]
      %v728 = vld [vmem:[%s639 + $0x30] sm:$0xff]
      %v729 = vld [vmem:[%s639 + $0x38] sm:$0xff]
      %v730 = vld [vmem:[%s639 + $0x40] sm:$0xff]
      %v731 = vld [vmem:[%s639 + $0x48] sm:$0xff]
      %v732 = vld [vmem:[%s639 + $0x50] sm:$0xff]
      %v733 = vld [vmem:[%s639 + $0x58] sm:$0xff]
      %v734 = vld [vmem:[%s639 + $0x60] sm:$0xff]
      %v735 = vld [vmem:[%s639 + $0x68] sm:$0xff]
      %v736 = vld [vmem:[%s639 + $0x70] sm:$0xff]
      %v737 = vld [vmem:[%s639 + $0x78] sm:$0xff]
      %v738 = vld [vmem:[%s639 + $0x80] sm:$0xff]
      %v739 = vld [vmem:[%s639 + $0x88] sm:$0xff]
      %v740 = vld [vmem:[%s639 + $0x90] sm:$0xff]
      %v741 = vld [vmem:[%s639 + $0x98] sm:$0xff]
      %v742 = vld [vmem:[%s639 + $0xa0] sm:$0xff]
      %v743 = vld [vmem:[%s639 + $0xa8] sm:$0xff]
      %v744 = vld [vmem:[%s639 + $0xb0] sm:$0xff]
      %v745 = vld [vmem:[%s639 + $0xb8] sm:$0xff]
      %v746 = vld [vmem:[%s639 + $0xc0] sm:$0xff]
      %v747 = vld [vmem:[%s639 + $0xc8] sm:$0xff]
      %v748 = vld [vmem:[%s639 + $0xd0] sm:$0xff]
      %v749 = vld [vmem:[%s639 + $0xd8] sm:$0xff]
      %v750 = vld [vmem:[%s639 + $0xe0] sm:$0xff]
      %v751 = vld [vmem:[%s639 + $0xe8] sm:$0xff]
      %v752 = vld [vmem:[%s639 + $0xf0] sm:$0xff]
      %v753 = vld [vmem:[%s639 + $0xf8] sm:$0xff]
      %v754 = vld [vmem:[%s643] sm:$0x3]
      %v755 = vld [vmem:[%s648] sm:$0xff]
      %v756 = vld [vmem:[%s648 + $0x8] sm:$0xff]
      %v757 = vld [vmem:[%s648 + $0x10] sm:$0xff]
      %v758 = vld [vmem:[%s648 + $0x18] sm:$0xff]
      %v759 = vld [vmem:[%s648 + $0x20] sm:$0xff]
      %v760 = vld [vmem:[%s648 + $0x28] sm:$0xff]
      %v761 = vld [vmem:[%s648 + $0x30] sm:$0xff]
      %v762 = vld [vmem:[%s648 + $0x38] sm:$0xff]
      %v763 = vld [vmem:[%s648 + $0x40] sm:$0xff]
      %v764 = vld [vmem:[%s648 + $0x48] sm:$0xff]
      %v765 = vld [vmem:[%s648 + $0x50] sm:$0xff]
      %v766 = vld [vmem:[%s648 + $0x58] sm:$0xff]
      %v767 = vld [vmem:[%s648 + $0x60] sm:$0xff]
      %v768 = vld [vmem:[%s648 + $0x68] sm:$0xff]
      %v769 = vld [vmem:[%s648 + $0x70] sm:$0xff]
      %v770 = vld [vmem:[%s648 + $0x78] sm:$0xff]
      %v771 = vld [vmem:[%s648 + $0x80] sm:$0xff]
      %v772 = vld [vmem:[%s648 + $0x88] sm:$0xff]
      %v773 = vld [vmem:[%s648 + $0x90] sm:$0xff]
      %v774 = vld [vmem:[%s648 + $0x98] sm:$0xff]
      %v775 = vld [vmem:[%s648 + $0xa0] sm:$0xff]
      %v776 = vld [vmem:[%s648 + $0xa8] sm:$0xff]
      %v777 = vld [vmem:[%s648 + $0xb0] sm:$0xff]
      %v778 = vld [vmem:[%s648 + $0xb8] sm:$0xff]
      %v779 = vld [vmem:[%s648 + $0xc0] sm:$0xff]
      %v780 = vld [vmem:[%s648 + $0xc8] sm:$0xff]
      %v781 = vld [vmem:[%s648 + $0xd0] sm:$0xff]
      %v782 = vld [vmem:[%s648 + $0xd8] sm:$0xff]
      %v783 = vld [vmem:[%s648 + $0xe0] sm:$0xff]
      %v784 = vld [vmem:[%s648 + $0xe8] sm:$0xff]
      %v785 = vld [vmem:[%s648 + $0xf0] sm:$0xff]
      %v786 = vld [vmem:[%s648 + $0xf8] sm:$0xff]
      %v787 = vld [vmem:[%s651] sm:$0x1]
      %vm788 = vcmask 1044480
      %v789 = vsel %vm788, %v662, 0.0
      %790 = vadd.xlane.f32.xlu0 %v789
      %v791 = vpop.xlane.xlu0 %790
      %v792 = vmul.f32 %v791, 0.020833334
      %v793 = vmul.f32 %v662, %v662
      %v794 = vsel %vm788, %v793, 0.0
      %795 = vadd.xlane.f32.xlu0 %v794
      %v796 = vpop.xlane.xlu0 %795
      %v797 = vmul.f32 %v796, 0.020833334
      %v798 = vmul.f32 %v792, %v792
      %v799 = vsub.f32 %v797, %v798
      %v800 = vsub.f32 %v662, %v792
      %v801 = vadd.f32 %v799, 1e-05
      %v802 = vrsqrt.pop %v801
      %v803 = vmul.f32 %v802, %v801
      %v804 = vmul.f32 %v803, %v802
      %v805 = vmul.f32 0.5, %v804
      %v806 = vsub.f32 1.5, %v805
      %v807 = vmul.f32 %v802, %v806
      %vm808 = vweird.f32 %v801
      %vm809 = vweird.f32 %v802
      %vm810 = vmor %vm808, %vm809
      %v811 = vsel %vm810, %v802, %v807
      %v812 = vmul.f32 %v800, %v811
      %v814 = vperm.slane %v663, 0
      %v816 = vmul.f32 %v812, %v814
      %v818 = vperm.slane %v664, 0
      %v820 = vadd.f32 %v816, %v818
      %821 = vmatpush.msra.mxu0 %v710
      %822 = vmatpush.msra.mxu0 %v707
      %823 = vmatpush.msra.mxu0 %v704
      %824 = vmatpush.msra.mxu0 %v701
      %825 = vmatpush.msra.mxu0 %v698
      %826 = vmatpush.msra.mxu0 %v695
      %827 = vmatpush.msra.mxu0 %v692
      %828 = vmatpush.msra.mxu0 %v689
      %829 = vmatpush.msra.mxu0 %v686
      %830 = vmatpush.msra.mxu0 %v683
      %831 = vmatpush.msra.mxu0 %v680
      %832 = vmatpush.msra.mxu0 %v677
      %833 = vmatpush.msra.mxu0 %v674
      %834 = vmatpush.msra.mxu0 %v671
      %835 = vmatpush.msra.mxu0 %v668
      %836 = vmatpush.msra.mxu0 %v665
      %837 = vmatmul.f32.gmra.mxu0 %v820
      %v838 = vpop.f32.mrf.mxu0
      %v839 = vadd.f32 0.0, %v838
      %840 = vdwg.mxu0
      %841 = vmatpush.msra.mxu0 %v711
      %842 = vmatpush.msra.mxu0 %v708
      %843 = vmatpush.msra.mxu0 %v705
      %844 = vmatpush.msra.mxu0 %v702
      %845 = vmatpush.msra.mxu0 %v699
      %846 = vmatpush.msra.mxu0 %v696
      %847 = vmatpush.msra.mxu0 %v693
      %848 = vmatpush.msra.mxu0 %v690
      %849 = vmatpush.msra.mxu0 %v687
      %850 = vmatpush.msra.mxu0 %v684
      %851 = vmatpush.msra.mxu0 %v681
      %852 = vmatpush.msra.mxu0 %v678
      %853 = vmatpush.msra.mxu0 %v675
      %854 = vmatpush.msra.mxu0 %v672
      %855 = vmatpush.msra.mxu0 %v669
      %856 = vmatpush.msra.mxu0 %v666
      %857 = vmatmul.f32.gmra.mxu0 %v820
      %v858 = vpop.f32.mrf.mxu0
      %v859 = vadd.f32 0.0, %v858
      %860 = vdwg.mxu0
      %861 = vmatpush.msra.mxu0 %v712
      %862 = vmatpush.msra.mxu0 %v709
      %863 = vmatpush.msra.mxu0 %v706
      %864 = vmatpush.msra.mxu0 %v703
      %865 = vmatpush.msra.mxu0 %v700
      %866 = vmatpush.msra.mxu0 %v697
      %867 = vmatpush.msra.mxu0 %v694
      %868 = vmatpush.msra.mxu0 %v691
      %869 = vmatpush.msra.mxu0 %v688
      %870 = vmatpush.msra.mxu0 %v685
      %871 = vmatpush.msra.mxu0 %v682
      %872 = vmatpush.msra.mxu0 %v679
      %873 = vmatpush.msra.mxu0 %v676
      %874 = vmatpush.msra.mxu0 %v673
      %875 = vmatpush.msra.mxu0 %v670
      %876 = vmatpush.msra.mxu0 %v667
      %877 = vmatmul.f32.gmra.mxu0 %v820
      %v878 = vpop.f32.mrf.mxu0
      %v879 = vadd.f32 0.0, %v878
      %880 = vdwg.mxu0
      %vm881 = vcmask 130048
      %v883 = vsel %vm881, %v839, 0
      %v886 = vsel %vm881, %v859, 0
      %888 = vmatpush.xpose.msra.mxu0 0.0
      %889 = vmatpush.xpose.msra.mxu0 0.0
      %890 = vmatpush.xpose.msra.mxu0 0.0
      %891 = vmatpush.xpose.msra.mxu0 0.0
      %892 = vmatpush.xpose.msra.mxu0 0.0
      %893 = vmatpush.xpose.msra.mxu0 0.0
      %894 = vmatpush.xpose.msra.mxu0 0.0
      %895 = vmatpush.xpose.msra.mxu0 0.0
      %896 = vmatpush.xpose.msra.mxu0 0.0
      %897 = vmatpush.xpose.msra.mxu0 0.0
      %898 = vmatpush.xpose.msra.mxu0 0.0
      %899 = vmatpush.xpose.msra.mxu0 0.0
      %900 = vmatpush.xpose.msra.mxu0 0.0
      %901 = vmatpush.xpose.msra.mxu0 0.0
      %902 = vmatpush.xpose.msra.mxu0 0.0
      %903 = vmatpush.xpose.msra.mxu0 %v886
      %904 = vmatmul.f32.gmra.mxu0 %v883
      %v905 = vpop.f32.mrf.mxu0
      %v906 = vadd.f32 0.0, %v905
      %907 = vdwg.mxu0
      %v908 = vmul.f32 %v906, 0.25
      %vm909 = vcmask 36864
      %v910 = vsel %vm909, %v908, -inf
      %911 = vmax.xlane.f32.xlu0 %v910
      %v912 = vpop.xlane.xlu0 %911
      %v913 = vsub.f32 %v908, %v912
      %v914 = vmul.f32 %v913, 1.442695
      %v915 = vpow.pop %v914
      %v916 = vsel %vm909, %v915, 0.0
      %917 = vadd.xlane.f32.xlu0 %v916
      %v918 = vpop.xlane.xlu0 %917
      %v919 = vrcp.pop %v918
      %v920 = vmul.f32 %v915, %v919
      %vm921 = vcmask 39936
      %v923 = vsel %vm921, %v920, 0
      %v926 = vsel %vm788, %v879, 0
      %928 = vmatpush.msra.mxu0 0.0
      %929 = vmatpush.msra.mxu0 0.0
      %930 = vmatpush.msra.mxu0 0.0
      %931 = vmatpush.msra.mxu0 0.0
      %932 = vmatpush.msra.mxu0 0.0
      %933 = vmatpush.msra.mxu0 0.0
      %934 = vmatpush.msra.mxu0 0.0
      %935 = vmatpush.msra.mxu0 0.0
      %936 = vmatpush.msra.mxu0 0.0
      %937 = vmatpush.msra.mxu0 0.0
      %938 = vmatpush.msra.mxu0 0.0
      %939 = vmatpush.msra.mxu0 0.0
      %940 = vmatpush.msra.mxu0 0.0
      %941 = vmatpush.msra.mxu0 0.0
      %942 = vmatpush.msra.mxu0 0.0
      %943 = vmatpush.msra.mxu0 %v926
      %944 = vmatmul.f32.gmra.mxu0 %v923
      %v945 = vpop.f32.mrf.mxu0
      %v946 = vadd.f32 0.0, %v945
      %947 = vdwg.mxu0
      %948 = vrot.lane.b32.xlu0 %v839, 112
      %v949 = vpop.permute.xlu0 %948
      %950 = vrot.lane.b32.xlu0 %v859, 112
      %v951 = vpop.permute.xlu0 %950
      %v952 = vsel %vm881, %v949, 0
      %v954 = vsel %vm881, %v951, 0
      %956 = vmatpush.xpose.msra.mxu0 0.0
      %957 = vmatpush.xpose.msra.mxu0 0.0
      %958 = vmatpush.xpose.msra.mxu0 0.0
      %959 = vmatpush.xpose.msra.mxu0 0.0
      %960 = vmatpush.xpose.msra.mxu0 0.0
      %961 = vmatpush.xpose.msra.mxu0 0.0
      %962 = vmatpush.xpose.msra.mxu0 0.0
      %963 = vmatpush.xpose.msra.mxu0 0.0
      %964 = vmatpush.xpose.msra.mxu0 0.0
      %965 = vmatpush.xpose.msra.mxu0 0.0
      %966 = vmatpush.xpose.msra.mxu0 0.0
      %967 = vmatpush.xpose.msra.mxu0 0.0
      %968 = vmatpush.xpose.msra.mxu0 0.0
      %969 = vmatpush.xpose.msra.mxu0 0.0
      %970 = vmatpush.xpose.msra.mxu0 0.0
      %971 = vmatpush.xpose.msra.mxu0 %v954
      %972 = vmatmul.f32.gmra.mxu0 %v952
      %v973 = vpop.f32.mrf.mxu0
      %v974 = vadd.f32 0.0, %v973
      %975 = vdwg.mxu0
      %v976 = vmul.f32 %v974, 0.25
      %v977 = vsel %vm909, %v976, -inf
      %978 = vmax.xlane.f32.xlu0 %v977
      %v979 = vpop.xlane.xlu0 %978
      %v980 = vsub.f32 %v976, %v979
      %v981 = vmul.f32 %v980, 1.442695
      %v982 = vpow.pop %v981
      %v983 = vsel %vm909, %v982, 0.0
      %984 = vadd.xlane.f32.xlu0 %v983
      %v985 = vpop.xlane.xlu0 %984
      %v986 = vrcp.pop %v985
      %v987 = vmul.f32 %v982, %v986
      %988 = vrot.lane.b32.xlu0 %v879, 112
      %v989 = vpop.permute.xlu0 %988
      %v991 = vsel %vm921, %v987, 0
      %v993 = vsel %vm788, %v989, 0
      %995 = vmatpush.msra.mxu0 0.0
      %996 = vmatpush.msra.mxu0 0.0
      %997 = vmatpush.msra.mxu0 0.0
      %998 = vmatpush.msra.mxu0 0.0
      %999 = vmatpush.msra.mxu0 0.0
      %1000 = vmatpush.msra.mxu0 0.0
      %1001 = vmatpush.msra.mxu0 0.0
      %1002 = vmatpush.msra.mxu0 0.0
      %1003 = vmatpush.msra.mxu0 0.0
      %1004 = vmatpush.msra.mxu0 0.0
      %1005 = vmatpush.msra.mxu0 0.0
      %1006 = vmatpush.msra.mxu0 0.0
      %1007 = vmatpush.msra.mxu0 0.0
      %1008 = vmatpush.msra.mxu0 0.0
      %1009 = vmatpush.msra.mxu0 0.0
      %1010 = vmatpush.msra.mxu0 %v993
      %1011 = vmatmul.f32.gmra.mxu0 %v991
      %v1012 = vpop.f32.mrf.mxu0
      %v1013 = vadd.f32 0.0, %v1012
      %1014 = vdwg.mxu0
      %v1016 = vsel %vm881, %v1013, 0
      %1018 = vmatpush.msra.mxu0 0.0
      %1019 = vmatpush.msra.mxu0 0.0
      %1020 = vmatpush.msra.mxu0 0.0
      %1021 = vmatpush.msra.mxu0 0.0
      %1022 = vmatpush.msra.mxu0 0.0
      %1023 = vmatpush.msra.mxu0 0.0
      %1024 = vmatpush.msra.mxu0 0.0
      %1025 = vmatpush.msra.mxu0 0.0
      %1026 = vmatpush.msra.mxu0 0.0
      %1027 = vmatpush.msra.mxu0 0.0
      %1028 = vmatpush.msra.mxu0 0.0
      %1029 = vmatpush.msra.mxu0 0.0
      %1030 = vmatpush.msra.mxu0 0.0
      %1031 = vmatpush.msra.mxu0 0.0
      %1032 = vmatpush.msra.mxu0 %v716
      %1033 = vmatpush.msra.mxu0 %v715
      %1034 = vmatmul.f32.gmra.mxu0 %v1016
      %v1035 = vpop.f32.mrf.mxu0
      %v1036 = vadd.f32 0.0, %v1035
      %1037 = vdwg.mxu0
      %v1039 = vsel %vm881, %v946, 0
      %1041 = vmatpush.msra.mxu0 0.0
      %1042 = vmatpush.msra.mxu0 0.0
      %1043 = vmatpush.msra.mxu0 0.0
      %1044 = vmatpush.msra.mxu0 0.0
      %1045 = vmatpush.msra.mxu0 0.0
      %1046 = vmatpush.msra.mxu0 0.0
      %1047 = vmatpush.msra.mxu0 0.0
      %1048 = vmatpush.msra.mxu0 0.0
      %1049 = vmatpush.msra.mxu0 0.0
      %1050 = vmatpush.msra.mxu0 0.0
      %1051 = vmatpush.msra.mxu0 0.0
      %1052 = vmatpush.msra.mxu0 0.0
      %1053 = vmatpush.msra.mxu0 0.0
      %1054 = vmatpush.msra.mxu0 0.0
      %1055 = vmatpush.msra.mxu0 %v714
      %1056 = vmatpush.msra.mxu0 %v713
      %1057 = vmatmul.f32.gmra.mxu0 %v1039
      %v1058 = vpop.f32.mrf.mxu0
      %v1059 = vadd.f32 %v1036, %v1058
      %1060 = vdwg.mxu0
      %1061 = vrot.lane.b32.xlu0 %v839, 96
      %v1062 = vpop.permute.xlu0 %1061
      %1063 = vrot.lane.b32.xlu0 %v859, 96
      %v1064 = vpop.permute.xlu0 %1063
      %v1065 = vsel %vm881, %v1062, 0
      %v1067 = vsel %vm881, %v1064, 0
      %1069 = vmatpush.xpose.msra.mxu0 0.0
      %1070 = vmatpush.xpose.msra.mxu0 0.0
      %1071 = vmatpush.xpose.msra.mxu0 0.0
      %1072 = vmatpush.xpose.msra.mxu0 0.0
      %1073 = vmatpush.xpose.msra.mxu0 0.0
      %1074 = vmatpush.xpose.msra.mxu0 0.0
      %1075 = vmatpush.xpose.msra.mxu0 0.0
      %1076 = vmatpush.xpose.msra.mxu0 0.0
      %1077 = vmatpush.xpose.msra.mxu0 0.0
      %1078 = vmatpush.xpose.msra.mxu0 0.0
      %1079 = vmatpush.xpose.msra.mxu0 0.0
      %1080 = vmatpush.xpose.msra.mxu0 0.0
      %1081 = vmatpush.xpose.msra.mxu0 0.0
      %1082 = vmatpush.xpose.msra.mxu0 0.0
      %1083 = vmatpush.xpose.msra.mxu0 0.0
      %1084 = vmatpush.xpose.msra.mxu0 %v1067
      %1085 = vmatmul.f32.gmra.mxu0 %v1065
      %v1086 = vpop.f32.mrf.mxu0
      %v1087 = vadd.f32 0.0, %v1086
      %1088 = vdwg.mxu0
      %v1089 = vmul.f32 %v1087, 0.25
      %v1090 = vsel %vm909, %v1089, -inf
      %1091 = vmax.xlane.f32.xlu0 %v1090
      %v1092 = vpop.xlane.xlu0 %1091
      %v1093 = vsub.f32 %v1089, %v1092
      %v1094 = vmul.f32 %v1093, 1.442695
      %v1095 = vpow.pop %v1094
      %v1096 = vsel %vm909, %v1095, 0.0
      %1097 = vadd.xlane.f32.xlu0 %v1096
      %v1098 = vpop.xlane.xlu0 %1097
      %v1099 = vrcp.pop %v1098
      %v1100 = vmul.f32 %v1095, %v1099
      %1101 = vrot.lane.b32.xlu0 %v879, 96
      %v1102 = vpop.permute.xlu0 %1101
      %v1104 = vsel %vm921, %v1100, 0
      %v1106 = vsel %vm788, %v1102, 0
      %1108 = vmatpush.msra.mxu0 0.0
      %1109 = vmatpush.msra.mxu0 0.0
      %1110 = vmatpush.msra.mxu0 0.0
      %1111 = vmatpush.msra.mxu0 0.0
      %1112 = vmatpush.msra.mxu0 0.0
      %1113 = vmatpush.msra.mxu0 0.0
      %1114 = vmatpush.msra.mxu0 0.0
      %1115 = vmatpush.msra.mxu0 0.0
      %1116 = vmatpush.msra.mxu0 0.0
      %1117 = vmatpush.msra.mxu0 0.0
      %1118 = vmatpush.msra.mxu0 0.0
      %1119 = vmatpush.msra.mxu0 0.0
      %1120 = vmatpush.msra.mxu0 0.0
      %1121 = vmatpush.msra.mxu0 0.0
      %1122 = vmatpush.msra.mxu0 0.0
      %1123 = vmatpush.msra.mxu0 %v1106
      %1124 = vmatmul.f32.gmra.mxu0 %v1104
      %v1125 = vpop.f32.mrf.mxu0
      %v1126 = vadd.f32 0.0, %v1125
      %1127 = vdwg.mxu0
      %v1129 = vsel %vm881, %v1126, 0
      %1131 = vmatpush.msra.mxu0 0.0
      %1132 = vmatpush.msra.mxu0 0.0
      %1133 = vmatpush.msra.mxu0 0.0
      %1134 = vmatpush.msra.mxu0 0.0
      %1135 = vmatpush.msra.mxu0 0.0
      %1136 = vmatpush.msra.mxu0 0.0
      %1137 = vmatpush.msra.mxu0 0.0
      %1138 = vmatpush.msra.mxu0 0.0
      %1139 = vmatpush.msra.mxu0 0.0
      %1140 = vmatpush.msra.mxu0 0.0
      %1141 = vmatpush.msra.mxu0 0.0
      %1142 = vmatpush.msra.mxu0 0.0
      %1143 = vmatpush.msra.mxu0 0.0
      %1144 = vmatpush.msra.mxu0 0.0
      %1145 = vmatpush.msra.mxu0 %v718
      %1146 = vmatpush.msra.mxu0 %v717
      %1147 = vmatmul.f32.gmra.mxu0 %v1129
      %v1148 = vpop.f32.mrf.mxu0
      %v1149 = vadd.f32 0.0, %v1148
      %1150 = vdwg.mxu0
      %v1151 = vadd.f32 %v1059, %v1149
      %v1152 = vadd.f32 %v662, %v1151
      %v1154 = vperm.slane %v719, 0
      %v1156 = vadd.f32 %v1152, %v1154
      %v1157 = vsel %vm788, %v1156, 0.0
      %1158 = vadd.xlane.f32.xlu0 %v1157
      %v1159 = vpop.xlane.xlu0 %1158
      %v1160 = vmul.f32 %v1159, 0.020833334
      %v1161 = vmul.f32 %v1156, %v1156
      %v1162 = vsel %vm788, %v1161, 0.0
      %1163 = vadd.xlane.f32.xlu0 %v1162
      %v1164 = vpop.xlane.xlu0 %1163
      %v1165 = vmul.f32 %v1164, 0.020833334
      %v1166 = vmul.f32 %v1160, %v1160
      %v1167 = vsub.f32 %v1165, %v1166
      %v1168 = vsub.f32 %v1156, %v1160
      %v1169 = vadd.f32 %v1167, 1e-05
      %v1170 = vrsqrt.pop %v1169
      %v1171 = vmul.f32 %v1170, %v1169
      %v1172 = vmul.f32 %v1171, %v1170
      %v1173 = vmul.f32 0.5, %v1172
      %v1174 = vsub.f32 1.5, %v1173
      %v1175 = vmul.f32 %v1170, %v1174
      %vm1176 = vweird.f32 %v1169
      %vm1177 = vweird.f32 %v1170
      %vm1178 = vmor %vm1176, %vm1177
      %v1179 = vsel %vm1178, %v1170, %v1175
      %v1180 = vmul.f32 %v1168, %v1179
      %v1182 = vperm.slane %v720, 0
      %v1184 = vmul.f32 %v1180, %v1182
      %v1186 = vperm.slane %v721, 0
      %v1188 = vadd.f32 %v1184, %v1186
      %v1190 = vperm.slane %v754, 0
      %v1191 = vperm.slane %v754, 1
      %1194 = vmatpush.msra.mxu0 %v752
      %1195 = vmatpush.msra.mxu0 %v750
      %1196 = vmatpush.msra.mxu0 %v748
      %1197 = vmatpush.msra.mxu0 %v746
      %1198 = vmatpush.msra.mxu0 %v744
      %1199 = vmatpush.msra.mxu0 %v742
      %1200 = vmatpush.msra.mxu0 %v740
      %1201 = vmatpush.msra.mxu0 %v738
      %1202 = vmatpush.msra.mxu0 %v736
      %1203 = vmatpush.msra.mxu0 %v734
      %1204 = vmatpush.msra.mxu0 %v732
      %1205 = vmatpush.msra.mxu0 %v730
      %1206 = vmatpush.msra.mxu0 %v728
      %1207 = vmatpush.msra.mxu0 %v726
      %1208 = vmatpush.msra.mxu0 %v724
      %1209 = vmatpush.msra.mxu0 %v722
      %1210 = vmatmul.f32.gmra.mxu0 %v1188
      %v1211 = vpop.f32.mrf.mxu0
      %v1212 = vadd.f32 %v1190, %v1211
      %1213 = vdwg.mxu0
      %1214 = vmatpush.msra.mxu0 %v753
      %1215 = vmatpush.msra.mxu0 %v751
      %1216 = vmatpush.msra.mxu0 %v749
      %1217 = vmatpush.msra.mxu0 %v747
      %1218 = vmatpush.msra.mxu0 %v745
      %1219 = vmatpush.msra.mxu0 %v743
      %1220 = vmatpush.msra.mxu0 %v741
      %1221 = vmatpush.msra.mxu0 %v739
      %1222 = vmatpush.msra.mxu0 %v737
      %1223 = vmatpush.msra.mxu0 %v735
      %1224 = vmatpush.msra.mxu0 %v733
      %1225 = vmatpush.msra.mxu0 %v731
      %1226 = vmatpush.msra.mxu0 %v729
      %1227 = vmatpush.msra.mxu0 %v727
      %1228 = vmatpush.msra.mxu0 %v725
      %1229 = vmatpush.msra.mxu0 %v723
      %1230 = vmatmul.f32.gmra.mxu0 %v1188
      %v1231 = vpop.f32.mrf.mxu0
      %v1232 = vadd.f32 %v1191, %v1231
      %1233 = vdwg.mxu0
      %v1234 = vmul.f32 %v1212, 0.5
      %v1235 = vmul.f32 %v1232, 0.5
      %v1236 = vmul.f32 %v1212, 0.044715
      %v1237 = vmul.f32 %v1232, 0.044715
      %v1238 = vmul.f32 %v1236, %v1212
      %v1239 = vmul.f32 %v1237, %v1232
      %v1240 = vmul.f32 %v1238, %v1212
      %v1241 = vmul.f32 %v1239, %v1232
      %v1242 = vadd.f32 %v1212, %v1240
      %v1243 = vadd.f32 %v1232, %v1241
      %v1244 = vmul.f32 %v1242, 0.7978846
      %v1245 = vmul.f32 %v1243, 0.7978846
      %v1246 = vtanh.pop %v1244
      %v1247 = vtanh.pop %v1245
      %v1248 = vadd.f32 %v1246, 1.0
      %v1249 = vadd.f32 %v1247, 1.0
      %v1250 = vmul.f32 %v1234, %v1248
      %v1251 = vmul.f32 %v1235, %v1249
      %1252 = vmatpush.msra.mxu0 %v770
      %1253 = vmatpush.msra.mxu0 %v769
      %1254 = vmatpush.msra.mxu0 %v768
      %1255 = vmatpush.msra.mxu0 %v767
      %1256 = vmatpush.msra.mxu0 %v766
      %1257 = vmatpush.msra.mxu0 %v765
      %1258 = vmatpush.msra.mxu0 %v764
      %1259 = vmatpush.msra.mxu0 %v763
      %1260 = vmatpush.msra.mxu0 %v762
      %1261 = vmatpush.msra.mxu0 %v761
      %1262 = vmatpush.msra.mxu0 %v760
      %1263 = vmatpush.msra.mxu0 %v759
      %1264 = vmatpush.msra.mxu0 %v758
      %1265 = vmatpush.msra.mxu0 %v757
      %1266 = vmatpush.msra.mxu0 %v756
      %1267 = vmatpush.msra.mxu0 %v755
      %1268 = vmatmul.f32.gmra.mxu0 %v1250
      %v1269 = vpop.f32.mrf.mxu0
      %v1270 = vadd.f32 0.0, %v1269
      %1271 = vdwg.mxu0
      %1272 = vmatpush.msra.mxu0 %v786
      %1273 = vmatpush.msra.mxu0 %v785
      %1274 = vmatpush.msra.mxu0 %v784
      %1275 = vmatpush.msra.mxu0 %v783
      %1276 = vmatpush.msra.mxu0 %v782
      %1277 = vmatpush.msra.mxu0 %v781
      %1278 = vmatpush.msra.mxu0 %v780
      %1279 = vmatpush.msra.mxu0 %v779
      %1280 = vmatpush.msra.mxu0 %v778
      %1281 = vmatpush.msra.mxu0 %v777
      %1282 = vmatpush.msra.mxu0 %v776
      %1283 = vmatpush.msra.mxu0 %v775
      %1284 = vmatpush.msra.mxu0 %v774
      %1285 = vmatpush.msra.mxu0 %v773
      %1286 = vmatpush.msra.mxu0 %v772
      %1287 = vmatpush.msra.mxu0 %v771
      %1288 = vmatmul.f32.gmra.mxu0 %v1251
      %v1289 = vpop.f32.mrf.mxu0
      %v1290 = vadd.f32 %v1270, %v1289
      %1291 = vdwg.mxu0
      %v1292 = vadd.f32 %v1156, %v1290
      %v1294 = vperm.slane %v787, 0
      %v1296 = vadd.f32 %v1292, %v1294
      %1297 = vst [vmem:[#allocation2] sm:$0x1f] %v1296
      %p1298 = scmp.eq.s32.totalorder %s30, 1
      // Predicated region
      $region81: #{_lambda_.5} parent=75 // pred_check
        %p1299 = pneg %p1298
      $region82: #{_lambda_.5} parent=75 // pred_check_branch
        %1301 = sbr.rel (%p1299) target = $region84
      $region83: #{_lambda_.5} parent=75 // pred_region
        %v1302 = vld [vmem:[#allocation2] sm:$0x1f]
        %v1303 = vld [vmem:[%s12] sm:$0x1]
        %v1304 = vld [vmem:[%s13] sm:$0x1]
        %v1305 = vsel %vm788, %v1302, 0.0
        %1306 = vadd.xlane.f32.xlu0 %v1305
        %v1307 = vpop.xlane.xlu0 %1306
        %v1308 = vmul.f32 %v1307, 0.020833334
        %v1309 = vmul.f32 %v1302, %v1302
        %v1310 = vsel %vm788, %v1309, 0.0
        %1311 = vadd.xlane.f32.xlu0 %v1310
        %v1312 = vpop.xlane.xlu0 %1311
        %v1313 = vmul.f32 %v1312, 0.020833334
        %v1314 = vmul.f32 %v1308, %v1308
        %v1315 = vsub.f32 %v1313, %v1314
        %v1316 = vsub.f32 %v1302, %v1308
        %v1317 = vadd.f32 %v1315, 1e-05
        %v1318 = vrsqrt.pop %v1317
        %v1319 = vmul.f32 %v1318, %v1317
        %v1320 = vmul.f32 %v1319, %v1318
        %v1321 = vmul.f32 0.5, %v1320
        %v1322 = vsub.f32 1.5, %v1321
        %v1323 = vmul.f32 %v1318, %v1322
        %vm1324 = vweird.f32 %v1317
        %vm1325 = vweird.f32 %v1318
        %vm1326 = vmor %vm1324, %vm1325
        %v1327 = vsel %vm1326, %v1318, %v1323
        %v1328 = vmul.f32 %v1316, %v1327
        %v1330 = vperm.slane %v1303, 0
        %v1332 = vmul.f32 %v1328, %v1330
        %v1334 = vperm.slane %v1304, 0
        %v1336 = vadd.f32 %v1332, %v1334
        %1337 = vst [vmem:[%s655] sm:$0x1f] %v1336
      $region84: #{_lambda_.5} parent=75 // pred_fallthru
        _
      %p1338 = scmp.lt.s32.totalorder %s29, 1
      %s1339 = scalar_select %p1338, %s29, 1
      %s1340 = smul.addr %s1339, 8
      %s1341 = scalar_lea.vmem %s14, %s1340
      // Predicated region
      $region85: #{_lambda_.5} parent=75 // pred_check
        %p1342 = pneg %p409
      $region86: #{_lambda_.5} parent=75 // pred_check_branch
        %1344 = sbr.rel (%p1342) target = $region88
      $region87: #{_lambda_.5} parent=75 // pred_region
        _
      $region88: #{_lambda_.5} parent=75 // pred_fallthru
        _
    $region76: #{_lambda_.5} parent=5 // pred_fallthru
      _
    %p1345 = scmp.le.s32.totalorder 2, %s20
    // Predicated region
    $region89: #{_lambda_.5} parent=5 // pred_check
      %p1346 = pneg %p1345
    $region90: #{_lambda_.5} parent=5 // pred_check_branch
      %1348 = sbr.rel (%p1346) target = $region92
    $region91: #{_lambda_.5} parent=5 // pred_region
      %s1349 = ssub.s32 %s20, 2
      // Predicated region
      $region93: #{_lambda_.5} parent=91 // pred_check
        %p1350 = pneg %p415
      $region94: #{_lambda_.5} parent=91 // pred_check_branch
        %1352 = sbr.rel (%p1350) target = $region96
      $region95: #{_lambda_.5} parent=91 // pred_region
        %p1353 = scmp.lt.s32.totalorder %s31, 1
        %s1354 = scalar_select %p1353, %s31, 1
        %s1355 = smul.addr %s1354, 8
        %s1356 = scalar_lea.vmem %s14, %s1355
      $region96: #{_lambda_.5} parent=91 // pred_fallthru
        _
    $region92: #{_lambda_.5} parent=5 // pred_fallthru
      _
  $region6: #{_lambda_.5} parent=0 // loop_footer
    %s24 = sadd.s32 1, %s20
  $region7: #{_lambda_.5} parent=0 // loop_footer_branch
    %19 = sbr.rel target = $region3
  $region8: #{_lambda_.5} parent=0 // loop_exit
    _

// kernel: _lambda_.7
$region0: #{_lambda_.7}
  #allocation0 [shape = 'u32[]', space=smem, size = 0x4, offset = 0x4, fixed_abs, tag = 'smem constant byte address 0x4 - core index']
  #allocation1 [shape = 'u32[72,128]{1,0:T(1,128)}', space=vmem, size = 0x9000, scoped, tag = 'internal scratch']
  #allocation2 [shape = 'f32[17,128]{1,0:T(8,128)}', space=vmem, size = 0x3000, scoped, tag = 'scratch operand']
  %s0 = inlined_call_operand.vmem [shape: f32[2,17,128], index: 0, kind: input, shape index: {}]
  %s1 = inlined_call_operand.vmem [shape: f32[2,1,128], index: 1, kind: input, shape index: {}]
  %s2 = inlined_call_operand.vmem [shape: f32[2,1,128], index: 2, kind: input, shape index: {}]
  %s3 = inlined_call_operand.vmem [shape: f32[2,128,384], index: 3, kind: input, shape index: {}]
  %s4 = inlined_call_operand.vmem [shape: f32[2,48,128], index: 4, kind: input, shape index: {}]
  %s5 = inlined_call_operand.vmem [shape: f32[2,1,128], index: 5, kind: input, shape index: {}]
  %s6 = inlined_call_operand.vmem [shape: f32[2,1,128], index: 6, kind: input, shape index: {}]
  %s7 = inlined_call_operand.vmem [shape: f32[2,1,128], index: 7, kind: input, shape index: {}]
  %s8 = inlined_call_operand.vmem [shape: f32[2,128,256], index: 8, kind: input, shape index: {}]
  %s9 = inlined_call_operand.vmem [shape: f32[2,1,256], index: 9, kind: input, shape index: {}]
  %s10 = inlined_call_operand.vmem [shape: f32[2,256,128], index: 10, kind: input, shape index: {}]
  %s11 = inlined_call_operand.vmem [shape: f32[2,1,128], index: 11, kind: input, shape index: {}]
  %s12 = inlined_call_operand.vmem [shape: f32[128,128], index: 12, kind: input, shape index: {}]
  %s13 = inlined_call_operand.vmem [shape: f32[1,128], index: 13, kind: input, shape index: {}]
  %s14 = inlined_call_operand.vmem [shape: f32[2,17,128], index: 14, kind: output, shape index: {}]
  %s15 = sld [smem:[#allocation0]]
  $region97: #{_lambda_.7} parent=0
    _
  %s17 = ssub.s32 1, %s15
  %s18 = scalar_select 0, %s17, %s15
  loop: start=0, step=1, limit=6
  $region2: #{_lambda_.7} parent=0 // loop_pre_header
    _
  $region3: #{_lambda_.7} parent=0 // loop_header
    %s20 = sphi 0, %s24
    %p21 = scmp.ge.s32.totalorder %s20, 6
    %s27 = sphi 0, %s39
    %s28 = sphi 0, %s35
    %s29 = sphi 0, %s27
    %s30 = sphi 0, %s28
    %s31 = sphi 0, %s29
    %s32 = sphi 0, %s30
    %s42 = sphi 0, %s44
    %s45 = sphi 0, %s42
    %s46 = sphi 0, %s45
    %s62 = sphi 0, %s46
    %s68 = sphi 0, %s70
    %s71 = sphi 0, %s68
    %s72 = sphi 0, %s71
    %s88 = sphi 0, %s72
    %s94 = sphi 0, %s96
    %s97 = sphi 0, %s94
    %s98 = sphi 0, %s97
    %s114 = sphi 0, %s98
    %s120 = sphi 0, %s122
    %s123 = sphi 0, %s120
    %s124 = sphi 0, %s123
    %s140 = sphi 0, %s124
    %s146 = sphi 0, %s148
    %s149 = sphi 0, %s146
    %s150 = sphi 0, %s149
    %s166 = sphi 0, %s150
    %s172 = sphi 0, %s174
    %s175 = sphi 0, %s172
    %s176 = sphi 0, %s175
    %s192 = sphi 0, %s176
    %s198 = sphi 0, %s200
    %s201 = sphi 0, %s198
    %s202 = sphi 0, %s201
    %s218 = sphi 0, %s202
    %s224 = sphi 0, %s226
    %s227 = sphi 0, %s224
    %s228 = sphi 0, %s227
    %s244 = sphi 0, %s228
    %s250 = sphi 0, %s252
    %s253 = sphi 0, %s250
    %s254 = sphi 0, %s253
    %s270 = sphi 0, %s254
    %s276 = sphi 0, %s278
    %s279 = sphi 0, %s276
    %s280 = sphi 0, %s279
    %s296 = sphi 0, %s280
    %s302 = sphi 0, %s304
    %s305 = sphi 0, %s302
    %s306 = sphi 0, %s305
    %s322 = sphi 0, %s306
    %s328 = sphi 0, %s330
    %s331 = sphi 0, %s328
    %s332 = sphi 0, %s331
    %s348 = sphi 0, %s332
    %s352 = sphi 0, %s352
    %s354 = sphi 0, %s352
    %s355 = sphi 0, %s354
    %s369 = sphi 0, %s355
    %s373 = sphi 0, %s373
    %s375 = sphi 0, %s373
    %s376 = sphi 0, %s375
    %s390 = sphi 0, %s376
    %s396 = sphi 0, %s398
    %s399 = sphi 0, %s396
    %s400 = sphi 0, %s399
    %s416 = sphi 0, %s400
  $region4: #{_lambda_.7} parent=0 // loop_header_branch
    %23 = sbr.rel (%p21) target = $region8
  $region5: #{_lambda_.7} parent=0 // loop_body
    %s25 = ssub.s32 %s20, 1
    %s26 = ssub.s32 %s20, 2
    %s33 = sadd.s32 1, %s28
    %p34 = scmp.ge.s32.totalorder %s33, 2
    %s35 = scalar_select %p34, 0, %s33
    %s36 = sadd.s32 1, %s27
    %s37 = scalar_select %p34, %s36, %s27
    %p38 = scmp.ge.s32.totalorder %s37, 2
    %s39 = scalar_select %p38, 0, %s37
    %s40 = ssub.s32 %s27, %s39
    %p41 = scmp.eq.s32.totalorder %s40, 0
    %s43 = sadd.s32 %s42, 1
    %s44 = scalar_select %p41, %s42, %s43
    %p47 = pneg %p41
    %p48 = scmp.eq.s32.totalorder %s20, 3
    %p49 = por %p47, %p48
    %p50 = scmp.ne.s32.totalorder %s42, %s45
    %p51 = scmp.eq.s32.totalorder %s20, 0
    %p52 = por %p50, %p51
    %p53 = scmp.ne.s32.totalorder %s42, %s45
    %p54 = scmp.eq.s32.totalorder %s25, 3
    %p55 = por %p53, %p54
    %p56 = scmp.ne.s32.totalorder %s45, %s46
    %p57 = scmp.eq.s32.totalorder %s25, 0
    %p58 = por %p56, %p57
    %p59 = scmp.ne.s32.totalorder %s45, %s46
    %p60 = scmp.eq.s32.totalorder %s26, 3
    %p61 = por %p59, %p60
    %p63 = scmp.ne.s32.totalorder %s46, %s62
    %p64 = scmp.eq.s32.totalorder %s26, 0
    %p65 = por %p63, %p64
    %s66 = ssub.s32 %s28, %s35
    %p67 = scmp.eq.s32.totalorder %s66, 0
    %s69 = sadd.s32 %s68, 1
    %s70 = scalar_select %p67, %s68, %s69
    %p73 = pneg %p67
    %p74 = scmp.eq.s32.totalorder %s20, 3
    %p75 = por %p73, %p74
    %p76 = scmp.ne.s32.totalorder %s68, %s71
    %p77 = scmp.eq.s32.totalorder %s20, 0
    %p78 = por %p76, %p77
    %p79 = scmp.ne.s32.totalorder %s68, %s71
    %p80 = scmp.eq.s32.totalorder %s25, 3
    %p81 = por %p79, %p80
    %p82 = scmp.ne.s32.totalorder %s71, %s72
    %p83 = scmp.eq.s32.totalorder %s25, 0
    %p84 = por %p82, %p83
    %p85 = scmp.ne.s32.totalorder %s71, %s72
    %p86 = scmp.eq.s32.totalorder %s26, 3
    %p87 = por %p85, %p86
    %p89 = scmp.ne.s32.totalorder %s72, %s88
    %p90 = scmp.eq.s32.totalorder %s26, 0
    %p91 = por %p89, %p90
    %s92 = ssub.s32 %s28, %s35
    %p93 = scmp.eq.s32.totalorder %s92, 0
    %s95 = sadd.s32 %s94, 1
    %s96 = scalar_select %p93, %s94, %s95
    %p99 = pneg %p93
    %p100 = scmp.eq.s32.totalorder %s20, 3
    %p101 = por %p99, %p100
    %p102 = scmp.ne.s32.totalorder %s94, %s97
    %p103 = scmp.eq.s32.totalorder %s20, 0
    %p104 = por %p102, %p103
    %p105 = scmp.ne.s32.totalorder %s94, %s97
    %p106 = scmp.eq.s32.totalorder %s25, 3
    %p107 = por %p105, %p106
    %p108 = scmp.ne.s32.totalorder %s97, %s98
    %p109 = scmp.eq.s32.totalorder %s25, 0
    %p110 = por %p108, %p109
    %p111 = scmp.ne.s32.totalorder %s97, %s98
    %p112 = scmp.eq.s32.totalorder %s26, 3
    %p113 = por %p111, %p112
    %p115 = scmp.ne.s32.totalorder %s98, %s114
    %p116 = scmp.eq.s32.totalorder %s26, 0
    %p117 = por %p115, %p116
    %s118 = ssub.s32 %s28, %s35
    %p119 = scmp.eq.s32.totalorder %s118, 0
    %s121 = sadd.s32 %s120, 1
    %s122 = scalar_select %p119, %s120, %s121
    %p125 = pneg %p119
    %p126 = scmp.eq.s32.totalorder %s20, 3
    %p127 = por %p125, %p126
    %p128 = scmp.ne.s32.totalorder %s120, %s123
    %p129 = scmp.eq.s32.totalorder %s20, 0
    %p130 = por %p128, %p129
    %p131 = scmp.ne.s32.totalorder %s120, %s123
    %p132 = scmp.eq.s32.totalorder %s25, 3
    %p133 = por %p131, %p132
    %p134 = scmp.ne.s32.totalorder %s123, %s124
    %p135 = scmp.eq.s32.totalorder %s25, 0
    %p136 = por %p134, %p135
    %p137 = scmp.ne.s32.totalorder %s123, %s124
    %p138 = scmp.eq.s32.totalorder %s26, 3
    %p139 = por %p137, %p138
    %p141 = scmp.ne.s32.totalorder %s124, %s140
    %p142 = scmp.eq.s32.totalorder %s26, 0
    %p143 = por %p141, %p142
    %s144 = ssub.s32 %s28, %s35
    %p145 = scmp.eq.s32.totalorder %s144, 0
    %s147 = sadd.s32 %s146, 1
    %s148 = scalar_select %p145, %s146, %s147
    %p151 = pneg %p145
    %p152 = scmp.eq.s32.totalorder %s20, 3
    %p153 = por %p151, %p152
    %p154 = scmp.ne.s32.totalorder %s146, %s149
    %p155 = scmp.eq.s32.totalorder %s20, 0
    %p156 = por %p154, %p155
    %p157 = scmp.ne.s32.totalorder %s146, %s149
    %p158 = scmp.eq.s32.totalorder %s25, 3
    %p159 = por %p157, %p158
    %p160 = scmp.ne.s32.totalorder %s149, %s150
    %p161 = scmp.eq.s32.totalorder %s25, 0
    %p162 = por %p160, %p161
    %p163 = scmp.ne.s32.totalorder %s149, %s150
    %p164 = scmp.eq.s32.totalorder %s26, 3
    %p165 = por %p163, %p164
    %p167 = scmp.ne.s32.totalorder %s150, %s166
    %p168 = scmp.eq.s32.totalorder %s26, 0
    %p169 = por %p167, %p168
    %s170 = ssub.s32 %s28, %s35
    %p171 = scmp.eq.s32.totalorder %s170, 0
    %s173 = sadd.s32 %s172, 1
    %s174 = scalar_select %p171, %s172, %s173
    %p177 = pneg %p171
    %p178 = scmp.eq.s32.totalorder %s20, 3
    %p179 = por %p177, %p178
    %p180 = scmp.ne.s32.totalorder %s172, %s175
    %p181 = scmp.eq.s32.totalorder %s20, 0
    %p182 = por %p180, %p181
    %p183 = scmp.ne.s32.totalorder %s172, %s175
    %p184 = scmp.eq.s32.totalorder %s25, 3
    %p185 = por %p183, %p184
    %p186 = scmp.ne.s32.totalorder %s175, %s176
    %p187 = scmp.eq.s32.totalorder %s25, 0
    %p188 = por %p186, %p187
    %p189 = scmp.ne.s32.totalorder %s175, %s176
    %p190 = scmp.eq.s32.totalorder %s26, 3
    %p191 = por %p189, %p190
    %p193 = scmp.ne.s32.totalorder %s176, %s192
    %p194 = scmp.eq.s32.totalorder %s26, 0
    %p195 = por %p193, %p194
    %s196 = ssub.s32 %s28, %s35
    %p197 = scmp.eq.s32.totalorder %s196, 0
    %s199 = sadd.s32 %s198, 1
    %s200 = scalar_select %p197, %s198, %s199
    %p203 = pneg %p197
    %p204 = scmp.eq.s32.totalorder %s20, 3
    %p205 = por %p203, %p204
    %p206 = scmp.ne.s32.totalorder %s198, %s201
    %p207 = scmp.eq.s32.totalorder %s20, 0
    %p208 = por %p206, %p207
    %p209 = scmp.ne.s32.totalorder %s198, %s201
    %p210 = scmp.eq.s32.totalorder %s25, 3
    %p211 = por %p209, %p210
    %p212 = scmp.ne.s32.totalorder %s201, %s202
    %p213 = scmp.eq.s32.totalorder %s25, 0
    %p214 = por %p212, %p213
    %p215 = scmp.ne.s32.totalorder %s201, %s202
    %p216 = scmp.eq.s32.totalorder %s26, 3
    %p217 = por %p215, %p216
    %p219 = scmp.ne.s32.totalorder %s202, %s218
    %p220 = scmp.eq.s32.totalorder %s26, 0
    %p221 = por %p219, %p220
    %s222 = ssub.s32 %s28, %s35
    %p223 = scmp.eq.s32.totalorder %s222, 0
    %s225 = sadd.s32 %s224, 1
    %s226 = scalar_select %p223, %s224, %s225
    %p229 = pneg %p223
    %p230 = scmp.eq.s32.totalorder %s20, 3
    %p231 = por %p229, %p230
    %p232 = scmp.ne.s32.totalorder %s224, %s227
    %p233 = scmp.eq.s32.totalorder %s20, 0
    %p234 = por %p232, %p233
    %p235 = scmp.ne.s32.totalorder %s224, %s227
    %p236 = scmp.eq.s32.totalorder %s25, 3
    %p237 = por %p235, %p236
    %p238 = scmp.ne.s32.totalorder %s227, %s228
    %p239 = scmp.eq.s32.totalorder %s25, 0
    %p240 = por %p238, %p239
    %p241 = scmp.ne.s32.totalorder %s227, %s228
    %p242 = scmp.eq.s32.totalorder %s26, 3
    %p243 = por %p241, %p242
    %p245 = scmp.ne.s32.totalorder %s228, %s244
    %p246 = scmp.eq.s32.totalorder %s26, 0
    %p247 = por %p245, %p246
    %s248 = ssub.s32 %s28, %s35
    %p249 = scmp.eq.s32.totalorder %s248, 0
    %s251 = sadd.s32 %s250, 1
    %s252 = scalar_select %p249, %s250, %s251
    %p255 = pneg %p249
    %p256 = scmp.eq.s32.totalorder %s20, 3
    %p257 = por %p255, %p256
    %p258 = scmp.ne.s32.totalorder %s250, %s253
    %p259 = scmp.eq.s32.totalorder %s20, 0
    %p260 = por %p258, %p259
    %p261 = scmp.ne.s32.totalorder %s250, %s253
    %p262 = scmp.eq.s32.totalorder %s25, 3
    %p263 = por %p261, %p262
    %p264 = scmp.ne.s32.totalorder %s253, %s254
    %p265 = scmp.eq.s32.totalorder %s25, 0
    %p266 = por %p264, %p265
    %p267 = scmp.ne.s32.totalorder %s253, %s254
    %p268 = scmp.eq.s32.totalorder %s26, 3
    %p269 = por %p267, %p268
    %p271 = scmp.ne.s32.totalorder %s254, %s270
    %p272 = scmp.eq.s32.totalorder %s26, 0
    %p273 = por %p271, %p272
    %s274 = ssub.s32 %s28, %s35
    %p275 = scmp.eq.s32.totalorder %s274, 0
    %s277 = sadd.s32 %s276, 1
    %s278 = scalar_select %p275, %s276, %s277
    %p281 = pneg %p275
    %p282 = scmp.eq.s32.totalorder %s20, 3
    %p283 = por %p281, %p282
    %p284 = scmp.ne.s32.totalorder %s276, %s279
    %p285 = scmp.eq.s32.totalorder %s20, 0
    %p286 = por %p284, %p285
    %p287 = scmp.ne.s32.totalorder %s276, %s279
    %p288 = scmp.eq.s32.totalorder %s25, 3
    %p289 = por %p287, %p288
    %p290 = scmp.ne.s32.totalorder %s279, %s280
    %p291 = scmp.eq.s32.totalorder %s25, 0
    %p292 = por %p290, %p291
    %p293 = scmp.ne.s32.totalorder %s279, %s280
    %p294 = scmp.eq.s32.totalorder %s26, 3
    %p295 = por %p293, %p294
    %p297 = scmp.ne.s32.totalorder %s280, %s296
    %p298 = scmp.eq.s32.totalorder %s26, 0
    %p299 = por %p297, %p298
    %s300 = ssub.s32 %s28, %s35
    %p301 = scmp.eq.s32.totalorder %s300, 0
    %s303 = sadd.s32 %s302, 1
    %s304 = scalar_select %p301, %s302, %s303
    %p307 = pneg %p301
    %p308 = scmp.eq.s32.totalorder %s20, 3
    %p309 = por %p307, %p308
    %p310 = scmp.ne.s32.totalorder %s302, %s305
    %p311 = scmp.eq.s32.totalorder %s20, 0
    %p312 = por %p310, %p311
    %p313 = scmp.ne.s32.totalorder %s302, %s305
    %p314 = scmp.eq.s32.totalorder %s25, 3
    %p315 = por %p313, %p314
    %p316 = scmp.ne.s32.totalorder %s305, %s306
    %p317 = scmp.eq.s32.totalorder %s25, 0
    %p318 = por %p316, %p317
    %p319 = scmp.ne.s32.totalorder %s305, %s306
    %p320 = scmp.eq.s32.totalorder %s26, 3
    %p321 = por %p319, %p320
    %p323 = scmp.ne.s32.totalorder %s306, %s322
    %p324 = scmp.eq.s32.totalorder %s26, 0
    %p325 = por %p323, %p324
    %s326 = ssub.s32 %s28, %s35
    %p327 = scmp.eq.s32.totalorder %s326, 0
    %s329 = sadd.s32 %s328, 1
    %s330 = scalar_select %p327, %s328, %s329
    %p333 = pneg %p327
    %p334 = scmp.eq.s32.totalorder %s20, 3
    %p335 = por %p333, %p334
    %p336 = scmp.ne.s32.totalorder %s328, %s331
    %p337 = scmp.eq.s32.totalorder %s20, 0
    %p338 = por %p336, %p337
    %p339 = scmp.ne.s32.totalorder %s328, %s331
    %p340 = scmp.eq.s32.totalorder %s25, 3
    %p341 = por %p339, %p340
    %p342 = scmp.ne.s32.totalorder %s331, %s332
    %p343 = scmp.eq.s32.totalorder %s25, 0
    %p344 = por %p342, %p343
    %p345 = scmp.ne.s32.totalorder %s331, %s332
    %p346 = scmp.eq.s32.totalorder %s26, 3
    %p347 = por %p345, %p346
    %p349 = scmp.ne.s32.totalorder %s332, %s348
    %p350 = scmp.eq.s32.totalorder %s26, 0
    %p351 = por %p349, %p350
    %s353 = sadd.s32 %s352, 1
    %p356 = scmp.eq.s32.totalorder %s20, 3
    %p357 = scmp.ne.s32.totalorder %s352, %s354
    %p358 = scmp.eq.s32.totalorder %s20, 0
    %p359 = por %p357, %p358
    %p360 = scmp.ne.s32.totalorder %s352, %s354
    %p361 = scmp.eq.s32.totalorder %s25, 3
    %p362 = por %p360, %p361
    %p363 = scmp.ne.s32.totalorder %s354, %s355
    %p364 = scmp.eq.s32.totalorder %s25, 0
    %p365 = por %p363, %p364
    %p366 = scmp.ne.s32.totalorder %s354, %s355
    %p367 = scmp.eq.s32.totalorder %s26, 3
    %p368 = por %p366, %p367
    %p370 = scmp.ne.s32.totalorder %s355, %s369
    %p371 = scmp.eq.s32.totalorder %s26, 0
    %p372 = por %p370, %p371
    %s374 = sadd.s32 %s373, 1
    %p377 = scmp.eq.s32.totalorder %s20, 3
    %p378 = scmp.ne.s32.totalorder %s373, %s375
    %p379 = scmp.eq.s32.totalorder %s20, 0
    %p380 = por %p378, %p379
    %p381 = scmp.ne.s32.totalorder %s373, %s375
    %p382 = scmp.eq.s32.totalorder %s25, 3
    %p383 = por %p381, %p382
    %p384 = scmp.ne.s32.totalorder %s375, %s376
    %p385 = scmp.eq.s32.totalorder %s25, 0
    %p386 = por %p384, %p385
    %p387 = scmp.ne.s32.totalorder %s375, %s376
    %p388 = scmp.eq.s32.totalorder %s26, 3
    %p389 = por %p387, %p388
    %p391 = scmp.ne.s32.totalorder %s376, %s390
    %p392 = scmp.eq.s32.totalorder %s26, 0
    %p393 = por %p391, %p392
    %s394 = ssub.s32 %s27, %s39
    %p395 = scmp.eq.s32.totalorder %s394, 0
    %s397 = sadd.s32 %s396, 1
    %s398 = scalar_select %p395, %s396, %s397
    %p401 = pneg %p395
    %p402 = scmp.eq.s32.totalorder %s20, 3
    %p403 = por %p401, %p402
    %p404 = scmp.ne.s32.totalorder %s396, %s399
    %p405 = scmp.eq.s32.totalorder %s20, 0
    %p406 = por %p404, %p405
    %p407 = scmp.ne.s32.totalorder %s396, %s399
    %p408 = scmp.eq.s32.totalorder %s25, 3
    %p409 = por %p407, %p408
    %p410 = scmp.ne.s32.totalorder %s399, %s400
    %p411 = scmp.eq.s32.totalorder %s25, 0
    %p412 = por %p410, %p411
    %p413 = scmp.ne.s32.totalorder %s399, %s400
    %p414 = scmp.eq.s32.totalorder %s26, 3
    %p415 = por %p413, %p414
    %p417 = scmp.ne.s32.totalorder %s400, %s416
    %p418 = scmp.eq.s32.totalorder %s26, 0
    %p419 = por %p417, %p418
    %p420 = scmp.le.s32.totalorder 1, %s20
    %p421 = scmp.lt.s32.totalorder %s20, 5
    %p422 = pnand %p420, %p421
    %p423 = pneg %p422
    // Predicated region
    $region9: #{_lambda_.7} parent=5 // pred_check
      _
    $region10: #{_lambda_.7} parent=5 // pred_check_branch
      %425 = sbr.rel (%p422) target = $region12
    $region11: #{_lambda_.7} parent=5 // pred_region
      %s426 = ssub.s32 %s20, 1
      // Predicated region
      $region13: #{_lambda_.7} parent=11 // pred_check
        %p427 = pneg %p365
      $region14: #{_lambda_.7} parent=11 // pred_check_branch
        %429 = sbr.rel (%p427) target = $region16
      $region15: #{_lambda_.7} parent=11 // pred_region
        _
      $region16: #{_lambda_.7} parent=11 // pred_fallthru
        _
      // Predicated region
      $region17: #{_lambda_.7} parent=11 // pred_check
        %p430 = pneg %p386
      $region18: #{_lambda_.7} parent=11 // pred_check_branch
        %432 = sbr.rel (%p430) target = $region20
      $region19: #{_lambda_.7} parent=11 // pred_region
        _
      $region20: #{_lambda_.7} parent=11 // pred_fallthru
        _
    $region12: #{_lambda_.7} parent=5 // pred_fallthru
      _
    %p433 = scmp.lt.s32.totalorder %s20, 4
    // Predicated region
    $region21: #{_lambda_.7} parent=5 // pred_check
      %p434 = pneg %p433
    $region22: #{_lambda_.7} parent=5 // pred_check_branch
      %436 = sbr.rel (%p434) target = $region24
    $region23: #{_lambda_.7} parent=5 // pred_region
      // Predicated region
      $region25: #{_lambda_.7} parent=23 // pred_check
        %p437 = pneg %p52
      $region26: #{_lambda_.7} parent=23 // pred_check_branch
        %439 = sbr.rel (%p437) target = $region28
      $region27: #{_lambda_.7} parent=23 // pred_region
        %p440 = scmp.lt.s32.totalorder %s27, 1
        %s441 = scalar_select %p440, %s27, 1
        %s442 = smul.addr %s441, 3
        %s443 = smul.addr %s442, 8
        %s444 = scalar_lea.vmem %s0, %s443
      $region28: #{_lambda_.7} parent=23 // pred_fallthru
        _
      // Predicated region
      $region29: #{_lambda_.7} parent=23 // pred_check
        %p445 = pneg %p78
      $region30: #{_lambda_.7} parent=23 // pred_check_branch
        %447 = sbr.rel (%p445) target = $region32
      $region31: #{_lambda_.7} parent=23 // pred_region
        %p448 = scmp.lt.s32.totalorder %s28, 1
        %s449 = scalar_select %p448, %s28, 1
        %s450 = scalar_lea.vmem %s1, %s449
      $region32: #{_lambda_.7} parent=23 // pred_fallthru
        _
      // Predicated region
      $region33: #{_lambda_.7} parent=23 // pred_check
        %p451 = pneg %p104
      $region34: #{_lambda_.7} parent=23 // pred_check_branch
        %453 = sbr.rel (%p451) target = $region36
      $region35: #{_lambda_.7} parent=23 // pred_region
        %p454 = scmp.lt.s32.totalorder %s28, 1
        %s455 = scalar_select %p454, %s28, 1
        %s456 = scalar_lea.vmem %s2, %s455
      $region36: #{_lambda_.7} parent=23 // pred_fallthru
        _
      // Predicated region
      $region37: #{_lambda_.7} parent=23 // pred_check
        %p457 = pneg %p130
      $region38: #{_lambda_.7} parent=23 // pred_check_branch
        %459 = sbr.rel (%p457) target = $region40
      $region39: #{_lambda_.7} parent=23 // pred_region
        %p460 = scmp.lt.s32.totalorder %s28, 1
        %s461 = scalar_select %p460, %s28, 1
        %s462 = smul.addr %s461, 48
        %s463 = smul.addr %s462, 8
        %s464 = scalar_lea.vmem %s3, %s463
      $region40: #{_lambda_.7} parent=23 // pred_fallthru
        _
      // Predicated region
      $region41: #{_lambda_.7} parent=23 // pred_check
        %p465 = pneg %p156
      $region42: #{_lambda_.7} parent=23 // pred_check_branch
        %467 = sbr.rel (%p465) target = $region44
      $region43: #{_lambda_.7} parent=23 // pred_region
        %p468 = scmp.lt.s32.totalorder %s28, 1
        %s469 = scalar_select %p468, %s28, 1
        %s470 = smul.addr %s469, 6
        %s471 = smul.addr %s470, 8
        %s472 = scalar_lea.vmem %s4, %s471
      $region44: #{_lambda_.7} parent=23 // pred_fallthru
        _
      // Predicated region
      $region45: #{_lambda_.7} parent=23 // pred_check
        %p473 = pneg %p182
      $region46: #{_lambda_.7} parent=23 // pred_check_branch
        %475 = sbr.rel (%p473) target = $region48
      $region47: #{_lambda_.7} parent=23 // pred_region
        %p476 = scmp.lt.s32.totalorder %s28, 1
        %s477 = scalar_select %p476, %s28, 1
        %s478 = scalar_lea.vmem %s5, %s477
      $region48: #{_lambda_.7} parent=23 // pred_fallthru
        _
      // Predicated region
      $region49: #{_lambda_.7} parent=23 // pred_check
        %p479 = pneg %p208
      $region50: #{_lambda_.7} parent=23 // pred_check_branch
        %481 = sbr.rel (%p479) target = $region52
      $region51: #{_lambda_.7} parent=23 // pred_region
        %p482 = scmp.lt.s32.totalorder %s28, 1
        %s483 = scalar_select %p482, %s28, 1
        %s484 = scalar_lea.vmem %s6, %s483
      $region52: #{_lambda_.7} parent=23 // pred_fallthru
        _
      // Predicated region
      $region53: #{_lambda_.7} parent=23 // pred_check
        %p485 = pneg %p234
      $region54: #{_lambda_.7} parent=23 // pred_check_branch
        %487 = sbr.rel (%p485) target = $region56
      $region55: #{_lambda_.7} parent=23 // pred_region
        %p488 = scmp.lt.s32.totalorder %s28, 1
        %s489 = scalar_select %p488, %s28, 1
        %s490 = scalar_lea.vmem %s7, %s489
      $region56: #{_lambda_.7} parent=23 // pred_fallthru
        _
      // Predicated region
      $region57: #{_lambda_.7} parent=23 // pred_check
        %p491 = pneg %p260
      $region58: #{_lambda_.7} parent=23 // pred_check_branch
        %493 = sbr.rel (%p491) target = $region60
      $region59: #{_lambda_.7} parent=23 // pred_region
        %p494 = scmp.lt.s32.totalorder %s28, 1
        %s495 = scalar_select %p494, %s28, 1
        %s496 = smul.addr %s495, 32
        %s497 = smul.addr %s496, 8
        %s498 = scalar_lea.vmem %s8, %s497
      $region60: #{_lambda_.7} parent=23 // pred_fallthru
        _
      // Predicated region
      $region61: #{_lambda_.7} parent=23 // pred_check
        %p499 = pneg %p286
      $region62: #{_lambda_.7} parent=23 // pred_check_branch
        %501 = sbr.rel (%p499) target = $region64
      $region63: #{_lambda_.7} parent=23 // pred_region
        %p502 = scmp.lt.s32.totalorder %s28, 1
        %s503 = scalar_select %p502, %s28, 1
        %s504 = smul.addr %s503, 2
        %s505 = scalar_lea.vmem %s9, %s504
      $region64: #{_lambda_.7} parent=23 // pred_fallthru
        _
      // Predicated region
      $region65: #{_lambda_.7} parent=23 // pred_check
        %p506 = pneg %p312
      $region66: #{_lambda_.7} parent=23 // pred_check_branch
        %508 = sbr.rel (%p506) target = $region68
      $region67: #{_lambda_.7} parent=23 // pred_region
        %p509 = scmp.lt.s32.totalorder %s28, 1
        %s510 = scalar_select %p509, %s28, 1
        %s511 = smul.addr %s510, 32
        %s512 = smul.addr %s511, 8
        %s513 = scalar_lea.vmem %s10, %s512
      $region68: #{_lambda_.7} parent=23 // pred_fallthru
        _
      // Predicated region
      $region69: #{_lambda_.7} parent=23 // pred_check
        %p514 = pneg %p338
      $region70: #{_lambda_.7} parent=23 // pred_check_branch
        %516 = sbr.rel (%p514) target = $region72
      $region71: #{_lambda_.7} parent=23 // pred_region
        %p517 = scmp.lt.s32.totalorder %s28, 1
        %s518 = scalar_select %p517, %s28, 1
        %s519 = scalar_lea.vmem %s11, %s518
      $region72: #{_lambda_.7} parent=23 // pred_fallthru
        _
    $region24: #{_lambda_.7} parent=5 // pred_fallthru
      _
    %p520 = scmp.le.s32.totalorder 1, %s20
    %p521 = scmp.lt.s32.totalorder %s20, 5
    %p522 = pnand %p520, %p521
    %p523 = pneg %p522
    // Predicated region
    $region73: #{_lambda_.7} parent=5 // pred_check
      _
    $region74: #{_lambda_.7} parent=5 // pred_check_branch
      %525 = sbr.rel (%p522) target = $region76
    $region75: #{_lambda_.7} parent=5 // pred_region
      %s526 = ssub.s32 %s20, 1
      %p527 = scmp.lt.s32.totalorder %s29, 1
      %s528 = scalar_select %p527, %s29, 1
      %s529 = smul.addr %s528, 3
      %s530 = smul.addr %s529, 8
      %s531 = scalar_lea.vmem %s0, %s530
      %p532 = pneg %p58
      %p533 = pneg %p55
      %p534 = scmp.lt.s32.totalorder %s30, 1
      %s535 = scalar_select %p534, %s30, 1
      %s536 = scalar_lea.vmem %s1, %s535
      %p537 = pneg %p84
      %p538 = pneg %p81
      %p539 = scmp.lt.s32.totalorder %s30, 1
      %s540 = scalar_select %p539, %s30, 1
      %s541 = scalar_lea.vmem %s2, %s540
      %p542 = pneg %p110
      %p543 = pneg %p107
      %p544 = scmp.lt.s32.totalorder %s30, 1
      %s545 = scalar_select %p544, %s30, 1
      %s546 = smul.addr %s545, 48
      %s547 = smul.addr %s546, 8
      %s548 = scalar_lea.vmem %s3, %s547
      %p549 = pneg %p136
      %p550 = pneg %p133
      %p551 = scmp.lt.s32.totalorder %s30, 1
      %s552 = scalar_select %p551, %s30, 1
      %s553 = smul.addr %s552, 6
      %s554 = smul.addr %s553, 8
      %s555 = scalar_lea.vmem %s4, %s554
      %p556 = pneg %p162
      %p557 = pneg %p159
      %p558 = scmp.lt.s32.totalorder %s30, 1
      %s559 = scalar_select %p558, %s30, 1
      %s560 = scalar_lea.vmem %s5, %s559
      %p561 = pneg %p188
      %p562 = pneg %p185
      %p563 = scmp.lt.s32.totalorder %s30, 1
      %s564 = scalar_select %p563, %s30, 1
      %s565 = scalar_lea.vmem %s6, %s564
      %p566 = pneg %p214
      %p567 = pneg %p211
      %p568 = scmp.lt.s32.totalorder %s30, 1
      %s569 = scalar_select %p568, %s30, 1
      %s570 = scalar_lea.vmem %s7, %s569
      %p571 = pneg %p240
      %p572 = pneg %p237
      %p573 = scmp.lt.s32.totalorder %s30, 1
      %s574 = scalar_select %p573, %s30, 1
      %s575 = smul.addr %s574, 32
      %s576 = smul.addr %s575, 8
      %s577 = scalar_lea.vmem %s8, %s576
      %p578 = pneg %p266
      %p579 = pneg %p263
      %p580 = scmp.lt.s32.totalorder %s30, 1
      %s581 = scalar_select %p580, %s30, 1
      %s582 = smul.addr %s581, 2
      %s583 = scalar_lea.vmem %s9, %s582
      %p584 = pneg %p292
      %p585 = pneg %p289
      %p586 = scmp.lt.s32.totalorder %s30, 1
      %s587 = scalar_select %p586, %s30, 1
      %s588 = smul.addr %s587, 32
      %s589 = smul.addr %s588, 8
      %s590 = scalar_lea.vmem %s10, %s589
      %p591 = pneg %p318
      %p592 = pneg %p315
      %p593 = scmp.lt.s32.totalorder %s30, 1
      %s594 = scalar_select %p593, %s30, 1
      %s595 = scalar_lea.vmem %s11, %s594
      %p596 = pneg %p344
      %p597 = pneg %p341
      %p598 = pneg %p365
      %p599 = pneg %p362
      %p600 = pneg %p386
      %p601 = pneg %p383
      %p602 = pneg %p412
      %p603 = pneg %p409
      %p604 = scmp.lt.s32.totalorder %s29, 1
      %s605 = scalar_select %p604, %s29, 1
      %s606 = smul.addr %s605, 3
      %s607 = smul.addr %s606, 8
      %s608 = scalar_lea.vmem %s14, %s607
      %p609 = scmp.lt.s32.totalorder %s29, 1
      %s610 = scalar_select %p609, %s29, 1
      %s611 = smul.addr %s610, 3
      %s612 = smul.addr %s611, 8
      %s613 = scalar_lea.vmem %s0, %s612
      %p614 = scmp.lt.s32.totalorder %s30, 1
      %s615 = scalar_select %p614, %s30, 1
      %s616 = scalar_lea.vmem %s1, %s615
      %p617 = scmp.lt.s32.totalorder %s30, 1
      %s618 = scalar_select %p617, %s30, 1
      %s619 = scalar_lea.vmem %s2, %s618
      %p620 = scmp.lt.s32.totalorder %s30, 1
      %s621 = scalar_select %p620, %s30, 1
      %s622 = smul.addr %s621, 48
      %s623 = smul.addr %s622, 8
      %s624 = scalar_lea.vmem %s3, %s623
      %p625 = scmp.lt.s32.totalorder %s30, 1
      %s626 = scalar_select %p625, %s30, 1
      %s627 = smul.addr %s626, 6
      %s628 = smul.addr %s627, 8
      %s629 = scalar_lea.vmem %s4, %s628
      %p630 = scmp.lt.s32.totalorder %s30, 1
      %s631 = scalar_select %p630, %s30, 1
      %s632 = scalar_lea.vmem %s5, %s631
      %p633 = scmp.lt.s32.totalorder %s30, 1
      %s634 = scalar_select %p633, %s30, 1
      %s635 = scalar_lea.vmem %s6, %s634
      %p636 = scmp.lt.s32.totalorder %s30, 1
      %s637 = scalar_select %p636, %s30, 1
      %s638 = scalar_lea.vmem %s7, %s637
      %p639 = scmp.lt.s32.totalorder %s30, 1
      %s640 = scalar_select %p639, %s30, 1
      %s641 = smul.addr %s640, 32
      %s642 = smul.addr %s641, 8
      %s643 = scalar_lea.vmem %s8, %s642
      %p644 = scmp.lt.s32.totalorder %s30, 1
      %s645 = scalar_select %p644, %s30, 1
      %s646 = smul.addr %s645, 2
      %s647 = scalar_lea.vmem %s9, %s646
      %p648 = scmp.lt.s32.totalorder %s30, 1
      %s649 = scalar_select %p648, %s30, 1
      %s650 = smul.addr %s649, 32
      %s651 = smul.addr %s650, 8
      %s652 = scalar_lea.vmem %s10, %s651
      %p653 = scmp.lt.s32.totalorder %s30, 1
      %s654 = scalar_select %p653, %s30, 1
      %s655 = scalar_lea.vmem %s11, %s654
      %p656 = scmp.lt.s32.totalorder %s29, 1
      %s657 = scalar_select %p656, %s29, 1
      %s658 = smul.addr %s657, 3
      %s659 = smul.addr %s658, 8
      %s660 = scalar_lea.vmem %s14, %s659
      %p661 = scmp.eq.s32.totalorder %s30, 0
      // Predicated region
      $region77: #{_lambda_.7} parent=75 // pred_check
        %p662 = pneg %p661
      $region78: #{_lambda_.7} parent=75 // pred_check_branch
        %664 = sbr.rel (%p662) target = $region80
      $region79: #{_lambda_.7} parent=75 // pred_region
        %v665 = vld [vmem:[%s613] sm:$0xff]
        %v666 = vld [vmem:[%s613 + $0x8] sm:$0xff]
        %v667 = vld [vmem:[%s613 + $0x10] sm:$0x1]
        %668 = vst [vmem:[#allocation2] sm:$0xff] %v665
        %669 = vst [vmem:[#allocation2 + $0x8] sm:$0xff] %v666
        %670 = vst [vmem:[#allocation2 + $0x10] sm:$0x1] %v667
      $region80: #{_lambda_.7} parent=75 // pred_fallthru
        _
      %v671 = vld [vmem:[#allocation2] sm:$0xff]
      %v672 = vld [vmem:[#allocation2 + $0x8] sm:$0xff]
      %v673 = vld [vmem:[#allocation2 + $0x10] sm:$0x1]
      %v674 = vld [vmem:[%s616] sm:$0x1]
      %v675 = vld [vmem:[%s619] sm:$0x1]
      %v676 = vld [vmem:[%s624] sm:$0xff]
      %v677 = vld [vmem:[%s624 + $0x8] sm:$0xff]
      %v678 = vld [vmem:[%s624 + $0x10] sm:$0xff]
      %v679 = vld [vmem:[%s624 + $0x18] sm:$0xff]
      %v680 = vld [vmem:[%s624 + $0x20] sm:$0xff]
      %v681 = vld [vmem:[%s624 + $0x28] sm:$0xff]
      %v682 = vld [vmem:[%s624 + $0x30] sm:$0xff]
      %v683 = vld [vmem:[%s624 + $0x38] sm:$0xff]
      %v684 = vld [vmem:[%s624 + $0x40] sm:$0xff]
      %v685 = vld [vmem:[%s624 + $0x48] sm:$0xff]
      %v686 = vld [vmem:[%s624 + $0x50] sm:$0xff]
      %v687 = vld [vmem:[%s624 + $0x58] sm:$0xff]
      %v688 = vld [vmem:[%s624 + $0x60] sm:$0xff]
      %v689 = vld [vmem:[%s624 + $0x68] sm:$0xff]
      %v690 = vld [vmem:[%s624 + $0x70] sm:$0xff]
      %v691 = vld [vmem:[%s624 + $0x78] sm:$0xff]
      %v692 = vld [vmem:[%s624 + $0x80] sm:$0xff]
      %v693 = vld [vmem:[%s624 + $0x88] sm:$0xff]
      %v694 = vld [vmem:[%s624 + $0x90] sm:$0xff]
      %v695 = vld [vmem:[%s624 + $0x98] sm:$0xff]
      %v696 = vld [vmem:[%s624 + $0xa0] sm:$0xff]
      %v697 = vld [vmem:[%s624 + $0xa8] sm:$0xff]
      %v698 = vld [vmem:[%s624 + $0xb0] sm:$0xff]
      %v699 = vld [vmem:[%s624 + $0xb8] sm:$0xff]
      %v700 = vld [vmem:[%s624 + $0xc0] sm:$0xff]
      %v701 = vld [vmem:[%s624 + $0xc8] sm:$0xff]
      %v702 = vld [vmem:[%s624 + $0xd0] sm:$0xff]
      %v703 = vld [vmem:[%s624 + $0xd8] sm:$0xff]
      %v704 = vld [vmem:[%s624 + $0xe0] sm:$0xff]
      %v705 = vld [vmem:[%s624 + $0xe8] sm:$0xff]
      %v706 = vld [vmem:[%s624 + $0xf0] sm:$0xff]
      %v707 = vld [vmem:[%s624 + $0xf8] sm:$0xff]
      %v708 = vld [vmem:[%s624 + $0x100] sm:$0xff]
      %v709 = vld [vmem:[%s624 + $0x108] sm:$0xff]
      %v710 = vld [vmem:[%s624 + $0x110] sm:$0xff]
      %v711 = vld [vmem:[%s624 + $0x118] sm:$0xff]
      %v712 = vld [vmem:[%s624 + $0x120] sm:$0xff]
      %v713 = vld [vmem:[%s624 + $0x128] sm:$0xff]
      %v714 = vld [vmem:[%s624 + $0x130] sm:$0xff]
      %v715 = vld [vmem:[%s624 + $0x138] sm:$0xff]
      %v716 = vld [vmem:[%s624 + $0x140] sm:$0xff]
      %v717 = vld [vmem:[%s624 + $0x148] sm:$0xff]
      %v718 = vld [vmem:[%s624 + $0x150] sm:$0xff]
      %v719 = vld [vmem:[%s624 + $0x158] sm:$0xff]
      %v720 = vld [vmem:[%s624 + $0x160] sm:$0xff]
      %v721 = vld [vmem:[%s624 + $0x168] sm:$0xff]
      %v722 = vld [vmem:[%s624 + $0x170] sm:$0xff]
      %v723 = vld [vmem:[%s624 + $0x178] sm:$0xff]
      %v724 = vld [vmem:[%s629] sm:$0xff]
      %v725 = vld [vmem:[%s629 + $0x8] sm:$0xff]
      %v726 = vld [vmem:[%s629 + $0x10] sm:$0xff]
      %v727 = vld [vmem:[%s629 + $0x18] sm:$0xff]
      %v728 = vld [vmem:[%s629 + $0x20] sm:$0xff]
      %v729 = vld [vmem:[%s629 + $0x28] sm:$0xff]
      %v730 = vld [vmem:[%s632] sm:$0x1]
      %v731 = vld [vmem:[%s635] sm:$0x1]
      %v732 = vld [vmem:[%s638] sm:$0x1]
      %v733 = vld [vmem:[%s643] sm:$0xff]
      %v734 = vld [vmem:[%s643 + $0x8] sm:$0xff]
      %v735 = vld [vmem:[%s643 + $0x10] sm:$0xff]
      %v736 = vld [vmem:[%s643 + $0x18] sm:$0xff]
      %v737 = vld [vmem:[%s643 + $0x20] sm:$0xff]
      %v738 = vld [vmem:[%s643 + $0x28] sm:$0xff]
      %v739 = vld [vmem:[%s643 + $0x30] sm:$0xff]
      %v740 = vld [vmem:[%s643 + $0x38] sm:$0xff]
      %v741 = vld [vmem:[%s643 + $0x40] sm:$0xff]
      %v742 = vld [vmem:[%s643 + $0x48] sm:$0xff]
      %v743 = vld [vmem:[%s643 + $0x50] sm:$0xff]
      %v744 = vld [vmem:[%s643 + $0x58] sm:$0xff]
      %v745 = vld [vmem:[%s643 + $0x60] sm:$0xff]
      %v746 = vld [vmem:[%s643 + $0x68] sm:$0xff]
      %v747 = vld [vmem:[%s643 + $0x70] sm:$0xff]
      %v748 = vld [vmem:[%s643 + $0x78] sm:$0xff]
      %v749 = vld [vmem:[%s643 + $0x80] sm:$0xff]
      %v750 = vld [vmem:[%s643 + $0x88] sm:$0xff]
      %v751 = vld [vmem:[%s643 + $0x90] sm:$0xff]
      %v752 = vld [vmem:[%s643 + $0x98] sm:$0xff]
      %v753 = vld [vmem:[%s643 + $0xa0] sm:$0xff]
      %v754 = vld [vmem:[%s643 + $0xa8] sm:$0xff]
      %v755 = vld [vmem:[%s643 + $0xb0] sm:$0xff]
      %v756 = vld [vmem:[%s643 + $0xb8] sm:$0xff]
      %v757 = vld [vmem:[%s643 + $0xc0] sm:$0xff]
      %v758 = vld [vmem:[%s643 + $0xc8] sm:$0xff]
      %v759 = vld [vmem:[%s643 + $0xd0] sm:$0xff]
      %v760 = vld [vmem:[%s643 + $0xd8] sm:$0xff]
      %v761 = vld [vmem:[%s643 + $0xe0] sm:$0xff]
      %v762 = vld [vmem:[%s643 + $0xe8] sm:$0xff]
      %v763 = vld [vmem:[%s643 + $0xf0] sm:$0xff]
      %v764 = vld [vmem:[%s643 + $0xf8] sm:$0xff]
      %v765 = vld [vmem:[%s647] sm:$0x3]
      %v766 = vld [vmem:[%s652] sm:$0xff]
      %v767 = vld [vmem:[%s652 + $0x8] sm:$0xff]
      %v768 = vld [vmem:[%s652 + $0x10] sm:$0xff]
      %v769 = vld [vmem:[%s652 + $0x18] sm:$0xff]
      %v770 = vld [vmem:[%s652 + $0x20] sm:$0xff]
      %v771 = vld [vmem:[%s652 + $0x28] sm:$0xff]
      %v772 = vld [vmem:[%s652 + $0x30] sm:$0xff]
      %v773 = vld [vmem:[%s652 + $0x38] sm:$0xff]
      %v774 = vld [vmem:[%s652 + $0x40] sm:$0xff]
      %v775 = vld [vmem:[%s652 + $0x48] sm:$0xff]
      %v776 = vld [vmem:[%s652 + $0x50] sm:$0xff]
      %v777 = vld [vmem:[%s652 + $0x58] sm:$0xff]
      %v778 = vld [vmem:[%s652 + $0x60] sm:$0xff]
      %v779 = vld [vmem:[%s652 + $0x68] sm:$0xff]
      %v780 = vld [vmem:[%s652 + $0x70] sm:$0xff]
      %v781 = vld [vmem:[%s652 + $0x78] sm:$0xff]
      %v782 = vld [vmem:[%s652 + $0x80] sm:$0xff]
      %v783 = vld [vmem:[%s652 + $0x88] sm:$0xff]
      %v784 = vld [vmem:[%s652 + $0x90] sm:$0xff]
      %v785 = vld [vmem:[%s652 + $0x98] sm:$0xff]
      %v786 = vld [vmem:[%s652 + $0xa0] sm:$0xff]
      %v787 = vld [vmem:[%s652 + $0xa8] sm:$0xff]
      %v788 = vld [vmem:[%s652 + $0xb0] sm:$0xff]
      %v789 = vld [vmem:[%s652 + $0xb8] sm:$0xff]
      %v790 = vld [vmem:[%s652 + $0xc0] sm:$0xff]
      %v791 = vld [vmem:[%s652 + $0xc8] sm:$0xff]
      %v792 = vld [vmem:[%s652 + $0xd0] sm:$0xff]
      %v793 = vld [vmem:[%s652 + $0xd8] sm:$0xff]
      %v794 = vld [vmem:[%s652 + $0xe0] sm:$0xff]
      %v795 = vld [vmem:[%s652 + $0xe8] sm:$0xff]
      %v796 = vld [vmem:[%s652 + $0xf0] sm:$0xff]
      %v797 = vld [vmem:[%s652 + $0xf8] sm:$0xff]
      %v798 = vld [vmem:[%s655] sm:$0x1]
      %799 = vadd.xlane.f32.xlu0 %v671
      %v800 = vpop.xlane.xlu0 %799
      %801 = vadd.xlane.f32.xlu0 %v672
      %v802 = vpop.xlane.xlu0 %801
      %vm803 = vcmask 1040384
      %v804 = vsel %vm803, %v673, 0.0
      %805 = vadd.xlane.f32.xlu0 %v804
      %v806 = vpop.xlane.xlu0 %805
      %v807 = vmul.f32 %v800, 0.020833334
      %v808 = vmul.f32 %v802, 0.020833334
      %v809 = vmul.f32 %v806, 0.020833334
      %v810 = vmul.f32 %v671, %v671
      %v811 = vmul.f32 %v672, %v672
      %v812 = vmul.f32 %v673, %v673
      %813 = vadd.xlane.f32.xlu0 %v810
      %v814 = vpop.xlane.xlu0 %813
      %815 = vadd.xlane.f32.xlu0 %v811
      %v816 = vpop.xlane.xlu0 %815
      %v817 = vsel %vm803, %v812, 0.0
      %818 = vadd.xlane.f32.xlu0 %v817
      %v819 = vpop.xlane.xlu0 %818
      %v820 = vmul.f32 %v814, 0.020833334
      %v821 = vmul.f32 %v816, 0.020833334
      %v822 = vmul.f32 %v819, 0.020833334
      %v823 = vmul.f32 %v807, %v807
      %v824 = vmul.f32 %v808, %v808
      %v825 = vmul.f32 %v809, %v809
      %v826 = vsub.f32 %v820, %v823
      %v827 = vsub.f32 %v821, %v824
      %v828 = vsub.f32 %v822, %v825
      %v829 = vsub.f32 %v671, %v807
      %v830 = vsub.f32 %v672, %v808
      %v831 = vsub.f32 %v673, %v809
      %v832 = vadd.f32 %v826, 1e-05
      %v833 = vadd.f32 %v827, 1e-05
      %v834 = vadd.f32 %v828, 1e-05
      %v835 = vrsqrt.pop %v832
      %v836 = vmul.f32 %v835, %v832
      %v837 = vmul.f32 %v836, %v835
      %v838 = vmul.f32 0.5, %v837
      %v839 = vsub.f32 1.5, %v838
      %v840 = vmul.f32 %v835, %v839
      %vm841 = vweird.f32 %v832
      %vm842 = vweird.f32 %v835
      %vm843 = vmor %vm841, %vm842
      %v844 = vsel %vm843, %v835, %v840
      %v845 = vrsqrt.pop %v833
      %v846 = vmul.f32 %v845, %v833
      %v847 = vmul.f32 %v846, %v845
      %v848 = vmul.f32 0.5, %v847
      %v849 = vsub.f32 1.5, %v848
      %v850 = vmul.f32 %v845, %v849
      %vm851 = vweird.f32 %v833
      %vm852 = vweird.f32 %v845
      %vm853 = vmor %vm851, %vm852
      %v854 = vsel %vm853, %v845, %v850
      %v855 = vrsqrt.pop %v834
      %v856 = vmul.f32 %v855, %v834
      %v857 = vmul.f32 %v856, %v855
      %v858 = vmul.f32 0.5, %v857
      %v859 = vsub.f32 1.5, %v858
      %v860 = vmul.f32 %v855, %v859
      %vm861 = vweird.f32 %v834
      %vm862 = vweird.f32 %v855
      %vm863 = vmor %vm861, %vm862
      %v864 = vsel %vm863, %v855, %v860
      %v865 = vmul.f32 %v829, %v844
      %v866 = vmul.f32 %v830, %v854
      %v867 = vmul.f32 %v831, %v864
      %v869 = vperm.slane %v674, 0
      %v871 = vmul.f32 %v865, %v869
      %v872 = vmul.f32 %v866, %v869
      %v873 = vmul.f32 %v867, %v869
      %v875 = vperm.slane %v675, 0
      %v877 = vadd.f32 %v871, %v875
      %v878 = vadd.f32 %v872, %v875
      %v879 = vadd.f32 %v873, %v875
      %880 = vmatpush.msra.mxu0 %v721
      %881 = vmatpush.msra.mxu0 %v718
      %882 = vmatpush.msra.mxu0 %v715
      %883 = vmatpush.msra.mxu0 %v712
      %884 = vmatpush.msra.mxu0 %v709
      %885 = vmatpush.msra.mxu0 %v706
      %886 = vmatpush.msra.mxu0 %v703
      %887 = vmatpush.msra.mxu0 %v700
      %888 = vmatpush.msra.mxu0 %v697
      %889 = vmatpush.msra.mxu0 %v694
      %890 = vmatpush.msra.mxu0 %v691
      %891 = vmatpush.msra.mxu0 %v688
      %892 = vmatpush.msra.mxu0 %v685
      %893 = vmatpush.msra.mxu0 %v682
      %894 = vmatpush.msra.mxu0 %v679
      %895 = vmatpush.msra.mxu0 %v676
      %896 = vmatmul.f32.gmra.mxu0 %v877
      %v897 = vpop.f32.mrf.mxu0
      %v898 = vadd.f32 0.0, %v897
      %899 = vmatmul.f32.gmra.mxu0 %v878
      %v900 = vpop.f32.mrf.mxu0
      %v901 = vadd.f32 0.0, %v900
      %902 = vmatmul.f32.gmra.mxu0 %v879
      %v903 = vpop.f32.mrf.mxu0
      %v904 = vadd.f32 0.0, %v903
      %905 = vdwg.mxu0
      %906 = vmatpush.msra.mxu0 %v722
      %907 = vmatpush.msra.mxu0 %v719
      %908 = vmatpush.msra.mxu0 %v716
      %909 = vmatpush.msra.mxu0 %v713
      %910 = vmatpush.msra.mxu0 %v710
      %911 = vmatpush.msra.mxu0 %v707
      %912 = vmatpush.msra.mxu0 %v704
      %913 = vmatpush.msra.mxu0 %v701
      %914 = vmatpush.msra.mxu0 %v698
      %915 = vmatpush.msra.mxu0 %v695
      %916 = vmatpush.msra.mxu0 %v692
      %917 = vmatpush.msra.mxu0 %v689
      %918 = vmatpush.msra.mxu0 %v686
      %919 = vmatpush.msra.mxu0 %v683
      %920 = vmatpush.msra.mxu0 %v680
      %921 = vmatpush.msra.mxu0 %v677
      %922 = vmatmul.f32.gmra.mxu0 %v877
      %v923 = vpop.f32.mrf.mxu0
      %v924 = vadd.f32 0.0, %v923
      %925 = vmatmul.f32.gmra.mxu0 %v878
      %v926 = vpop.f32.mrf.mxu0
      %v927 = vadd.f32 0.0, %v926
      %928 = vmatmul.f32.gmra.mxu0 %v879
      %v929 = vpop.f32.mrf.mxu0
      %v930 = vadd.f32 0.0, %v929
      %931 = vdwg.mxu0
      %932 = vmatpush.msra.mxu0 %v723
      %933 = vmatpush.msra.mxu0 %v720
      %934 = vmatpush.msra.mxu0 %v717
      %935 = vmatpush.msra.mxu0 %v714
      %936 = vmatpush.msra.mxu0 %v711
      %937 = vmatpush.msra.mxu0 %v708
      %938 = vmatpush.msra.mxu0 %v705
      %939 = vmatpush.msra.mxu0 %v702
      %940 = vmatpush.msra.mxu0 %v699
      %941 = vmatpush.msra.mxu0 %v696
      %942 = vmatpush.msra.mxu0 %v693
      %943 = vmatpush.msra.mxu0 %v690
      %944 = vmatpush.msra.mxu0 %v687
      %945 = vmatpush.msra.mxu0 %v684
      %946 = vmatpush.msra.mxu0 %v681
      %947 = vmatpush.msra.mxu0 %v678
      %948 = vmatmul.f32.gmra.mxu0 %v877
      %v949 = vpop.f32.mrf.mxu0
      %v950 = vadd.f32 0.0, %v949
      %951 = vmatmul.f32.gmra.mxu0 %v878
      %v952 = vpop.f32.mrf.mxu0
      %v953 = vadd.f32 0.0, %v952
      %954 = vmatmul.f32.gmra.mxu0 %v879
      %v955 = vpop.f32.mrf.mxu0
      %v956 = vadd.f32 0.0, %v955
      %957 = vdwg.mxu0
      %vm958 = vcmask 130048
      %v960 = vsel %vm958, %v898, 0
      %v963 = vsel %vm958, %v901, 0
      %v966 = vsel %vm958, %v904, 0
      %v969 = vsel %vm958, %v924, 0
      %v972 = vsel %vm958, %v927, 0
      %v975 = vsel %vm958, %v930, 0
      %977 = vmatpush.xpose.msra.mxu0 0.0
      %978 = vmatpush.xpose.msra.mxu0 0.0
      %979 = vmatpush.xpose.msra.mxu0 0.0
      %980 = vmatpush.xpose.msra.mxu0 0.0
      %981 = vmatpush.xpose.msra.mxu0 0.0
      %982 = vmatpush.xpose.msra.mxu0 0.0
      %983 = vmatpush.xpose.msra.mxu0 0.0
      %984 = vmatpush.xpose.msra.mxu0 0.0
      %985 = vmatpush.xpose.msra.mxu0 0.0
      %986 = vmatpush.xpose.msra.mxu0 0.0
      %987 = vmatpush.xpose.msra.mxu0 0.0
      %988 = vmatpush.xpose.msra.mxu0 0.0
      %989 = vmatpush.xpose.msra.mxu0 0.0
      %990 = vmatpush.xpose.msra.mxu0 %v975
      %991 = vmatpush.xpose.msra.mxu0 %v972
      %992 = vmatpush.xpose.msra.mxu0 %v969
      %993 = vmatmul.f32.gmra.mxu0 %v960
      %v994 = vpop.f32.mrf.mxu0
      %v995 = vadd.f32 0.0, %v994
      %996 = vmatmul.f32.gmra.mxu0 %v963
      %v997 = vpop.f32.mrf.mxu0
      %v998 = vadd.f32 0.0, %v997
      %999 = vmatmul.f32.gmra.mxu0 %v966
      %v1000 = vpop.f32.mrf.mxu0
      %v1001 = vadd.f32 0.0, %v1000
      %1002 = vdwg.mxu0
      %v1003 = vmul.f32 %v995, 0.25
      %v1004 = vmul.f32 %v998, 0.25
      %v1005 = vmul.f32 %v1001, 0.25
      %vm1006 = vcmask 138240
      %v1007 = vsel %vm1006, %v1003, -inf
      %1008 = vmax.xlane.f32.xlu0 %v1007
      %v1009 = vpop.xlane.xlu0 %1008
      %v1010 = vsel %vm1006, %v1004, -inf
      %1011 = vmax.xlane.f32.xlu0 %v1010
      %v1012 = vpop.xlane.xlu0 %1011
      %vm1013 = vcmask 131072
      %v1014 = vsel %vm1013, %v1005, -inf
      %1015 = vmax.xlane.f32.xlu0 %v1014
      %v1016 = vpop.xlane.xlu0 %1015
      %v1017 = vsub.f32 %v1003, %v1009
      %v1018 = vsub.f32 %v1004, %v1012
      %v1019 = vsub.f32 %v1005, %v1016
      %v1020 = vmul.f32 %v1017, 1.442695
      %v1021 = vpow.pop %v1020
      %v1022 = vmul.f32 %v1018, 1.442695
      %v1023 = vpow.pop %v1022
      %v1024 = vmul.f32 %v1019, 1.442695
      %v1025 = vpow.pop %v1024
      %v1026 = vsel %vm1006, %v1021, 0.0
      %1027 = vadd.xlane.f32.xlu0 %v1026
      %v1028 = vpop.xlane.xlu0 %1027
      %v1029 = vsel %vm1006, %v1023, 0.0
      %1030 = vadd.xlane.f32.xlu0 %v1029
      %v1031 = vpop.xlane.xlu0 %1030
      %v1032 = vsel %vm1013, %v1025, 0.0
      %1033 = vadd.xlane.f32.xlu0 %v1032
      %v1034 = vpop.xlane.xlu0 %1033
      %v1035 = vrcp.pop %v1028
      %v1036 = vrcp.pop %v1031
      %v1037 = vrcp.pop %v1034
      %v1038 = vmul.f32 %v1021, %v1035
      %v1039 = vmul.f32 %v1023, %v1036
      %v1040 = vmul.f32 %v1025, %v1037
      %v1042 = vsel %vm1006, %v1038, 0
      %v1045 = vsel %vm1006, %v1039, 0
      %v1048 = vsel %vm1006, %v1040, 0
      %v1051 = vsel %vm803, %v956, 0
      %1053 = vmatpush.msra.mxu0 0.0
      %1054 = vmatpush.msra.mxu0 0.0
      %1055 = vmatpush.msra.mxu0 0.0
      %1056 = vmatpush.msra.mxu0 0.0
      %1057 = vmatpush.msra.mxu0 0.0
      %1058 = vmatpush.msra.mxu0 0.0
      %1059 = vmatpush.msra.mxu0 0.0
      %1060 = vmatpush.msra.mxu0 0.0
      %1061 = vmatpush.msra.mxu0 0.0
      %1062 = vmatpush.msra.mxu0 0.0
      %1063 = vmatpush.msra.mxu0 0.0
      %1064 = vmatpush.msra.mxu0 0.0
      %1065 = vmatpush.msra.mxu0 0.0
      %1066 = vmatpush.msra.mxu0 %v1051
      %1067 = vmatpush.msra.mxu0 %v953
      %1068 = vmatpush.msra.mxu0 %v950
      %1069 = vmatmul.f32.gmra.mxu0 %v1042
      %v1070 = vpop.f32.mrf.mxu0
      %v1071 = vadd.f32 0.0, %v1070
      %1072 = vmatmul.f32.gmra.mxu0 %v1045
      %v1073 = vpop.f32.mrf.mxu0
      %v1074 = vadd.f32 0.0, %v1073
      %1075 = vmatmul.f32.gmra.mxu0 %v1048
      %v1076 = vpop.f32.mrf.mxu0
      %v1077 = vadd.f32 0.0, %v1076
      %1078 = vdwg.mxu0
      %1079 = vrot.lane.b32.xlu0 %v898, 112
      %v1080 = vpop.permute.xlu0 %1079
      %1081 = vrot.lane.b32.xlu0 %v901, 112
      %v1082 = vpop.permute.xlu0 %1081
      %1083 = vrot.lane.b32.xlu0 %v904, 112
      %v1084 = vpop.permute.xlu0 %1083
      %1085 = vrot.lane.b32.xlu0 %v924, 112
      %v1086 = vpop.permute.xlu0 %1085
      %1087 = vrot.lane.b32.xlu0 %v927, 112
      %v1088 = vpop.permute.xlu0 %1087
      %1089 = vrot.lane.b32.xlu0 %v930, 112
      %v1090 = vpop.permute.xlu0 %1089
      %v1091 = vsel %vm958, %v1080, 0
      %v1093 = vsel %vm958, %v1082, 0
      %v1095 = vsel %vm958, %v1084, 0
      %v1097 = vsel %vm958, %v1086, 0
      %v1099 = vsel %vm958, %v1088, 0
      %v1101 = vsel %vm958, %v1090, 0
      %1103 = vmatpush.xpose.msra.mxu0 0.0
      %1104 = vmatpush.xpose.msra.mxu0 0.0
      %1105 = vmatpush.xpose.msra.mxu0 0.0
      %1106 = vmatpush.xpose.msra.mxu0 0.0
      %1107 = vmatpush.xpose.msra.mxu0 0.0
      %1108 = vmatpush.xpose.msra.mxu0 0.0
      %1109 = vmatpush.xpose.msra.mxu0 0.0
      %1110 = vmatpush.xpose.msra.mxu0 0.0
      %1111 = vmatpush.xpose.msra.mxu0 0.0
      %1112 = vmatpush.xpose.msra.mxu0 0.0
      %1113 = vmatpush.xpose.msra.mxu0 0.0
      %1114 = vmatpush.xpose.msra.mxu0 0.0
      %1115 = vmatpush.xpose.msra.mxu0 0.0
      %1116 = vmatpush.xpose.msra.mxu0 %v1101
      %1117 = vmatpush.xpose.msra.mxu0 %v1099
      %1118 = vmatpush.xpose.msra.mxu0 %v1097
      %1119 = vmatmul.f32.gmra.mxu0 %v1091
      %v1120 = vpop.f32.mrf.mxu0
      %v1121 = vadd.f32 0.0, %v1120
      %1122 = vmatmul.f32.gmra.mxu0 %v1093
      %v1123 = vpop.f32.mrf.mxu0
      %v1124 = vadd.f32 0.0, %v1123
      %1125 = vmatmul.f32.gmra.mxu0 %v1095
      %v1126 = vpop.f32.mrf.mxu0
      %v1127 = vadd.f32 0.0, %v1126
      %1128 = vdwg.mxu0
      %v1129 = vmul.f32 %v1121, 0.25
      %v1130 = vmul.f32 %v1124, 0.25
      %v1131 = vmul.f32 %v1127, 0.25
      %v1132 = vsel %vm1006, %v1129, -inf
      %1133 = vmax.xlane.f32.xlu0 %v1132
      %v1134 = vpop.xlane.xlu0 %1133
      %v1135 = vsel %vm1006, %v1130, -inf
      %1136 = vmax.xlane.f32.xlu0 %v1135
      %v1137 = vpop.xlane.xlu0 %1136
      %v1138 = vsel %vm1013, %v1131, -inf
      %1139 = vmax.xlane.f32.xlu0 %v1138
      %v1140 = vpop.xlane.xlu0 %1139
      %v1141 = vsub.f32 %v1129, %v1134
      %v1142 = vsub.f32 %v1130, %v1137
      %v1143 = vsub.f32 %v1131, %v1140
      %v1144 = vmul.f32 %v1141, 1.442695
      %v1145 = vpow.pop %v1144
      %v1146 = vmul.f32 %v1142, 1.442695
      %v1147 = vpow.pop %v1146
      %v1148 = vmul.f32 %v1143, 1.442695
      %v1149 = vpow.pop %v1148
      %v1150 = vsel %vm1006, %v1145, 0.0
      %1151 = vadd.xlane.f32.xlu0 %v1150
      %v1152 = vpop.xlane.xlu0 %1151
      %v1153 = vsel %vm1006, %v1147, 0.0
      %1154 = vadd.xlane.f32.xlu0 %v1153
      %v1155 = vpop.xlane.xlu0 %1154
      %v1156 = vsel %vm1013, %v1149, 0.0
      %1157 = vadd.xlane.f32.xlu0 %v1156
      %v1158 = vpop.xlane.xlu0 %1157
      %v1159 = vrcp.pop %v1152
      %v1160 = vrcp.pop %v1155
      %v1161 = vrcp.pop %v1158
      %v1162 = vmul.f32 %v1145, %v1159
      %v1163 = vmul.f32 %v1147, %v1160
      %v1164 = vmul.f32 %v1149, %v1161
      %1167 = vrot.lane.b32.xlu0 %v950, 112
      %v1168 = vpop.permute.xlu0 %1167
      %1169 = vrot.lane.b32.xlu0 %v953, 112
      %v1170 = vpop.permute.xlu0 %1169
      %1171 = vrot.lane.b32.xlu0 %v956, 112
      %v1172 = vpop.permute.xlu0 %1171
      %v1176 = vsel %vm1006, %v1162, 0
      %v1179 = vsel %vm1006, %v1163, 0
      %v1182 = vsel %vm1006, %v1164, 0
      %v1184 = vsel %vm803, %v1172, 0
      %1186 = vmatpush.msra.mxu0 0.0
      %1187 = vmatpush.msra.mxu0 0.0
      %1188 = vmatpush.msra.mxu0 0.0
      %1189 = vmatpush.msra.mxu0 0.0
      %1190 = vmatpush.msra.mxu0 0.0
      %1191 = vmatpush.msra.mxu0 0.0
      %1192 = vmatpush.msra.mxu0 0.0
      %1193 = vmatpush.msra.mxu0 0.0
      %1194 = vmatpush.msra.mxu0 0.0
      %1195 = vmatpush.msra.mxu0 0.0
      %1196 = vmatpush.msra.mxu0 0.0
      %1197 = vmatpush.msra.mxu0 0.0
      %1198 = vmatpush.msra.mxu0 0.0
      %1199 = vmatpush.msra.mxu0 %v1184
      %1200 = vmatpush.msra.mxu0 %v1170
      %1201 = vmatpush.msra.mxu0 %v1168
      %1202 = vmatmul.f32.gmra.mxu0 %v1176
      %v1203 = vpop.f32.mrf.mxu0
      %v1204 = vadd.f32 0.0, %v1203
      %1205 = vmatmul.f32.gmra.mxu0 %v1179
      %v1206 = vpop.f32.mrf.mxu0
      %v1207 = vadd.f32 0.0, %v1206
      %1208 = vmatmul.f32.gmra.mxu0 %v1182
      %v1209 = vpop.f32.mrf.mxu0
      %v1210 = vadd.f32 0.0, %v1209
      %1211 = vdwg.mxu0
      %v1213 = vsel %vm958, %v1204, 0
      %v1216 = vsel %vm958, %v1207, 0
      %v1219 = vsel %vm958, %v1210, 0
      %1221 = vmatpush.msra.mxu0 0.0
      %1222 = vmatpush.msra.mxu0 0.0
      %1223 = vmatpush.msra.mxu0 0.0
      %1224 = vmatpush.msra.mxu0 0.0
      %1225 = vmatpush.msra.mxu0 0.0
      %1226 = vmatpush.msra.mxu0 0.0
      %1227 = vmatpush.msra.mxu0 0.0
      %1228 = vmatpush.msra.mxu0 0.0
      %1229 = vmatpush.msra.mxu0 0.0
      %1230 = vmatpush.msra.mxu0 0.0
      %1231 = vmatpush.msra.mxu0 0.0
      %1232 = vmatpush.msra.mxu0 0.0
      %1233 = vmatpush.msra.mxu0 0.0
      %1234 = vmatpush.msra.mxu0 0.0
      %1235 = vmatpush.msra.mxu0 %v727
      %1236 = vmatpush.msra.mxu0 %v726
      %1237 = vmatmul.f32.gmra.mxu0 %v1213
      %v1238 = vpop.f32.mrf.mxu0
      %v1239 = vadd.f32 0.0, %v1238
      %1240 = vmatmul.f32.gmra.mxu0 %v1216
      %v1241 = vpop.f32.mrf.mxu0
      %v1242 = vadd.f32 0.0, %v1241
      %1243 = vmatmul.f32.gmra.mxu0 %v1219
      %v1244 = vpop.f32.mrf.mxu0
      %v1245 = vadd.f32 0.0, %v1244
      %1246 = vdwg.mxu0
      %v1248 = vsel %vm958, %v1071, 0
      %v1251 = vsel %vm958, %v1074, 0
      %v1254 = vsel %vm958, %v1077, 0
      %1256 = vmatpush.msra.mxu0 0.0
      %1257 = vmatpush.msra.mxu0 0.0
      %1258 = vmatpush.msra.mxu0 0.0
      %1259 = vmatpush.msra.mxu0 0.0
      %1260 = vmatpush.msra.mxu0 0.0
      %1261 = vmatpush.msra.mxu0 0.0
      %1262 = vmatpush.msra.mxu0 0.0
      %1263 = vmatpush.msra.mxu0 0.0
      %1264 = vmatpush.msra.mxu0 0.0
      %1265 = vmatpush.msra.mxu0 0.0
      %1266 = vmatpush.msra.mxu0 0.0
      %1267 = vmatpush.msra.mxu0 0.0
      %1268 = vmatpush.msra.mxu0 0.0
      %1269 = vmatpush.msra.mxu0 0.0
      %1270 = vmatpush.msra.mxu0 %v725
      %1271 = vmatpush.msra.mxu0 %v724
      %1272 = vmatmul.f32.gmra.mxu0 %v1248
      %v1273 = vpop.f32.mrf.mxu0
      %v1274 = vadd.f32 %v1239, %v1273
      %1275 = vmatmul.f32.gmra.mxu0 %v1251
      %v1276 = vpop.f32.mrf.mxu0
      %v1277 = vadd.f32 %v1242, %v1276
      %1278 = vmatmul.f32.gmra.mxu0 %v1254
      %v1279 = vpop.f32.mrf.mxu0
      %v1280 = vadd.f32 %v1245, %v1279
      %1281 = vdwg.mxu0
      %1282 = vrot.lane.b32.xlu0 %v898, 96
      %v1283 = vpop.permute.xlu0 %1282
      %1284 = vrot.lane.b32.xlu0 %v901, 96
      %v1285 = vpop.permute.xlu0 %1284
      %1286 = vrot.lane.b32.xlu0 %v904, 96
      %v1287 = vpop.permute.xlu0 %1286
      %1288 = vrot.lane.b32.xlu0 %v924, 96
      %v1289 = vpop.permute.xlu0 %1288
      %1290 = vrot.lane.b32.xlu0 %v927, 96
      %v1291 = vpop.permute.xlu0 %1290
      %1292 = vrot.lane.b32.xlu0 %v930, 96
      %v1293 = vpop.permute.xlu0 %1292
      %v1294 = vsel %vm958, %v1283, 0
      %v1296 = vsel %vm958, %v1285, 0
      %v1298 = vsel %vm958, %v1287, 0
      %v1300 = vsel %vm958, %v1289, 0
      %v1302 = vsel %vm958, %v1291, 0
      %v1304 = vsel %vm958, %v1293, 0
      %1306 = vmatpush.xpose.msra.mxu0 0.0
      %1307 = vmatpush.xpose.msra.mxu0 0.0
      %1308 = vmatpush.xpose.msra.mxu0 0.0
      %1309 = vmatpush.xpose.msra.mxu0 0.0
      %1310 = vmatpush.xpose.msra.mxu0 0.0
      %1311 = vmatpush.xpose.msra.mxu0 0.0
      %1312 = vmatpush.xpose.msra.mxu0 0.0
      %1313 = vmatpush.xpose.msra.mxu0 0.0
      %1314 = vmatpush.xpose.msra.mxu0 0.0
      %1315 = vmatpush.xpose.msra.mxu0 0.0
      %1316 = vmatpush.xpose.msra.mxu0 0.0
      %1317 = vmatpush.xpose.msra.mxu0 0.0
      %1318 = vmatpush.xpose.msra.mxu0 0.0
      %1319 = vmatpush.xpose.msra.mxu0 %v1304
      %1320 = vmatpush.xpose.msra.mxu0 %v1302
      %1321 = vmatpush.xpose.msra.mxu0 %v1300
      %1322 = vmatmul.f32.gmra.mxu0 %v1294
      %v1323 = vpop.f32.mrf.mxu0
      %v1324 = vadd.f32 0.0, %v1323
      %1325 = vmatmul.f32.gmra.mxu0 %v1296
      %v1326 = vpop.f32.mrf.mxu0
      %v1327 = vadd.f32 0.0, %v1326
      %1328 = vmatmul.f32.gmra.mxu0 %v1298
      %v1329 = vpop.f32.mrf.mxu0
      %v1330 = vadd.f32 0.0, %v1329
      %1331 = vdwg.mxu0
      %v1332 = vmul.f32 %v1324, 0.25
      %v1333 = vmul.f32 %v1327, 0.25
      %v1334 = vmul.f32 %v1330, 0.25
      %v1335 = vsel %vm1006, %v1332, -inf
      %1336 = vmax.xlane.f32.xlu0 %v1335
      %v1337 = vpop.xlane.xlu0 %1336
      %v1338 = vsel %vm1006, %v1333, -inf
      %1339 = vmax.xlane.f32.xlu0 %v1338
      %v1340 = vpop.xlane.xlu0 %1339
      %v1341 = vsel %vm1013, %v1334, -inf
      %1342 = vmax.xlane.f32.xlu0 %v1341
      %v1343 = vpop.xlane.xlu0 %1342
      %v1344 = vsub.f32 %v1332, %v1337
      %v1345 = vsub.f32 %v1333, %v1340
      %v1346 = vsub.f32 %v1334, %v1343
      %v1347 = vmul.f32 %v1344, 1.442695
      %v1348 = vpow.pop %v1347
      %v1349 = vmul.f32 %v1345, 1.442695
      %v1350 = vpow.pop %v1349
      %v1351 = vmul.f32 %v1346, 1.442695
      %v1352 = vpow.pop %v1351
      %v1353 = vsel %vm1006, %v1348, 0.0
      %1354 = vadd.xlane.f32.xlu0 %v1353
      %v1355 = vpop.xlane.xlu0 %1354
      %v1356 = vsel %vm1006, %v1350, 0.0
      %1357 = vadd.xlane.f32.xlu0 %v1356
      %v1358 = vpop.xlane.xlu0 %1357
      %v1359 = vsel %vm1013, %v1352, 0.0
      %1360 = vadd.xlane.f32.xlu0 %v1359
      %v1361 = vpop.xlane.xlu0 %1360
      %v1362 = vrcp.pop %v1355
      %v1363 = vrcp.pop %v1358
      %v1364 = vrcp.pop %v1361
      %v1365 = vmul.f32 %v1348, %v1362
      %v1366 = vmul.f32 %v1350, %v1363
      %v1367 = vmul.f32 %v1352, %v1364
      %1368 = vrot.lane.b32.xlu0 %v950, 96
      %v1369 = vpop.permute.xlu0 %1368
      %1370 = vrot.lane.b32.xlu0 %v953, 96
      %v1371 = vpop.permute.xlu0 %1370
      %1372 = vrot.lane.b32.xlu0 %v956, 96
      %v1373 = vpop.permute.xlu0 %1372
      %v1377 = vsel %vm1006, %v1365, 0
      %v1380 = vsel %vm1006, %v1366, 0
      %v1383 = vsel %vm1006, %v1367, 0
      %v1385 = vsel %vm803, %v1373, 0
      %1387 = vmatpush.msra.mxu0 0.0
      %1388 = vmatpush.msra.mxu0 0.0
      %1389 = vmatpush.msra.mxu0 0.0
      %1390 = vmatpush.msra.mxu0 0.0
      %1391 = vmatpush.msra.mxu0 0.0
      %1392 = vmatpush.msra.mxu0 0.0
      %1393 = vmatpush.msra.mxu0 0.0
      %1394 = vmatpush.msra.mxu0 0.0
      %1395 = vmatpush.msra.mxu0 0.0
      %1396 = vmatpush.msra.mxu0 0.0
      %1397 = vmatpush.msra.mxu0 0.0
      %1398 = vmatpush.msra.mxu0 0.0
      %1399 = vmatpush.msra.mxu0 0.0
      %1400 = vmatpush.msra.mxu0 %v1385
      %1401 = vmatpush.msra.mxu0 %v1371
      %1402 = vmatpush.msra.mxu0 %v1369
      %1403 = vmatmul.f32.gmra.mxu0 %v1377
      %v1404 = vpop.f32.mrf.mxu0
      %v1405 = vadd.f32 0.0, %v1404
      %1406 = vmatmul.f32.gmra.mxu0 %v1380
      %v1407 = vpop.f32.mrf.mxu0
      %v1408 = vadd.f32 0.0, %v1407
      %1409 = vmatmul.f32.gmra.mxu0 %v1383
      %v1410 = vpop.f32.mrf.mxu0
      %v1411 = vadd.f32 0.0, %v1410
      %1412 = vdwg.mxu0
      %v1414 = vsel %vm958, %v1405, 0
      %v1417 = vsel %vm958, %v1408, 0
      %v1420 = vsel %vm958, %v1411, 0
      %1422 = vmatpush.msra.mxu0 0.0
      %1423 = vmatpush.msra.mxu0 0.0
      %1424 = vmatpush.msra.mxu0 0.0
      %1425 = vmatpush.msra.mxu0 0.0
      %1426 = vmatpush.msra.mxu0 0.0
      %1427 = vmatpush.msra.mxu0 0.0
      %1428 = vmatpush.msra.mxu0 0.0
      %1429 = vmatpush.msra.mxu0 0.0
      %1430 = vmatpush.msra.mxu0 0.0
      %1431 = vmatpush.msra.mxu0 0.0
      %1432 = vmatpush.msra.mxu0 0.0
      %1433 = vmatpush.msra.mxu0 0.0
      %1434 = vmatpush.msra.mxu0 0.0
      %1435 = vmatpush.msra.mxu0 0.0
      %1436 = vmatpush.msra.mxu0 %v729
      %1437 = vmatpush.msra.mxu0 %v728
      %1438 = vmatmul.f32.gmra.mxu0 %v1414
      %v1439 = vpop.f32.mrf.mxu0
      %v1440 = vadd.f32 0.0, %v1439
      %1441 = vmatmul.f32.gmra.mxu0 %v1417
      %v1442 = vpop.f32.mrf.mxu0
      %v1443 = vadd.f32 0.0, %v1442
      %1444 = vmatmul.f32.gmra.mxu0 %v1420
      %v1445 = vpop.f32.mrf.mxu0
      %v1446 = vadd.f32 0.0, %v1445
      %1447 = vdwg.mxu0
      %v1448 = vadd.f32 %v1274, %v1440
      %v1449 = vadd.f32 %v1277, %v1443
      %v1450 = vadd.f32 %v1280, %v1446
      %v1451 = vadd.f32 %v671, %v1448
      %v1452 = vadd.f32 %v672, %v1449
      %v1453 = vadd.f32 %v673, %v1450
      %v1455 = vperm.slane %v730, 0
      %v1457 = vadd.f32 %v1451, %v1455
      %v1458 = vadd.f32 %v1452, %v1455
      %v1459 = vadd.f32 %v1453, %v1455
      %1460 = vadd.xlane.f32.xlu0 %v1457
      %v1461 = vpop.xlane.xlu0 %1460
      %1462 = vadd.xlane.f32.xlu0 %v1458
      %v1463 = vpop.xlane.xlu0 %1462
      %v1464 = vsel %vm803, %v1459, 0.0
      %1465 = vadd.xlane.f32.xlu0 %v1464
      %v1466 = vpop.xlane.xlu0 %1465
      %v1467 = vmul.f32 %v1461, 0.020833334
      %v1468 = vmul.f32 %v1463, 0.020833334
      %v1469 = vmul.f32 %v1466, 0.020833334
      %v1470 = vmul.f32 %v1457, %v1457
      %v1471 = vmul.f32 %v1458, %v1458
      %v1472 = vmul.f32 %v1459, %v1459
      %1473 = vadd.xlane.f32.xlu0 %v1470
      %v1474 = vpop.xlane.xlu0 %1473
      %1475 = vadd.xlane.f32.xlu0 %v1471
      %v1476 = vpop.xlane.xlu0 %1475
      %v1477 = vsel %vm803, %v1472, 0.0
      %1478 = vadd.xlane.f32.xlu0 %v1477
      %v1479 = vpop.xlane.xlu0 %1478
      %v1480 = vmul.f32 %v1474, 0.020833334
      %v1481 = vmul.f32 %v1476, 0.020833334
      %v1482 = vmul.f32 %v1479, 0.020833334
      %v1483 = vmul.f32 %v1467, %v1467
      %v1484 = vmul.f32 %v1468, %v1468
      %v1485 = vmul.f32 %v1469, %v1469
      %v1486 = vsub.f32 %v1480, %v1483
      %v1487 = vsub.f32 %v1481, %v1484
      %v1488 = vsub.f32 %v1482, %v1485
      %v1489 = vsub.f32 %v1457, %v1467
      %v1490 = vsub.f32 %v1458, %v1468
      %v1491 = vsub.f32 %v1459, %v1469
      %v1492 = vadd.f32 %v1486, 1e-05
      %v1493 = vadd.f32 %v1487, 1e-05
      %v1494 = vadd.f32 %v1488, 1e-05
      %v1495 = vrsqrt.pop %v1492
      %v1496 = vmul.f32 %v1495, %v1492
      %v1497 = vmul.f32 %v1496, %v1495
      %v1498 = vmul.f32 0.5, %v1497
      %v1499 = vsub.f32 1.5, %v1498
      %v1500 = vmul.f32 %v1495, %v1499
      %vm1501 = vweird.f32 %v1492
      %vm1502 = vweird.f32 %v1495
      %vm1503 = vmor %vm1501, %vm1502
      %v1504 = vsel %vm1503, %v1495, %v1500
      %v1505 = vrsqrt.pop %v1493
      %v1506 = vmul.f32 %v1505, %v1493
      %v1507 = vmul.f32 %v1506, %v1505
      %v1508 = vmul.f32 0.5, %v1507
      %v1509 = vsub.f32 1.5, %v1508
      %v1510 = vmul.f32 %v1505, %v1509
      %vm1511 = vweird.f32 %v1493
      %vm1512 = vweird.f32 %v1505
      %vm1513 = vmor %vm1511, %vm1512
      %v1514 = vsel %vm1513, %v1505, %v1510
      %v1515 = vrsqrt.pop %v1494
      %v1516 = vmul.f32 %v1515, %v1494
      %v1517 = vmul.f32 %v1516, %v1515
      %v1518 = vmul.f32 0.5, %v1517
      %v1519 = vsub.f32 1.5, %v1518
      %v1520 = vmul.f32 %v1515, %v1519
      %vm1521 = vweird.f32 %v1494
      %vm1522 = vweird.f32 %v1515
      %vm1523 = vmor %vm1521, %vm1522
      %v1524 = vsel %vm1523, %v1515, %v1520
      %v1525 = vmul.f32 %v1489, %v1504
      %v1526 = vmul.f32 %v1490, %v1514
      %v1527 = vmul.f32 %v1491, %v1524
      %v1529 = vperm.slane %v731, 0
      %v1531 = vmul.f32 %v1525, %v1529
      %v1532 = vmul.f32 %v1526, %v1529
      %v1533 = vmul.f32 %v1527, %v1529
      %v1535 = vperm.slane %v732, 0
      %v1537 = vadd.f32 %v1531, %v1535
      %v1538 = vadd.f32 %v1532, %v1535
      %v1539 = vadd.f32 %v1533, %v1535
      %v1541 = vperm.slane %v765, 0
      %v1542 = vperm.slane %v765, 1
      %1545 = vmatpush.msra.mxu0 %v763
      %1546 = vmatpush.msra.mxu0 %v761
      %1547 = vmatpush.msra.mxu0 %v759
      %1548 = vmatpush.msra.mxu0 %v757
      %1549 = vmatpush.msra.mxu0 %v755
      %1550 = vmatpush.msra.mxu0 %v753
      %1551 = vmatpush.msra.mxu0 %v751
      %1552 = vmatpush.msra.mxu0 %v749
      %1553 = vmatpush.msra.mxu0 %v747
      %1554 = vmatpush.msra.mxu0 %v745
      %1555 = vmatpush.msra.mxu0 %v743
      %1556 = vmatpush.msra.mxu0 %v741
      %1557 = vmatpush.msra.mxu0 %v739
      %1558 = vmatpush.msra.mxu0 %v737
      %1559 = vmatpush.msra.mxu0 %v735
      %1560 = vmatpush.msra.mxu0 %v733
      %1561 = vmatmul.f32.gmra.mxu0 %v1537
      %v1562 = vpop.f32.mrf.mxu0
      %v1563 = vadd.f32 %v1541, %v1562
      %1564 = vmatmul.f32.gmra.mxu0 %v1538
      %v1565 = vpop.f32.mrf.mxu0
      %v1566 = vadd.f32 %v1541, %v1565
      %1567 = vmatmul.f32.gmra.mxu0 %v1539
      %v1568 = vpop.f32.mrf.mxu0
      %v1569 = vadd.f32 %v1541, %v1568
      %1570 = vdwg.mxu0
      %1571 = vmatpush.msra.mxu0 %v764
      %1572 = vmatpush.msra.mxu0 %v762
      %1573 = vmatpush.msra.mxu0 %v760
      %1574 = vmatpush.msra.mxu0 %v758
      %1575 = vmatpush.msra.mxu0 %v756
      %1576 = vmatpush.msra.mxu0 %v754
      %1577 = vmatpush.msra.mxu0 %v752
      %1578 = vmatpush.msra.mxu0 %v750
      %1579 = vmatpush.msra.mxu0 %v748
      %1580 = vmatpush.msra.mxu0 %v746
      %1581 = vmatpush.msra.mxu0 %v744
      %1582 = vmatpush.msra.mxu0 %v742
      %1583 = vmatpush.msra.mxu0 %v740
      %1584 = vmatpush.msra.mxu0 %v738
      %1585 = vmatpush.msra.mxu0 %v736
      %1586 = vmatpush.msra.mxu0 %v734
      %1587 = vmatmul.f32.gmra.mxu0 %v1537
      %v1588 = vpop.f32.mrf.mxu0
      %v1589 = vadd.f32 %v1542, %v1588
      %1590 = vmatmul.f32.gmra.mxu0 %v1538
      %v1591 = vpop.f32.mrf.mxu0
      %v1592 = vadd.f32 %v1542, %v1591
      %1593 = vmatmul.f32.gmra.mxu0 %v1539
      %v1594 = vpop.f32.mrf.mxu0
      %v1595 = vadd.f32 %v1542, %v1594
      %1596 = vdwg.mxu0
      %v1597 = vmul.f32 %v1563, 0.5
      %v1598 = vmul.f32 %v1589, 0.5
      %v1599 = vmul.f32 %v1566, 0.5
      %v1600 = vmul.f32 %v1592, 0.5
      %v1601 = vmul.f32 %v1569, 0.5
      %v1602 = vmul.f32 %v1595, 0.5
      %v1603 = vmul.f32 %v1563, 0.044715
      %v1604 = vmul.f32 %v1589, 0.044715
      %v1605 = vmul.f32 %v1566, 0.044715
      %v1606 = vmul.f32 %v1592, 0.044715
      %v1607 = vmul.f32 %v1569, 0.044715
      %v1608 = vmul.f32 %v1595, 0.044715
      %v1609 = vmul.f32 %v1603, %v1563
      %v1610 = vmul.f32 %v1604, %v1589
      %v1611 = vmul.f32 %v1605, %v1566
      %v1612 = vmul.f32 %v1606, %v1592
      %v1613 = vmul.f32 %v1607, %v1569
      %v1614 = vmul.f32 %v1608, %v1595
      %v1615 = vmul.f32 %v1609, %v1563
      %v1616 = vmul.f32 %v1610, %v1589
      %v1617 = vmul.f32 %v1611, %v1566
      %v1618 = vmul.f32 %v1612, %v1592
      %v1619 = vmul.f32 %v1613, %v1569
      %v1620 = vmul.f32 %v1614, %v1595
      %v1621 = vadd.f32 %v1563, %v1615
      %v1622 = vadd.f32 %v1589, %v1616
      %v1623 = vadd.f32 %v1566, %v1617
      %v1624 = vadd.f32 %v1592, %v1618
      %v1625 = vadd.f32 %v1569, %v1619
      %v1626 = vadd.f32 %v1595, %v1620
      %v1627 = vmul.f32 %v1621, 0.7978846
      %v1628 = vmul.f32 %v1622, 0.7978846
      %v1629 = vmul.f32 %v1623, 0.7978846
      %v1630 = vmul.f32 %v1624, 0.7978846
      %v1631 = vmul.f32 %v1625, 0.7978846
      %v1632 = vmul.f32 %v1626, 0.7978846
      %v1633 = vtanh.pop %v1627
      %v1634 = vtanh.pop %v1628
      %v1635 = vtanh.pop %v1629
      %v1636 = vtanh.pop %v1630
      %v1637 = vtanh.pop %v1631
      %v1638 = vtanh.pop %v1632
      %v1639 = vadd.f32 %v1633, 1.0
      %v1640 = vadd.f32 %v1634, 1.0
      %v1641 = vadd.f32 %v1635, 1.0
      %v1642 = vadd.f32 %v1636, 1.0
      %v1643 = vadd.f32 %v1637, 1.0
      %v1644 = vadd.f32 %v1638, 1.0
      %v1645 = vmul.f32 %v1597, %v1639
      %v1646 = vmul.f32 %v1598, %v1640
      %v1647 = vmul.f32 %v1599, %v1641
      %v1648 = vmul.f32 %v1600, %v1642
      %v1649 = vmul.f32 %v1601, %v1643
      %v1650 = vmul.f32 %v1602, %v1644
      %1651 = vmatpush.msra.mxu0 %v781
      %1652 = vmatpush.msra.mxu0 %v780
      %1653 = vmatpush.msra.mxu0 %v779
      %1654 = vmatpush.msra.mxu0 %v778
      %1655 = vmatpush.msra.mxu0 %v777
      %1656 = vmatpush.msra.mxu0 %v776
      %1657 = vmatpush.msra.mxu0 %v775
      %1658 = vmatpush.msra.mxu0 %v774
      %1659 = vmatpush.msra.mxu0 %v773
      %1660 = vmatpush.msra.mxu0 %v772
      %1661 = vmatpush.msra.mxu0 %v771
      %1662 = vmatpush.msra.mxu0 %v770
      %1663 = vmatpush.msra.mxu0 %v769
      %1664 = vmatpush.msra.mxu0 %v768
      %1665 = vmatpush.msra.mxu0 %v767
      %1666 = vmatpush.msra.mxu0 %v766
      %1667 = vmatmul.f32.gmra.mxu0 %v1645
      %v1668 = vpop.f32.mrf.mxu0
      %v1669 = vadd.f32 0.0, %v1668
      %1670 = vmatmul.f32.gmra.mxu0 %v1647
      %v1671 = vpop.f32.mrf.mxu0
      %v1672 = vadd.f32 0.0, %v1671
      %1673 = vmatmul.f32.gmra.mxu0 %v1649
      %v1674 = vpop.f32.mrf.mxu0
      %v1675 = vadd.f32 0.0, %v1674
      %1676 = vdwg.mxu0
      %1677 = vmatpush.msra.mxu0 %v797
      %1678 = vmatpush.msra.mxu0 %v796
      %1679 = vmatpush.msra.mxu0 %v795
      %1680 = vmatpush.msra.mxu0 %v794
      %1681 = vmatpush.msra.mxu0 %v793
      %1682 = vmatpush.msra.mxu0 %v792
      %1683 = vmatpush.msra.mxu0 %v791
      %1684 = vmatpush.msra.mxu0 %v790
      %1685 = vmatpush.msra.mxu0 %v789
      %1686 = vmatpush.msra.mxu0 %v788
      %1687 = vmatpush.msra.mxu0 %v787
      %1688 = vmatpush.msra.mxu0 %v786
      %1689 = vmatpush.msra.mxu0 %v785
      %1690 = vmatpush.msra.mxu0 %v784
      %1691 = vmatpush.msra.mxu0 %v783
      %1692 = vmatpush.msra.mxu0 %v782
      %1693 = vmatmul.f32.gmra.mxu0 %v1646
      %v1694 = vpop.f32.mrf.mxu0
      %v1695 = vadd.f32 %v1669, %v1694
      %1696 = vmatmul.f32.gmra.mxu0 %v1648
      %v1697 = vpop.f32.mrf.mxu0
      %v1698 = vadd.f32 %v1672, %v1697
      %1699 = vmatmul.f32.gmra.mxu0 %v1650
      %v1700 = vpop.f32.mrf.mxu0
      %v1701 = vadd.f32 %v1675, %v1700
      %1702 = vdwg.mxu0
      %v1703 = vadd.f32 %v1457, %v1695
      %v1704 = vadd.f32 %v1458, %v1698
      %v1705 = vadd.f32 %v1459, %v1701
      %v1707 = vperm.slane %v798, 0
      %v1709 = vadd.f32 %v1703, %v1707
      %v1710 = vadd.f32 %v1704, %v1707
      %v1711 = vadd.f32 %v1705, %v1707
      %1712 = vst [vmem:[#allocation2] sm:$0xff] %v1709
      %1713 = vst [vmem:[#allocation2 + $0x8] sm:$0xff] %v1710
      %1714 = vst [vmem:[#allocation2 + $0x10] sm:$0x1] %v1711
      %p1715 = scmp.eq.s32.totalorder %s30, 1
      // Predicated region
      $region81: #{_lambda_.7} parent=75 // pred_check
        %p1716 = pneg %p1715
      $region82: #{_lambda_.7} parent=75 // pred_check_branch
        %1718 = sbr.rel (%p1716) target = $region84
      $region83: #{_lambda_.7} parent=75 // pred_region
        %v1719 = vld [vmem:[#allocation2] sm:$0xff]
        %v1720 = vld [vmem:[#allocation2 + $0x8] sm:$0xff]
        %v1721 = vld [vmem:[#allocation2 + $0x10] sm:$0x1]
        %v1722 = vld [vmem:[%s12] sm:$0xff]
        %v1723 = vld [vmem:[%s12 + $0x8] sm:$0xff]
        %v1724 = vld [vmem:[%s12 + $0x10] sm:$0xff]
        %v1725 = vld [vmem:[%s12 + $0x18] sm:$0xff]
        %v1726 = vld [vmem:[%s12 + $0x20] sm:$0xff]
        %v1727 = vld [vmem:[%s12 + $0x28] sm:$0xff]
        %v1728 = vld [vmem:[%s12 + $0x30] sm:$0xff]
        %v1729 = vld [vmem:[%s12 + $0x38] sm:$0xff]
        %v1730 = vld [vmem:[%s12 + $0x40] sm:$0xff]
        %v1731 = vld [vmem:[%s12 + $0x48] sm:$0xff]
        %v1732 = vld [vmem:[%s12 + $0x50] sm:$0xff]
        %v1733 = vld [vmem:[%s12 + $0x58] sm:$0xff]
        %v1734 = vld [vmem:[%s12 + $0x60] sm:$0xff]
        %v1735 = vld [vmem:[%s12 + $0x68] sm:$0xff]
        %v1736 = vld [vmem:[%s12 + $0x70] sm:$0xff]
        %v1737 = vld [vmem:[%s12 + $0x78] sm:$0xff]
        %v1738 = vld [vmem:[%s13] sm:$0x1]
        %v1740 = vperm.slane %v1738, 0
        %1742 = vmatpush.msra.mxu0 %v1737
        %1743 = vmatpush.msra.mxu0 %v1736
        %1744 = vmatpush.msra.mxu0 %v1735
        %1745 = vmatpush.msra.mxu0 %v1734
        %1746 = vmatpush.msra.mxu0 %v1733
        %1747 = vmatpush.msra.mxu0 %v1732
        %1748 = vmatpush.msra.mxu0 %v1731
        %1749 = vmatpush.msra.mxu0 %v1730
        %1750 = vmatpush.msra.mxu0 %v1729
        %1751 = vmatpush.msra.mxu0 %v1728
        %1752 = vmatpush.msra.mxu0 %v1727
        %1753 = vmatpush.msra.mxu0 %v1726
        %1754 = vmatpush.msra.mxu0 %v1725
        %1755 = vmatpush.msra.mxu0 %v1724
        %1756 = vmatpush.msra.mxu0 %v1723
        %1757 = vmatpush.msra.mxu0 %v1722
        %1758 = vmatmul.f32.gmra.mxu0 %v1719
        %v1759 = vpop.f32.mrf.mxu0
        %v1760 = vadd.f32 %v1740, %v1759
        %1761 = vmatmul.f32.gmra.mxu0 %v1720
        %v1762 = vpop.f32.mrf.mxu0
        %v1763 = vadd.f32 %v1740, %v1762
        %1764 = vmatmul.f32.gmra.mxu0 %v1721
        %v1765 = vpop.f32.mrf.mxu0
        %v1766 = vadd.f32 %v1740, %v1765
        %1767 = vdwg.mxu0
        %1768 = vst [vmem:[%s660] sm:$0xff] %v1760
        %1769 = vst [vmem:[%s660 + $0x8] sm:$0xff] %v1763
        %1770 = vst [vmem:[%s660 + $0x10] sm:$0x1] %v1766
      $region84: #{_lambda_.7} parent=75 // pred_fallthru
        _
      %p1771 = scmp.lt.s32.totalorder %s29, 1
      %s1772 = scalar_select %p1771, %s29, 1
      %s1773 = smul.addr %s1772, 3
      %s1774 = smul.addr %s1773, 8
      %s1775 = scalar_lea.vmem %s14, %s1774
      // Predicated region
      $region85: #{_lambda_.7} parent=75 // pred_check
        %p1776 = pneg %p409
      $region86: #{_lambda_.7} parent=75 // pred_check_branch
        %1778 = sbr.rel (%p1776) target = $region88
      $region87: #{_lambda_.7} parent=75 // pred_region
        _
      $region88: #{_lambda_.7} parent=75 // pred_fallthru
        _
    $region76: #{_lambda_.7} parent=5 // pred_fallthru
      _
    %p1779 = scmp.le.s32.totalorder 2, %s20
    // Predicated region
    $region89: #{_lambda_.7} parent=5 // pred_check
      %p1780 = pneg %p1779
    $region90: #{_lambda_.7} parent=5 // pred_check_branch
      %1782 = sbr.rel (%p1780) target = $region92
    $region91: #{_lambda_.7} parent=5 // pred_region
      %s1783 = ssub.s32 %s20, 2
      // Predicated region
      $region93: #{_lambda_.7} parent=91 // pred_check
        %p1784 = pneg %p415
      $region94: #{_lambda_.7} parent=91 // pred_check_branch
        %1786 = sbr.rel (%p1784) target = $region96
      $region95: #{_lambda_.7} parent=91 // pred_region
        %p1787 = scmp.lt.s32.totalorder %s31, 1
        %s1788 = scalar_select %p1787, %s31, 1
        %s1789 = smul.addr %s1788, 3
        %s1790 = smul.addr %s1789, 8
        %s1791 = scalar_lea.vmem %s14, %s1790
      $region96: #{_lambda_.7} parent=91 // pred_fallthru
        _
    $region92: #{_lambda_.7} parent=5 // pred_fallthru
      _
  $region6: #{_lambda_.7} parent=0 // loop_footer
    %s24 = sadd.s32 1, %s20
  $region7: #{_lambda_.7} parent=0 // loop_footer_branch
    %19 = sbr.rel target = $region3
  $region8: #{_lambda_.7} parent=0 // loop_exit
    _

</llo_original>
